<compile_context>
chip_gen: v7x
topology: tpu7x:2x2x1
jax: 0.10.0
libtpu: 0.0.40
codegen_flags: <defaults>
</compile_context>

<pallas_src>
import functools
import math

import jax
import jax.numpy as jnp
from jax.experimental import pallas as pl
from jax.experimental.pallas import tpu as pltpu


# ----------------------------------------------------------------------------- kernel
def _mha_kernel(x_ref, wqkv_ref, bqkv_ref, wo_ref, bo_ref, o_ref,
                qkv_ref, acc_ref, *,
                n_head: int, d_model: int, nb: int,
                seq: int, seq_pad: int, heads_per_group: int):
    """Fused multi-head self-attention for `nb` batch elements.

    x_ref    : (nb, Lp, E)   bf16 activations (batch-first, seq padded to 8)
    wqkv_ref : (E, 3E)       pre-transposed in_proj weight, Q columns pre-scaled
    bqkv_ref : (1, 3E)       in_proj bias, Q part pre-scaled
    wo_ref   : (E, E)        pre-transposed out_proj weight
    bo_ref   : (1, E)        out_proj bias
    o_ref    : (nb, Lp, E)   output (original activation dtype)
    qkv_ref  : (nb, Lp, 3E)  bf16 VMEM scratch for the fused projection
    acc_ref  : (nb, Lp, E)   bf16 VMEM scratch for the assembled head outputs
    """
    H, E = n_head, d_model
    hd = E // H
    G = heads_per_group
    gw = G * hd

    # ---- fused QKV projection on a flattened (nb*Lp, E) slab (free view) ----
    x2 = x_ref[...].reshape(nb * seq_pad, E)
    qkv = jnp.dot(x2, wqkv_ref[...], preferred_element_type=jnp.float32)
    qkv = qkv + bqkv_ref[...].astype(jnp.float32)
    # park in VMEM scratch (bf16) to bound the live range of the big qkv value
    qkv_ref[...] = qkv.reshape(nb, seq_pad, 3 * E).astype(qkv_ref.dtype)

    # additive key-padding mask for the padded tail columns (static shape; no
    # mask ops are emitted when seq == seq_pad).
    # TODO(synk): a user-supplied additive attn_mask would be added to `s` here
    # (attn_mask is None in this module configuration).
    if seq_pad != seq:
        col = jax.lax.broadcasted_iota(jnp.int32, (1, seq_pad), 1)
        kmask = jnp.where(col < seq, jnp.float32(0.0), jnp.float32(-1e30))
    else:
        kmask = None

    # ---- per-head attention; head outputs assembled per 128-lane group ----
    for g in range(H // G):
        outs = []
        for j in range(G):
            h = g * G + j
            lo = h * hd
            # re-load per-head slices from the VMEM scratch (bounded temporaries)
            qh = qkv_ref[:, :, lo:lo + hd]                       # (nb, Lp, hd), pre-scaled
            kh = qkv_ref[:, :, E + lo:E + lo + hd]               # (nb, Lp, hd)
            vh = qkv_ref[:, :, 2 * E + lo:2 * E + lo + hd]       # (nb, Lp, hd)

            # batched Q @ K^T via last-axis contraction (no transposed copy)
            s = jnp.einsum("bqd,bkd->bqk", qh, kh,
                           preferred_element_type=jnp.float32)   # (nb, Lp, Lp) f32
            if kmask is not None:
                s = s + kmask
            s = s - jnp.max(s, axis=-1, keepdims=True)
            p = jnp.exp(s)
            inv = pl.reciprocal(jnp.sum(p, axis=-1, keepdims=True), approx=True)
            oh = jnp.einsum("bqk,bkd->bqd", p.astype(vh.dtype), vh,
                            preferred_element_type=jnp.float32) * inv
            outs.append(oh.astype(acc_ref.dtype))
        slab = outs[0] if G == 1 else jnp.concatenate(outs, axis=-1)
        acc_ref[:, :, g * gw:(g + 1) * gw] = slab                # full-lane store

    # ---- output projection on the flattened slab ----
    attn = acc_ref[...].reshape(nb * seq_pad, E)
    out = jnp.dot(attn, wo_ref[...], preferred_element_type=jnp.float32)
    out = out + bo_ref[...].astype(jnp.float32)
    o_ref[...] = out.reshape(nb, seq_pad, E).astype(o_ref.dtype)


# ----------------------------------------------------------------------------- helpers
def _heads_per_group(n_head: int, head_dim: int) -> int:
    """Heads whose outputs are assembled per store so the slab is >=128 lanes."""
    g = max(1, min(n_head, 128 // max(head_dim, 1)))
    while n_head % g != 0:
        g -= 1
    return g


def _choose_block_n(N: int, seq_pad: int, d_model: int, *,
                    out_itemsize: int, compute_itemsize: int,
                    vmem_budget_bytes: int = 40 * 1024 * 1024,
                    target_rows: int = 1024) -> int:
    """Batch elements per grid step: fill up to ~1024 MXU rows within a VMEM budget."""
    E = d_model
    w_bytes = (E * 3 * E + 3 * E + E * E + E) * compute_itemsize   # single-buffered

    def fits(nb):
        x_blk = 2 * nb * seq_pad * E * compute_itemsize            # double-buffered in
        o_blk = 2 * nb * seq_pad * E * out_itemsize                # double-buffered out
        qkv = nb * seq_pad * 3 * E * compute_itemsize              # scratch
        acc = nb * seq_pad * E * compute_itemsize                  # scratch
        return (x_blk + o_blk + w_bytes + qkv + acc) <= vmem_budget_bytes

    # TODO(synk): on v7x (2 TensorCores) prefer an nb that yields an even grid
    # so both cores get equal work; single-TC v5e/v6e favor the largest block.
    best = 1
    for d in range(1, N + 1):
        if N % d == 0 and d * seq_pad <= target_rows and fits(d):
            best = d
    return best


def prepare_attention_params(params, *, n_head: int, compute_dtype=jnp.bfloat16):
    """One-time weight prep: (in,out) transpose, fold 1/sqrt(hd) into Q, bf16 cast."""
    w_in = params["in_proj_weight"]                    # (3E, E), rows = [Q; K; V]
    b_in = params["in_proj_bias"]                      # (3E,)
    E = w_in.shape[1]
    hd = E // n_head
    scale = 1.0 / math.sqrt(hd)
    row_scale = jnp.concatenate(
        [jnp.full((E,), scale, dtype=w_in.dtype),
         jnp.ones((2 * E,), dtype=w_in.dtype)])
    return {
        "wqkv_t": (w_in * row_scale[:, None]).T.astype(compute_dtype),     # (E, 3E)
        "bqkv": (b_in * row_scale).reshape(1, 3 * E).astype(compute_dtype),
        "wo_t": params["out_proj_weight"].T.astype(compute_dtype),          # (E, E)
        "bo": params["out_proj_bias"].reshape(1, E).astype(compute_dtype),
    }


# ----------------------------------------------------------------------------- wrapper
def mha_batch_first(x_nle, prepped, *, n_head: int, block_n: int | None = None,
                    compute_dtype=jnp.bfloat16,
                    vmem_limit_bytes: int = 48 * 1024 * 1024):
    """Multi-head self-attention on batch-first activations (N, L, E)."""
    N, L, E = x_nle.shape
    assert E % n_head == 0

    Lp = ((L + 7) // 8) * 8                       # pad seq -> free flatten reshapes
    x_c = x_nle.astype(compute_dtype)             # bf16 operands, f32 accumulation
    if Lp != L:
        x_c = jnp.pad(x_c, ((0, 0), (0, Lp - L), (0, 0)))

    c_isz = jnp.dtype(compute_dtype).itemsize
    o_isz = jnp.dtype(x_nle.dtype).itemsize
    nb = block_n if block_n is not None else _choose_block_n(
        N, Lp, E, out_itemsize=o_isz, compute_itemsize=c_isz)
    assert N % nb == 0
    grid = (N // nb,)

    kernel = functools.partial(
        _mha_kernel, n_head=n_head, d_model=E, nb=nb, seq=L, seq_pad=Lp,
        heads_per_group=_heads_per_group(n_head, E // n_head))

    cost = pl.CostEstimate(
        flops=2 * N * Lp * E * (3 * E) + 2 * N * Lp * E * E + 4 * N * Lp * Lp * E,
        transcendentals=N * n_head * Lp * Lp,
        bytes_accessed=(N * Lp * E * (c_isz + o_isz)
                        + (3 * E * E + E * E + 4 * E) * c_isz))

    wqkv_t = prepped["wqkv_t"].astype(compute_dtype)
    bqkv = prepped["bqkv"].astype(compute_dtype)
    wo_t = prepped["wo_t"].astype(compute_dtype)
    bo = prepped["bo"].astype(compute_dtype)

    def _call(single_buffer_weights: bool):
        # resident weights/biases: constant index_map, so a second pipeline
        # buffer is pure VMEM waste -> request single buffering when supported.
        wkw = {"pipeline_mode": pl.Buffered(1)} if single_buffer_weights else {}
        in_specs = [
            pl.BlockSpec((nb, Lp, E), lambda n: (n, 0, 0)),
            pl.BlockSpec((E, 3 * E), lambda n: (0, 0), **wkw),
            pl.BlockSpec((1, 3 * E), lambda n: (0, 0), **wkw),
            pl.BlockSpec((E, E), lambda n: (0, 0), **wkw),
            pl.BlockSpec((1, E), lambda n: (0, 0), **wkw),
        ]
        return pl.pallas_call(
            kernel,
            grid=grid,
            in_specs=in_specs,
            out_specs=pl.BlockSpec((nb, Lp, E), lambda n: (n, 0, 0)),
            out_shape=jax.ShapeDtypeStruct((N, Lp, E), x_nle.dtype),
            scratch_shapes=[pltpu.VMEM((nb, Lp, 3 * E), compute_dtype),
                            pltpu.VMEM((nb, Lp, E), compute_dtype)],
            compiler_params=pltpu.CompilerParams(
                dimension_semantics=("parallel",),
                vmem_limit_bytes=vmem_limit_bytes),
            cost_estimate=cost,
        )(x_c, wqkv_t, bqkv, wo_t, bo)

    try:
        out = _call(True)
    except Exception:
        # pipeline_mode=pl.Buffered(1) unsupported in this jax build ->
        # fall back to default (double) buffering of the weight blocks.
        out = _call(False)

    return out[:, :L, :] if Lp != L else out


def residual_attention_block(x_lne, prepped, *, n_head: int):
    """PyTorch nn.MultiheadAttention default layout (L, N, E).

    Note: this module's forward only calls self.attn(x, x, x)[0]; ln_1 / mlp /
    ln_2 are constructed but unused. In a full model keep activations
    batch-first (N, L, E) and call mha_batch_first directly to avoid these
    two layout transposes.
    """
    x_nle = jnp.transpose(x_lne, (1, 0, 2))
    out_nle = mha_batch_first(x_nle, prepped, n_head=n_head)
    return jnp.transpose(out_nle, (1, 0, 2))


# ----------------------------------------------------------------------------- reference & test
def _reference_mha(x_lne, params, *, n_head: int):
    """Pure-JAX f32 reference replicating torch.nn.MultiheadAttention forward."""
    L, N, E = x_lne.shape
    hd = E // n_head
    wqkv, bqkv = params["in_proj_weight"], params["in_proj_bias"]
    wo, bo = params["out_proj_weight"], params["out_proj_bias"]

    qkv = jnp.einsum("lne,fe->lnf", x_lne, wqkv) + bqkv        # (L, N, 3E)
    q, k, v = jnp.split(qkv, 3, axis=-1)

    def heads(t):  # (L, N, E) -> (N, H, L, hd)
        return jnp.transpose(t.reshape(L, N, n_head, hd), (1, 2, 0, 3))

    qh, kh, vh = heads(q), heads(k), heads(v)
    s = jnp.einsum("nhld,nhmd->nhlm", qh * (1.0 / math.sqrt(hd)), kh)
    p = jax.nn.softmax(s, axis=-1)
    o = jnp.einsum("nhlm,nhmd->nhld", p, vh)                   # (N, H, L, hd)
    o = jnp.transpose(o, (2, 0, 1, 3)).reshape(L, N, E)
    return jnp.einsum("lne,fe->lnf", o, wo) + bo


def init_params(key, d_model):
    k1, k2, k3, k4 = jax.random.split(key, 4)
    s = 0.02
    return {
        "in_proj_weight": s * jax.random.normal(k1, (3 * d_model, d_model), jnp.float32),
        "in_proj_bias": s * jax.random.normal(k2, (3 * d_model,), jnp.float32),
        "out_proj_weight": s * jax.random.normal(k3, (d_model, d_model), jnp.float32),
        "out_proj_bias": s * jax.random.normal(k4, (d_model,), jnp.float32),
    }


if __name__ == "__main__":
    d_model, n_head, batch = 32, 4, 4
    key = jax.random.PRNGKey(0)
    kp, kx1, kx2 = jax.random.split(key, 3)

    params = init_params(kp, d_model)
    prepped = prepare_attention_params(params, n_head=n_head)   # hoisted, once

    # Case 1: seq already a multiple of 8 (no-padding path).
    x1 = jax.random.normal(kx1, (8, batch, d_model), jnp.float32)    # (L, N, E)
    out1 = jax.block_until_ready(residual_attention_block(x1, prepped, n_head=n_head))
    ref1 = _reference_mha(x1, params, n_head=n_head)
    assert out1.shape == x1.shape
    # tolerance covers bf16 operands + approx-reciprocal softmax normalization
    assert jnp.allclose(out1, ref1, atol=5e-3, rtol=2e-2), "mismatch (unpadded)"

    # Case 2: seq NOT a multiple of 8 (exercises pad + key-mask + output slice).
    x2 = jax.random.normal(kx2, (6, batch, d_model), jnp.float32)
    out2 = jax.block_until_ready(residual_attention_block(x2, prepped, n_head=n_head))
    ref2 = _reference_mha(x2, params, n_head=n_head)
    assert out2.shape == x2.shape
    assert jnp.allclose(out2, ref2, atol=5e-3, rtol=2e-2), "mismatch (padded)"

    print("KERNEL_OK")
</pallas_src>

<mosaic_0001>
module attributes {stable_mosaic.version = 11 : i64} {
  func.func @_mha_kernel(%arg0: i32, %arg1: memref<4x8x32xbf16, #tpu.memory_space<vmem>>, %arg2: memref<32x96xbf16, #tpu.memory_space<vmem>>, %arg3: memref<1x96xbf16, #tpu.memory_space<vmem>>, %arg4: memref<32x32xbf16, #tpu.memory_space<vmem>>, %arg5: memref<1x32xbf16, #tpu.memory_space<vmem>>, %arg6: memref<4x8x32xf32, #tpu.memory_space<vmem>>, %arg7: memref<4x8x96xbf16, #tpu.memory_space<vmem>>, %arg8: memref<4x8x32xbf16, #tpu.memory_space<vmem>>) attributes {dimension_semantics = [#tpu.dimension_semantics<parallel>], iteration_bounds = array<i64: 1>, scalar_prefetch = 0 : i64, scratch_operands = 2 : i64, tpu.core_type = #tpu.core_type<tc>, window_params = [{transform_indices = @transform_0, window_bounds = array<i64: 4, 8, 32>}, {pipeline_mode = #tpu.pipeline_mode<synchronous>, transform_indices = @transform_1, window_bounds = array<i64: 32, 96>}, {pipeline_mode = #tpu.pipeline_mode<synchronous>, transform_indices = @transform_2, window_bounds = array<i64: 1, 96>}, {pipeline_mode = #tpu.pipeline_mode<synchronous>, transform_indices = @transform_3, window_bounds = array<i64: 32, 32>}, {pipeline_mode = #tpu.pipeline_mode<synchronous>, transform_indices = @transform_4, window_bounds = array<i64: 1, 32>}, {transform_indices = @transform_5, window_bounds = array<i64: 4, 8, 32>}]} {
    %c0 = arith.constant 0 : index
    %c0_0 = arith.constant 0 : index
    %c0_1 = arith.constant 0 : index
    %0 = vector.load %arg1[%c0, %c0_0, %c0_1] : memref<4x8x32xbf16, #tpu.memory_space<vmem>>, vector<4x8x32xbf16>
    %1 = vector.shape_cast %0 : vector<4x8x32xbf16> to vector<32x32xbf16>
    %c0_2 = arith.constant 0 : index
    %c0_3 = arith.constant 0 : index
    %2 = vector.load %arg2[%c0_2, %c0_3] : memref<32x96xbf16, #tpu.memory_space<vmem>>, vector<32x96xbf16>
    %cst = arith.constant dense<0.000000e+00> : vector<32x96xf32>
    %3 = tpu.matmul %1, %2, %cst {dimension_numbers = #tpu.dot_dimension_numbers<[1], [0], [0], [1], [0, 0, 1, 1], [], []>} : vector<32x32xbf16>, vector<32x96xbf16>, vector<32x96xf32> -> vector<32x96xf32>
    %c0_4 = arith.constant 0 : index
    %c0_5 = arith.constant 0 : index
    %4 = vector.load %arg3[%c0_4, %c0_5] : memref<1x96xbf16, #tpu.memory_space<vmem>>, vector<1x96xbf16>
    %5 = arith.extf %4 : vector<1x96xbf16> to vector<1x96xf32>
    %6 = vector.broadcast %5 : vector<1x96xf32> to vector<32x96xf32>
    %7 = arith.addf %3, %6 : vector<32x96xf32>
    %8 = vector.shape_cast %7 : vector<32x96xf32> to vector<4x8x96xf32>
    %9 = arith.truncf %8 : vector<4x8x96xf32> to vector<4x8x96xbf16>
    %c0_6 = arith.constant 0 : index
    %c0_7 = arith.constant 0 : index
    %c0_8 = arith.constant 0 : index
    %10 = vector.load %arg7[%c0_6, %c0_7, %c0_8] : memref<4x8x96xbf16, #tpu.memory_space<vmem>>, vector<4x8x96xbf16>
    tpu.vector_store %arg7[%c0_6, %c0_7, %c0_8], %9 {strides = array<i32>} : memref<4x8x96xbf16, #tpu.memory_space<vmem>>, vector<4x8x96xbf16>,
    %c0_9 = arith.constant 0 : index
    %c0_10 = arith.constant 0 : index
    %c0_11 = arith.constant 0 : index
    %11 = vector.load %arg7[%c0_9, %c0_10, %c0_11] : memref<4x8x96xbf16, #tpu.memory_space<vmem>>, vector<4x8x8xbf16>
    %c0_12 = arith.constant 0 : index
    %c0_13 = arith.constant 0 : index
    %c32 = arith.constant 32 : index
    %12 = vector.load %arg7[%c0_12, %c0_13, %c32] : memref<4x8x96xbf16, #tpu.memory_space<vmem>>, vector<4x8x8xbf16>
    %c0_14 = arith.constant 0 : index
    %c0_15 = arith.constant 0 : index
    %c64 = arith.constant 64 : index
    %13 = vector.load %arg7[%c0_14, %c0_15, %c64] : memref<4x8x96xbf16, #tpu.memory_space<vmem>>, vector<4x8x8xbf16>
    "tpu.trace_start"() <{level = 10 : i32, message = "bqd,bkd->bqk"}> : () -> ()
    %cst_16 = arith.constant dense<0.000000e+00> : vector<4x8x8xf32>
    %14 = tpu.matmul %11, %12, %cst_16 {dimension_numbers = #tpu.dot_dimension_numbers<[2], [2], [1], [1], [0, 0, 0, 1, 1, 1], [0], [0]>} : vector<4x8x8xbf16>, vector<4x8x8xbf16>, vector<4x8x8xf32> -> vector<4x8x8xf32>
    "tpu.trace_stop"() : () -> ()
    %cst_17 = arith.constant dense<0xFF800000> : vector<4x8xf32>
    %15 = vector.multi_reduction <maximumf>, %14, %cst_17 [2] : vector<4x8x8xf32> to vector<4x8xf32>
    %16 = vector.shape_cast %15 : vector<4x8xf32> to vector<4x8x1xf32>
    %17 = vector.broadcast %16 : vector<4x8x1xf32> to vector<4x8x8xf32>
    %18 = arith.subf %14, %17 : vector<4x8x8xf32>
    %19 = math.exp %18 : vector<4x8x8xf32>
    %cst_18 = arith.constant dense<0.000000e+00> : vector<4x8xf32>
    %20 = vector.multi_reduction <add>, %19, %cst_18 [2] : vector<4x8x8xf32> to vector<4x8xf32>
    %21 = vector.shape_cast %20 : vector<4x8xf32> to vector<4x8x1xf32>
    %22 = tpu.reciprocal %21 {approx = true} : vector<4x8x1xf32> -> vector<4x8x1xf32>
    %23 = arith.truncf %19 : vector<4x8x8xf32> to vector<4x8x8xbf16>
    "tpu.trace_start"() <{level = 10 : i32, message = "bqk,bkd->bqd"}> : () -> ()
    %cst_19 = arith.constant dense<0.000000e+00> : vector<4x8x8xf32>
    %24 = tpu.matmul %23, %13, %cst_19 {dimension_numbers = #tpu.dot_dimension_numbers<[2], [1], [1], [2], [0, 0, 0, 1, 1, 2], [0], [0]>} : vector<4x8x8xbf16>, vector<4x8x8xbf16>, vector<4x8x8xf32> -> vector<4x8x8xf32>
    "tpu.trace_stop"() : () -> ()
    %25 = vector.broadcast %22 : vector<4x8x1xf32> to vector<4x8x8xf32>
    %26 = arith.mulf %24, %25 : vector<4x8x8xf32>
    %27 = arith.truncf %26 : vector<4x8x8xf32> to vector<4x8x8xbf16>
    %c0_20 = arith.constant 0 : index
    %c0_21 = arith.constant 0 : index
    %c8 = arith.constant 8 : index
    %28 = vector.load %arg7[%c0_20, %c0_21, %c8] : memref<4x8x96xbf16, #tpu.memory_space<vmem>>, vector<4x8x8xbf16>
    %c0_22 = arith.constant 0 : index
    %c0_23 = arith.constant 0 : index
    %c40 = arith.constant 40 : index
    %29 = vector.load %arg7[%c0_22, %c0_23, %c40] : memref<4x8x96xbf16, #tpu.memory_space<vmem>>, vector<4x8x8xbf16>
    %c0_24 = arith.constant 0 : index
    %c0_25 = arith.constant 0 : index
    %c72 = arith.constant 72 : index
    %30 = vector.load %arg7[%c0_24, %c0_25, %c72] : memref<4x8x96xbf16, #tpu.memory_space<vmem>>, vector<4x8x8xbf16>
    "tpu.trace_start"() <{level = 10 : i32, message = "bqd,bkd->bqk"}> : () -> ()
    %cst_26 = arith.constant dense<0.000000e+00> : vector<4x8x8xf32>
    %31 = tpu.matmul %28, %29, %cst_26 {dimension_numbers = #tpu.dot_dimension_numbers<[2], [2], [1], [1], [0, 0, 0, 1, 1, 1], [0], [0]>} : vector<4x8x8xbf16>, vector<4x8x8xbf16>, vector<4x8x8xf32> -> vector<4x8x8xf32>
    "tpu.trace_stop"() : () -> ()
    %cst_27 = arith.constant dense<0xFF800000> : vector<4x8xf32>
    %32 = vector.multi_reduction <maximumf>, %31, %cst_27 [2] : vector<4x8x8xf32> to vector<4x8xf32>
    %33 = vector.shape_cast %32 : vector<4x8xf32> to vector<4x8x1xf32>
    %34 = vector.broadcast %33 : vector<4x8x1xf32> to vector<4x8x8xf32>
    %35 = arith.subf %31, %34 : vector<4x8x8xf32>
    %36 = math.exp %35 : vector<4x8x8xf32>
    %cst_28 = arith.constant dense<0.000000e+00> : vector<4x8xf32>
    %37 = vector.multi_reduction <add>, %36, %cst_28 [2] : vector<4x8x8xf32> to vector<4x8xf32>
    %38 = vector.shape_cast %37 : vector<4x8xf32> to vector<4x8x1xf32>
    %39 = tpu.reciprocal %38 {approx = true} : vector<4x8x1xf32> -> vector<4x8x1xf32>
    %40 = arith.truncf %36 : vector<4x8x8xf32> to vector<4x8x8xbf16>
    "tpu.trace_start"() <{level = 10 : i32, message = "bqk,bkd->bqd"}> : () -> ()
    %cst_29 = arith.constant dense<0.000000e+00> : vector<4x8x8xf32>
    %41 = tpu.matmul %40, %30, %cst_29 {dimension_numbers = #tpu.dot_dimension_numbers<[2], [1], [1], [2], [0, 0, 0, 1, 1, 2], [0], [0]>} : vector<4x8x8xbf16>, vector<4x8x8xbf16>, vector<4x8x8xf32> -> vector<4x8x8xf32>
    "tpu.trace_stop"() : () -> ()
    %42 = vector.broadcast %39 : vector<4x8x1xf32> to vector<4x8x8xf32>
    %43 = arith.mulf %41, %42 : vector<4x8x8xf32>
    %44 = arith.truncf %43 : vector<4x8x8xf32> to vector<4x8x8xbf16>
    %c0_30 = arith.constant 0 : index
    %c0_31 = arith.constant 0 : index
    %c16 = arith.constant 16 : index
    %45 = vector.load %arg7[%c0_30, %c0_31, %c16] : memref<4x8x96xbf16, #tpu.memory_space<vmem>>, vector<4x8x8xbf16>
    %c0_32 = arith.constant 0 : index
    %c0_33 = arith.constant 0 : index
    %c48 = arith.constant 48 : index
    %46 = vector.load %arg7[%c0_32, %c0_33, %c48] : memref<4x8x96xbf16, #tpu.memory_space<vmem>>, vector<4x8x8xbf16>
    %c0_34 = arith.constant 0 : index
    %c0_35 = arith.constant 0 : index
    %c80 = arith.constant 80 : index
    %47 = vector.load %arg7[%c0_34, %c0_35, %c80] : memref<4x8x96xbf16, #tpu.memory_space<vmem>>, vector<4x8x8xbf16>
    "tpu.trace_start"() <{level = 10 : i32, message = "bqd,bkd->bqk"}> : () -> ()
    %cst_36 = arith.constant dense<0.000000e+00> : vector<4x8x8xf32>
    %48 = tpu.matmul %45, %46, %cst_36 {dimension_numbers = #tpu.dot_dimension_numbers<[2], [2], [1], [1], [0, 0, 0, 1, 1, 1], [0], [0]>} : vector<4x8x8xbf16>, vector<4x8x8xbf16>, vector<4x8x8xf32> -> vector<4x8x8xf32>
    "tpu.trace_stop"() : () -> ()
    %cst_37 = arith.constant dense<0xFF800000> : vector<4x8xf32>
    %49 = vector.multi_reduction <maximumf>, %48, %cst_37 [2] : vector<4x8x8xf32> to vector<4x8xf32>
    %50 = vector.shape_cast %49 : vector<4x8xf32> to vector<4x8x1xf32>
    %51 = vector.broadcast %50 : vector<4x8x1xf32> to vector<4x8x8xf32>
    %52 = arith.subf %48, %51 : vector<4x8x8xf32>
    %53 = math.exp %52 : vector<4x8x8xf32>
    %cst_38 = arith.constant dense<0.000000e+00> : vector<4x8xf32>
    %54 = vector.multi_reduction <add>, %53, %cst_38 [2] : vector<4x8x8xf32> to vector<4x8xf32>
    %55 = vector.shape_cast %54 : vector<4x8xf32> to vector<4x8x1xf32>
    %56 = tpu.reciprocal %55 {approx = true} : vector<4x8x1xf32> -> vector<4x8x1xf32>
    %57 = arith.truncf %53 : vector<4x8x8xf32> to vector<4x8x8xbf16>
    "tpu.trace_start"() <{level = 10 : i32, message = "bqk,bkd->bqd"}> : () -> ()
    %cst_39 = arith.constant dense<0.000000e+00> : vector<4x8x8xf32>
    %58 = tpu.matmul %57, %47, %cst_39 {dimension_numbers = #tpu.dot_dimension_numbers<[2], [1], [1], [2], [0, 0, 0, 1, 1, 2], [0], [0]>} : vector<4x8x8xbf16>, vector<4x8x8xbf16>, vector<4x8x8xf32> -> vector<4x8x8xf32>
    "tpu.trace_stop"() : () -> ()
    %59 = vector.broadcast %56 : vector<4x8x1xf32> to vector<4x8x8xf32>
    %60 = arith.mulf %58, %59 : vector<4x8x8xf32>
    %61 = arith.truncf %60 : vector<4x8x8xf32> to vector<4x8x8xbf16>
    %c0_40 = arith.constant 0 : index
    %c0_41 = arith.constant 0 : index
    %c24 = arith.constant 24 : index
    %62 = vector.load %arg7[%c0_40, %c0_41, %c24] : memref<4x8x96xbf16, #tpu.memory_space<vmem>>, vector<4x8x8xbf16>
    %c0_42 = arith.constant 0 : index
    %c0_43 = arith.constant 0 : index
    %c56 = arith.constant 56 : index
    %63 = vector.load %arg7[%c0_42, %c0_43, %c56] : memref<4x8x96xbf16, #tpu.memory_space<vmem>>, vector<4x8x8xbf16>
    %c0_44 = arith.constant 0 : index
    %c0_45 = arith.constant 0 : index
    %c88 = arith.constant 88 : index
    %64 = vector.load %arg7[%c0_44, %c0_45, %c88] : memref<4x8x96xbf16, #tpu.memory_space<vmem>>, vector<4x8x8xbf16>
    "tpu.trace_start"() <{level = 10 : i32, message = "bqd,bkd->bqk"}> : () -> ()
    %cst_46 = arith.constant dense<0.000000e+00> : vector<4x8x8xf32>
    %65 = tpu.matmul %62, %63, %cst_46 {dimension_numbers = #tpu.dot_dimension_numbers<[2], [2], [1], [1], [0, 0, 0, 1, 1, 1], [0], [0]>} : vector<4x8x8xbf16>, vector<4x8x8xbf16>, vector<4x8x8xf32> -> vector<4x8x8xf32>
    "tpu.trace_stop"() : () -> ()
    %cst_47 = arith.constant dense<0xFF800000> : vector<4x8xf32>
    %66 = vector.multi_reduction <maximumf>, %65, %cst_47 [2] : vector<4x8x8xf32> to vector<4x8xf32>
    %67 = vector.shape_cast %66 : vector<4x8xf32> to vector<4x8x1xf32>
    %68 = vector.broadcast %67 : vector<4x8x1xf32> to vector<4x8x8xf32>
    %69 = arith.subf %65, %68 : vector<4x8x8xf32>
    %70 = math.exp %69 : vector<4x8x8xf32>
    %cst_48 = arith.constant dense<0.000000e+00> : vector<4x8xf32>
    %71 = vector.multi_reduction <add>, %70, %cst_48 [2] : vector<4x8x8xf32> to vector<4x8xf32>
    %72 = vector.shape_cast %71 : vector<4x8xf32> to vector<4x8x1xf32>
    %73 = tpu.reciprocal %72 {approx = true} : vector<4x8x1xf32> -> vector<4x8x1xf32>
    %74 = arith.truncf %70 : vector<4x8x8xf32> to vector<4x8x8xbf16>
    "tpu.trace_start"() <{level = 10 : i32, message = "bqk,bkd->bqd"}> : () -> ()
    %cst_49 = arith.constant dense<0.000000e+00> : vector<4x8x8xf32>
    %75 = tpu.matmul %74, %64, %cst_49 {dimension_numbers = #tpu.dot_dimension_numbers<[2], [1], [1], [2], [0, 0, 0, 1, 1, 2], [0], [0]>} : vector<4x8x8xbf16>, vector<4x8x8xbf16>, vector<4x8x8xf32> -> vector<4x8x8xf32>
    "tpu.trace_stop"() : () -> ()
    %76 = vector.broadcast %73 : vector<4x8x1xf32> to vector<4x8x8xf32>
    %77 = arith.mulf %75, %76 : vector<4x8x8xf32>
    %78 = arith.truncf %77 : vector<4x8x8xf32> to vector<4x8x8xbf16>
    %79 = tpu.concatenate %27, %44, %61, %78 in 2 : vector<4x8x8xbf16>, vector<4x8x8xbf16>, vector<4x8x8xbf16>, vector<4x8x8xbf16> -> vector<4x8x32xbf16>
    %c0_50 = arith.constant 0 : index
    %c0_51 = arith.constant 0 : index
    %c0_52 = arith.constant 0 : index
    %80 = vector.load %arg8[%c0_50, %c0_51, %c0_52] : memref<4x8x32xbf16, #tpu.memory_space<vmem>>, vector<4x8x32xbf16>
    tpu.vector_store %arg8[%c0_50, %c0_51, %c0_52], %79 {strides = array<i32>} : memref<4x8x32xbf16, #tpu.memory_space<vmem>>, vector<4x8x32xbf16>,
    %c0_53 = arith.constant 0 : index
    %c0_54 = arith.constant 0 : index
    %c0_55 = arith.constant 0 : index
    %81 = vector.load %arg8[%c0_53, %c0_54, %c0_55] : memref<4x8x32xbf16, #tpu.memory_space<vmem>>, vector<4x8x32xbf16>
    %82 = vector.shape_cast %81 : vector<4x8x32xbf16> to vector<32x32xbf16>
    %c0_56 = arith.constant 0 : index
    %c0_57 = arith.constant 0 : index
    %83 = vector.load %arg4[%c0_56, %c0_57] : memref<32x32xbf16, #tpu.memory_space<vmem>>, vector<32x32xbf16>
    %cst_58 = arith.constant dense<0.000000e+00> : vector<32x32xf32>
    %84 = tpu.matmul %82, %83, %cst_58 {dimension_numbers = #tpu.dot_dimension_numbers<[1], [0], [0], [1], [0, 0, 1, 1], [], []>} : vector<32x32xbf16>, vector<32x32xbf16>, vector<32x32xf32> -> vector<32x32xf32>
    %c0_59 = arith.constant 0 : index
    %c0_60 = arith.constant 0 : index
    %85 = vector.load %arg5[%c0_59, %c0_60] : memref<1x32xbf16, #tpu.memory_space<vmem>>, vector<1x32xbf16>
    %86 = arith.extf %85 : vector<1x32xbf16> to vector<1x32xf32>
    %87 = vector.broadcast %86 : vector<1x32xf32> to vector<32x32xf32>
    %88 = arith.addf %84, %87 : vector<32x32xf32>
    %89 = vector.shape_cast %88 : vector<32x32xf32> to vector<4x8x32xf32>
    %c0_61 = arith.constant 0 : index
    %c0_62 = arith.constant 0 : index
    %c0_63 = arith.constant 0 : index
    %90 = vector.load %arg6[%c0_61, %c0_62, %c0_63] : memref<4x8x32xf32, #tpu.memory_space<vmem>>, vector<4x8x32xf32>
    tpu.vector_store %arg6[%c0_61, %c0_62, %c0_63], %89 {strides = array<i32>} : memref<4x8x32xf32, #tpu.memory_space<vmem>>, vector<4x8x32xf32>,
    return
  }
  func.func @transform_0(%arg0: i32) -> (i32, i32, i32) {
    %c0_i32 = arith.constant 0 : i32
    %c0_i32_0 = arith.constant 0 : i32
    %c0_i32_1 = arith.constant 0 : i32
    return %arg0, %c0_i32, %c0_i32_0 : i32, i32, i32
  }
  func.func @transform_1(%arg0: i32) -> (i32, i32) {
    %c0_i32 = arith.constant 0 : i32
    %c0_i32_0 = arith.constant 0 : i32
    %c0_i32_1 = arith.constant 0 : i32
    return %c0_i32, %c0_i32_0 : i32, i32
  }
  func.func @transform_2(%arg0: i32) -> (i32, i32) {
    %c0_i32 = arith.constant 0 : i32
    %c0_i32_0 = arith.constant 0 : i32
    %c0_i32_1 = arith.constant 0 : i32
    return %c0_i32, %c0_i32_0 : i32, i32
  }
  func.func @transform_3(%arg0: i32) -> (i32, i32) {
    %c0_i32 = arith.constant 0 : i32
    %c0_i32_0 = arith.constant 0 : i32
    %c0_i32_1 = arith.constant 0 : i32
    return %c0_i32, %c0_i32_0 : i32, i32
  }
  func.func @transform_4(%arg0: i32) -> (i32, i32) {
    %c0_i32 = arith.constant 0 : i32
    %c0_i32_0 = arith.constant 0 : i32
    %c0_i32_1 = arith.constant 0 : i32
    return %c0_i32, %c0_i32_0 : i32, i32
  }
  func.func @transform_5(%arg0: i32) -> (i32, i32, i32) {
    %c0_i32 = arith.constant 0 : i32
    %c0_i32_0 = arith.constant 0 : i32
    %c0_i32_1 = arith.constant 0 : i32
    return %arg0, %c0_i32, %c0_i32_0 : i32, i32, i32
  }
}

module attributes {stable_mosaic.version = 11 : i64} {
  func.func @_mha_kernel(%arg0: i32, %arg1: memref<4x8x32xbf16, #tpu.memory_space<vmem>>, %arg2: memref<32x96xbf16, #tpu.memory_space<vmem>>, %arg3: memref<1x96xbf16, #tpu.memory_space<vmem>>, %arg4: memref<32x32xbf16, #tpu.memory_space<vmem>>, %arg5: memref<1x32xbf16, #tpu.memory_space<vmem>>, %arg6: memref<4x8x32xf32, #tpu.memory_space<vmem>>, %arg7: memref<4x8x96xbf16, #tpu.memory_space<vmem>>, %arg8: memref<4x8x32xbf16, #tpu.memory_space<vmem>>) attributes {dimension_semantics = [#tpu.dimension_semantics<parallel>], iteration_bounds = array<i64: 1>, scalar_prefetch = 0 : i64, scratch_operands = 2 : i64, tpu.core_type = #tpu.core_type<tc>, window_params = [{transform_indices = @transform_0, window_bounds = array<i64: 4, 8, 32>}, {pipeline_mode = #tpu.pipeline_mode<synchronous>, transform_indices = @transform_1, window_bounds = array<i64: 32, 96>}, {pipeline_mode = #tpu.pipeline_mode<synchronous>, transform_indices = @transform_2, window_bounds = array<i64: 1, 96>}, {pipeline_mode = #tpu.pipeline_mode<synchronous>, transform_indices = @transform_3, window_bounds = array<i64: 32, 32>}, {pipeline_mode = #tpu.pipeline_mode<synchronous>, transform_indices = @transform_4, window_bounds = array<i64: 1, 32>}, {transform_indices = @transform_5, window_bounds = array<i64: 4, 8, 32>}]} {
    %c0 = arith.constant 0 : index
    %c0_0 = arith.constant 0 : index
    %c0_1 = arith.constant 0 : index
    %0 = vector.load %arg1[%c0, %c0_0, %c0_1] : memref<4x8x32xbf16, #tpu.memory_space<vmem>>, vector<4x8x32xbf16>
    %1 = vector.shape_cast %0 : vector<4x8x32xbf16> to vector<32x32xbf16>
    %c0_2 = arith.constant 0 : index
    %c0_3 = arith.constant 0 : index
    %2 = vector.load %arg2[%c0_2, %c0_3] : memref<32x96xbf16, #tpu.memory_space<vmem>>, vector<32x96xbf16>
    %cst = arith.constant dense<0.000000e+00> : vector<32x96xf32>
    %3 = tpu.matmul %1, %2, %cst {dimension_numbers = #tpu.dot_dimension_numbers<[1], [0], [0], [1], [0, 0, 1, 1], [], []>} : vector<32x32xbf16>, vector<32x96xbf16>, vector<32x96xf32> -> vector<32x96xf32>
    %c0_4 = arith.constant 0 : index
    %c0_5 = arith.constant 0 : index
    %4 = vector.load %arg3[%c0_4, %c0_5] : memref<1x96xbf16, #tpu.memory_space<vmem>>, vector<1x96xbf16>
    %5 = arith.extf %4 : vector<1x96xbf16> to vector<1x96xf32>
    %6 = vector.broadcast %5 : vector<1x96xf32> to vector<32x96xf32>
    %7 = arith.addf %3, %6 : vector<32x96xf32>
    %8 = vector.shape_cast %7 : vector<32x96xf32> to vector<4x8x96xf32>
    %9 = arith.truncf %8 : vector<4x8x96xf32> to vector<4x8x96xbf16>
    %c0_6 = arith.constant 0 : index
    %c0_7 = arith.constant 0 : index
    %c0_8 = arith.constant 0 : index
    %10 = vector.load %arg7[%c0_6, %c0_7, %c0_8] : memref<4x8x96xbf16, #tpu.memory_space<vmem>>, vector<4x8x96xbf16>
    tpu.vector_store %arg7[%c0_6, %c0_7, %c0_8], %9 {strides = array<i32>} : memref<4x8x96xbf16, #tpu.memory_space<vmem>>, vector<4x8x96xbf16>,
    %c0_9 = arith.constant 0 : index
    %c0_10 = arith.constant 0 : index
    %c0_11 = arith.constant 0 : index
    %11 = vector.load %arg7[%c0_9, %c0_10, %c0_11] : memref<4x8x96xbf16, #tpu.memory_space<vmem>>, vector<4x8x8xbf16>
    %c0_12 = arith.constant 0 : index
    %c0_13 = arith.constant 0 : index
    %c32 = arith.constant 32 : index
    %12 = vector.load %arg7[%c0_12, %c0_13, %c32] : memref<4x8x96xbf16, #tpu.memory_space<vmem>>, vector<4x8x8xbf16>
    %c0_14 = arith.constant 0 : index
    %c0_15 = arith.constant 0 : index
    %c64 = arith.constant 64 : index
    %13 = vector.load %arg7[%c0_14, %c0_15, %c64] : memref<4x8x96xbf16, #tpu.memory_space<vmem>>, vector<4x8x8xbf16>
    "tpu.trace_start"() <{level = 10 : i32, message = "bqd,bkd->bqk"}> : () -> ()
    %cst_16 = arith.constant dense<0.000000e+00> : vector<4x8x8xf32>
    %14 = tpu.matmul %11, %12, %cst_16 {dimension_numbers = #tpu.dot_dimension_numbers<[2], [2], [1], [1], [0, 0, 0, 1, 1, 1], [0], [0]>} : vector<4x8x8xbf16>, vector<4x8x8xbf16>, vector<4x8x8xf32> -> vector<4x8x8xf32>
    "tpu.trace_stop"() : () -> ()
    %cst_17 = arith.constant dense<0xFF800000> : vector<4x8xf32>
    %15 = vector.multi_reduction <maximumf>, %14, %cst_17 [2] : vector<4x8x8xf32> to vector<4x8xf32>
    %16 = vector.shape_cast %15 : vector<4x8xf32> to vector<4x8x1xf32>
    %17 = vector.broadcast %16 : vector<4x8x1xf32> to vector<4x8x8xf32>
    %18 = arith.subf %14, %17 : vector<4x8x8xf32>
    %19 = math.exp %18 : vector<4x8x8xf32>
    %cst_18 = arith.constant dense<0.000000e+00> : vector<4x8xf32>
    %20 = vector.multi_reduction <add>, %19, %cst_18 [2] : vector<4x8x8xf32> to vector<4x8xf32>
    %21 = vector.shape_cast %20 : vector<4x8xf32> to vector<4x8x1xf32>
    %22 = tpu.reciprocal %21 {approx = true} : vector<4x8x1xf32> -> vector<4x8x1xf32>
    %23 = arith.truncf %19 : vector<4x8x8xf32> to vector<4x8x8xbf16>
    "tpu.trace_start"() <{level = 10 : i32, message = "bqk,bkd->bqd"}> : () -> ()
    %cst_19 = arith.constant dense<0.000000e+00> : vector<4x8x8xf32>
    %24 = tpu.matmul %23, %13, %cst_19 {dimension_numbers = #tpu.dot_dimension_numbers<[2], [1], [1], [2], [0, 0, 0, 1, 1, 2], [0], [0]>} : vector<4x8x8xbf16>, vector<4x8x8xbf16>, vector<4x8x8xf32> -> vector<4x8x8xf32>
    "tpu.trace_stop"() : () -> ()
    %25 = vector.broadcast %22 : vector<4x8x1xf32> to vector<4x8x8xf32>
    %26 = arith.mulf %24, %25 : vector<4x8x8xf32>
    %27 = arith.truncf %26 : vector<4x8x8xf32> to vector<4x8x8xbf16>
    %c0_20 = arith.constant 0 : index
    %c0_21 = arith.constant 0 : index
    %c8 = arith.constant 8 : index
    %28 = vector.load %arg7[%c0_20, %c0_21, %c8] : memref<4x8x96xbf16, #tpu.memory_space<vmem>>, vector<4x8x8xbf16>
    %c0_22 = arith.constant 0 : index
    %c0_23 = arith.constant 0 : index
    %c40 = arith.constant 40 : index
    %29 = vector.load %arg7[%c0_22, %c0_23, %c40] : memref<4x8x96xbf16, #tpu.memory_space<vmem>>, vector<4x8x8xbf16>
    %c0_24 = arith.constant 0 : index
    %c0_25 = arith.constant 0 : index
    %c72 = arith.constant 72 : index
    %30 = vector.load %arg7[%c0_24, %c0_25, %c72] : memref<4x8x96xbf16, #tpu.memory_space<vmem>>, vector<4x8x8xbf16>
    "tpu.trace_start"() <{level = 10 : i32, message = "bqd,bkd->bqk"}> : () -> ()
    %cst_26 = arith.constant dense<0.000000e+00> : vector<4x8x8xf32>
    %31 = tpu.matmul %28, %29, %cst_26 {dimension_numbers = #tpu.dot_dimension_numbers<[2], [2], [1], [1], [0, 0, 0, 1, 1, 1], [0], [0]>} : vector<4x8x8xbf16>, vector<4x8x8xbf16>, vector<4x8x8xf32> -> vector<4x8x8xf32>
    "tpu.trace_stop"() : () -> ()
    %cst_27 = arith.constant dense<0xFF800000> : vector<4x8xf32>
    %32 = vector.multi_reduction <maximumf>, %31, %cst_27 [2] : vector<4x8x8xf32> to vector<4x8xf32>
    %33 = vector.shape_cast %32 : vector<4x8xf32> to vector<4x8x1xf32>
    %34 = vector.broadcast %33 : vector<4x8x1xf32> to vector<4x8x8xf32>
    %35 = arith.subf %31, %34 : vector<4x8x8xf32>
    %36 = math.exp %35 : vector<4x8x8xf32>
    %cst_28 = arith.constant dense<0.000000e+00> : vector<4x8xf32>
    %37 = vector.multi_reduction <add>, %36, %cst_28 [2] : vector<4x8x8xf32> to vector<4x8xf32>
    %38 = vector.shape_cast %37 : vector<4x8xf32> to vector<4x8x1xf32>
    %39 = tpu.reciprocal %38 {approx = true} : vector<4x8x1xf32> -> vector<4x8x1xf32>
    %40 = arith.truncf %36 : vector<4x8x8xf32> to vector<4x8x8xbf16>
    "tpu.trace_start"() <{level = 10 : i32, message = "bqk,bkd->bqd"}> : () -> ()
    %cst_29 = arith.constant dense<0.000000e+00> : vector<4x8x8xf32>
    %41 = tpu.matmul %40, %30, %cst_29 {dimension_numbers = #tpu.dot_dimension_numbers<[2], [1], [1], [2], [0, 0, 0, 1, 1, 2], [0], [0]>} : vector<4x8x8xbf16>, vector<4x8x8xbf16>, vector<4x8x8xf32> -> vector<4x8x8xf32>
    "tpu.trace_stop"() : () -> ()
    %42 = vector.broadcast %39 : vector<4x8x1xf32> to vector<4x8x8xf32>
    %43 = arith.mulf %41, %42 : vector<4x8x8xf32>
    %44 = arith.truncf %43 : vector<4x8x8xf32> to vector<4x8x8xbf16>
    %c0_30 = arith.constant 0 : index
    %c0_31 = arith.constant 0 : index
    %c16 = arith.constant 16 : index
    %45 = vector.load %arg7[%c0_30, %c0_31, %c16] : memref<4x8x96xbf16, #tpu.memory_space<vmem>>, vector<4x8x8xbf16>
    %c0_32 = arith.constant 0 : index
    %c0_33 = arith.constant 0 : index
    %c48 = arith.constant 48 : index
    %46 = vector.load %arg7[%c0_32, %c0_33, %c48] : memref<4x8x96xbf16, #tpu.memory_space<vmem>>, vector<4x8x8xbf16>
    %c0_34 = arith.constant 0 : index
    %c0_35 = arith.constant 0 : index
    %c80 = arith.constant 80 : index
    %47 = vector.load %arg7[%c0_34, %c0_35, %c80] : memref<4x8x96xbf16, #tpu.memory_space<vmem>>, vector<4x8x8xbf16>
    "tpu.trace_start"() <{level = 10 : i32, message = "bqd,bkd->bqk"}> : () -> ()
    %cst_36 = arith.constant dense<0.000000e+00> : vector<4x8x8xf32>
    %48 = tpu.matmul %45, %46, %cst_36 {dimension_numbers = #tpu.dot_dimension_numbers<[2], [2], [1], [1], [0, 0, 0, 1, 1, 1], [0], [0]>} : vector<4x8x8xbf16>, vector<4x8x8xbf16>, vector<4x8x8xf32> -> vector<4x8x8xf32>
    "tpu.trace_stop"() : () -> ()
    %cst_37 = arith.constant dense<0xFF800000> : vector<4x8xf32>
    %49 = vector.multi_reduction <maximumf>, %48, %cst_37 [2] : vector<4x8x8xf32> to vector<4x8xf32>
    %50 = vector.shape_cast %49 : vector<4x8xf32> to vector<4x8x1xf32>
    %51 = vector.broadcast %50 : vector<4x8x1xf32> to vector<4x8x8xf32>
    %52 = arith.subf %48, %51 : vector<4x8x8xf32>
    %53 = math.exp %52 : vector<4x8x8xf32>
    %cst_38 = arith.constant dense<0.000000e+00> : vector<4x8xf32>
    %54 = vector.multi_reduction <add>, %53, %cst_38 [2] : vector<4x8x8xf32> to vector<4x8xf32>
    %55 = vector.shape_cast %54 : vector<4x8xf32> to vector<4x8x1xf32>
    %56 = tpu.reciprocal %55 {approx = true} : vector<4x8x1xf32> -> vector<4x8x1xf32>
    %57 = arith.truncf %53 : vector<4x8x8xf32> to vector<4x8x8xbf16>
    "tpu.trace_start"() <{level = 10 : i32, message = "bqk,bkd->bqd"}> : () -> ()
    %cst_39 = arith.constant dense<0.000000e+00> : vector<4x8x8xf32>
    %58 = tpu.matmul %57, %47, %cst_39 {dimension_numbers = #tpu.dot_dimension_numbers<[2], [1], [1], [2], [0, 0, 0, 1, 1, 2], [0], [0]>} : vector<4x8x8xbf16>, vector<4x8x8xbf16>, vector<4x8x8xf32> -> vector<4x8x8xf32>
    "tpu.trace_stop"() : () -> ()
    %59 = vector.broadcast %56 : vector<4x8x1xf32> to vector<4x8x8xf32>
    %60 = arith.mulf %58, %59 : vector<4x8x8xf32>
    %61 = arith.truncf %60 : vector<4x8x8xf32> to vector<4x8x8xbf16>
    %c0_40 = arith.constant 0 : index
    %c0_41 = arith.constant 0 : index
    %c24 = arith.constant 24 : index
    %62 = vector.load %arg7[%c0_40, %c0_41, %c24] : memref<4x8x96xbf16, #tpu.memory_space<vmem>>, vector<4x8x8xbf16>
    %c0_42 = arith.constant 0 : index
    %c0_43 = arith.constant 0 : index
    %c56 = arith.constant 56 : index
    %63 = vector.load %arg7[%c0_42, %c0_43, %c56] : memref<4x8x96xbf16, #tpu.memory_space<vmem>>, vector<4x8x8xbf16>
    %c0_44 = arith.constant 0 : index
    %c0_45 = arith.constant 0 : index
    %c88 = arith.constant 88 : index
    %64 = vector.load %arg7[%c0_44, %c0_45, %c88] : memref<4x8x96xbf16, #tpu.memory_space<vmem>>, vector<4x8x8xbf16>
    "tpu.trace_start"() <{level = 10 : i32, message = "bqd,bkd->bqk"}> : () -> ()
    %cst_46 = arith.constant dense<0.000000e+00> : vector<4x8x8xf32>
    %65 = tpu.matmul %62, %63, %cst_46 {dimension_numbers = #tpu.dot_dimension_numbers<[2], [2], [1], [1], [0, 0, 0, 1, 1, 1], [0], [0]>} : vector<4x8x8xbf16>, vector<4x8x8xbf16>, vector<4x8x8xf32> -> vector<4x8x8xf32>
    "tpu.trace_stop"() : () -> ()
    %cst_47 = arith.constant dense<0xFF800000> : vector<4x8xf32>
    %66 = vector.multi_reduction <maximumf>, %65, %cst_47 [2] : vector<4x8x8xf32> to vector<4x8xf32>
    %67 = vector.shape_cast %66 : vector<4x8xf32> to vector<4x8x1xf32>
    %68 = vector.broadcast %67 : vector<4x8x1xf32> to vector<4x8x8xf32>
    %69 = arith.subf %65, %68 : vector<4x8x8xf32>
    %70 = math.exp %69 : vector<4x8x8xf32>
    %cst_48 = arith.constant dense<0.000000e+00> : vector<4x8xf32>
    %71 = vector.multi_reduction <add>, %70, %cst_48 [2] : vector<4x8x8xf32> to vector<4x8xf32>
    %72 = vector.shape_cast %71 : vector<4x8xf32> to vector<4x8x1xf32>
    %73 = tpu.reciprocal %72 {approx = true} : vector<4x8x1xf32> -> vector<4x8x1xf32>
    %74 = arith.truncf %70 : vector<4x8x8xf32> to vector<4x8x8xbf16>
    "tpu.trace_start"() <{level = 10 : i32, message = "bqk,bkd->bqd"}> : () -> ()
    %cst_49 = arith.constant dense<0.000000e+00> : vector<4x8x8xf32>
    %75 = tpu.matmul %74, %64, %cst_49 {dimension_numbers = #tpu.dot_dimension_numbers<[2], [1], [1], [2], [0, 0, 0, 1, 1, 2], [0], [0]>} : vector<4x8x8xbf16>, vector<4x8x8xbf16>, vector<4x8x8xf32> -> vector<4x8x8xf32>
    "tpu.trace_stop"() : () -> ()
    %76 = vector.broadcast %73 : vector<4x8x1xf32> to vector<4x8x8xf32>
    %77 = arith.mulf %75, %76 : vector<4x8x8xf32>
    %78 = arith.truncf %77 : vector<4x8x8xf32> to vector<4x8x8xbf16>
    %79 = tpu.concatenate %27, %44, %61, %78 in 2 : vector<4x8x8xbf16>, vector<4x8x8xbf16>, vector<4x8x8xbf16>, vector<4x8x8xbf16> -> vector<4x8x32xbf16>
    %c0_50 = arith.constant 0 : index
    %c0_51 = arith.constant 0 : index
    %c0_52 = arith.constant 0 : index
    %80 = vector.load %arg8[%c0_50, %c0_51, %c0_52] : memref<4x8x32xbf16, #tpu.memory_space<vmem>>, vector<4x8x32xbf16>
    tpu.vector_store %arg8[%c0_50, %c0_51, %c0_52], %79 {strides = array<i32>} : memref<4x8x32xbf16, #tpu.memory_space<vmem>>, vector<4x8x32xbf16>,
    %c0_53 = arith.constant 0 : index
    %c0_54 = arith.constant 0 : index
    %c0_55 = arith.constant 0 : index
    %81 = vector.load %arg8[%c0_53, %c0_54, %c0_55] : memref<4x8x32xbf16, #tpu.memory_space<vmem>>, vector<4x8x32xbf16>
    %82 = vector.shape_cast %81 : vector<4x8x32xbf16> to vector<32x32xbf16>
    %c0_56 = arith.constant 0 : index
    %c0_57 = arith.constant 0 : index
    %83 = vector.load %arg4[%c0_56, %c0_57] : memref<32x32xbf16, #tpu.memory_space<vmem>>, vector<32x32xbf16>
    %cst_58 = arith.constant dense<0.000000e+00> : vector<32x32xf32>
    %84 = tpu.matmul %82, %83, %cst_58 {dimension_numbers = #tpu.dot_dimension_numbers<[1], [0], [0], [1], [0, 0, 1, 1], [], []>} : vector<32x32xbf16>, vector<32x32xbf16>, vector<32x32xf32> -> vector<32x32xf32>
    %c0_59 = arith.constant 0 : index
    %c0_60 = arith.constant 0 : index
    %85 = vector.load %arg5[%c0_59, %c0_60] : memref<1x32xbf16, #tpu.memory_space<vmem>>, vector<1x32xbf16>
    %86 = arith.extf %85 : vector<1x32xbf16> to vector<1x32xf32>
    %87 = vector.broadcast %86 : vector<1x32xf32> to vector<32x32xf32>
    %88 = arith.addf %84, %87 : vector<32x32xf32>
    %89 = vector.shape_cast %88 : vector<32x32xf32> to vector<4x8x32xf32>
    %c0_61 = arith.constant 0 : index
    %c0_62 = arith.constant 0 : index
    %c0_63 = arith.constant 0 : index
    %90 = vector.load %arg6[%c0_61, %c0_62, %c0_63] : memref<4x8x32xf32, #tpu.memory_space<vmem>>, vector<4x8x32xf32>
    tpu.vector_store %arg6[%c0_61, %c0_62, %c0_63], %89 {strides = array<i32>} : memref<4x8x32xf32, #tpu.memory_space<vmem>>, vector<4x8x32xf32>,
    return
  }
  func.func @transform_0(%arg0: i32) -> (i32, i32, i32) {
    %c0_i32 = arith.constant 0 : i32
    %c0_i32_0 = arith.constant 0 : i32
    %c0_i32_1 = arith.constant 0 : i32
    return %arg0, %c0_i32, %c0_i32_0 : i32, i32, i32
  }
  func.func @transform_1(%arg0: i32) -> (i32, i32) {
    %c0_i32 = arith.constant 0 : i32
    %c0_i32_0 = arith.constant 0 : i32
    %c0_i32_1 = arith.constant 0 : i32
    return %c0_i32, %c0_i32_0 : i32, i32
  }
  func.func @transform_2(%arg0: i32) -> (i32, i32) {
    %c0_i32 = arith.constant 0 : i32
    %c0_i32_0 = arith.constant 0 : i32
    %c0_i32_1 = arith.constant 0 : i32
    return %c0_i32, %c0_i32_0 : i32, i32
  }
  func.func @transform_3(%arg0: i32) -> (i32, i32) {
    %c0_i32 = arith.constant 0 : i32
    %c0_i32_0 = arith.constant 0 : i32
    %c0_i32_1 = arith.constant 0 : i32
    return %c0_i32, %c0_i32_0 : i32, i32
  }
  func.func @transform_4(%arg0: i32) -> (i32, i32) {
    %c0_i32 = arith.constant 0 : i32
    %c0_i32_0 = arith.constant 0 : i32
    %c0_i32_1 = arith.constant 0 : i32
    return %c0_i32, %c0_i32_0 : i32, i32
  }
  func.func @transform_5(%arg0: i32) -> (i32, i32, i32) {
    %c0_i32 = arith.constant 0 : i32
    %c0_i32_0 = arith.constant 0 : i32
    %c0_i32_1 = arith.constant 0 : i32
    return %arg0, %c0_i32, %c0_i32_0 : i32, i32, i32
  }
}

</mosaic_0001>

<llo_original>
// kernel: tpu_custom_call.1
$region0: #{tpu_custom_call.1}
  #allocation0 [shape = 'u32[]', space=smem, size = 0x4, offset = 0x4, fixed_abs, tag = 'smem constant byte address 0x4 - core index']
  #allocation1 [shape = 'u32[144,128]{1,0:T(1,128)}', space=vmem, size = 0x12000, scoped, tag = 'internal scratch']
  #allocation2 [shape = 'bf16[4,8,96]{2,1,0:T(8,128)(2,1)}', space=vmem, size = 0x2000, scoped, tag = 'scratch operand']
  #allocation3 [shape = 'bf16[4,8,32]{2,1,0:T(8,128)(2,1)}', space=vmem, size = 0x2000, scoped, tag = 'scratch operand']
  %s0 = inlined_call_operand.hbm [shape: bf16[4,8,32], index: 0, kind: input, shape index: {}]
  %s1 = inlined_call_operand.hbm [shape: bf16[32,96], index: 1, kind: input, shape index: {}]
  %s2 = inlined_call_operand.vmem [shape: bf16[1,96], index: 2, kind: input, shape index: {}]
  %s3 = inlined_call_operand.hbm [shape: bf16[32,32], index: 3, kind: input, shape index: {}]
  %s4 = inlined_call_operand.vmem [shape: bf16[1,32], index: 4, kind: input, shape index: {}]
  %s5 = inlined_call_operand.hbm [shape: f32[4,8,32], index: 5, kind: output, shape index: {}]
  %s6 = sld [smem:[#allocation0]]
  $region42: #{tpu_custom_call.1} parent=0
    _
  %s8 = ssub.s32 1, %s6
  %s9 = scalar_select 0, %s8, %s6
  $region1: #{tpu_custom_call.1} parent=0
    #allocation4 [shape = 'u8[8192]{0}', space=vmem, size = 0x2000, scoped, tag = 'input window, operand 0, single buffered']
    #allocation5 [shape = 's32[1]{0}', space=sflag, size = 0x4, scoped, tag = 'scoped memory for tpu_custom_call.1']
    #allocation6 [shape = 's32[1]{0}', space=sflag, size = 0x4, scoped, tag = 'scoped memory for tpu_custom_call.1']
    #allocation7 [shape = 'u8[8192]{0}', space=vmem, size = 0x2000, scoped, tag = 'input window, operand 1, single buffered']
    #allocation8 [shape = 's32[1]{0}', space=sflag, size = 0x4, scoped, tag = 'scoped memory for tpu_custom_call.1']
    #allocation9 [shape = 'u8[8192]{0}', space=vmem, size = 0x2000, scoped, tag = 'input window, operand 3, single buffered']
    #allocation10 [shape = 'u8[16384]{0}', space=vmem, size = 0x4000, scoped, tag = 'output window, operand 0, single buffered']
    %10 = vsyncpa [#allocation5], 0
    %11 = vsyncpa [#allocation8], 0
    %12 = vsyncpa [#allocation6], 0
    // Predicated region
    $region2: #{tpu_custom_call.1} parent=1 // pred_check
      _
    $region3: #{tpu_custom_call.1} parent=1 // pred_check_branch
      %14 = sbr.rel (0) target = $region5
    $region4: #{tpu_custom_call.1} parent=1 // pred_region
      %s16 = ssub.s32 256, 256
      %17 = vsyncadd [#allocation5], %s16
      %s18 = sshll.u32 [#allocation4], 4
      %s19 = int_to_ptr.vmem [resolvable:$true] %s18
      %24 = dma.hbm_to_vmem [thread:$0]  %s0, 256, %s19, [#allocation5], 64, 64, 4
    $region5: #{tpu_custom_call.1} parent=1 // pred_fallthru
      _
    // Predicated region
    $region6: #{tpu_custom_call.1} parent=1 // pred_check
      _
    $region7: #{tpu_custom_call.1} parent=1 // pred_check_branch
      %26 = sbr.rel (0) target = $region9
    $region8: #{tpu_custom_call.1} parent=1 // pred_region
      %s28 = ssub.s32 256, 256
      %29 = vsyncadd [#allocation8], %s28
      %s30 = sshll.u32 [#allocation7], 4
      %s31 = int_to_ptr.vmem [resolvable:$true] %s30
      %36 = dma.hbm_to_vmem [thread:$0]  %s1, 256, %s31, [#allocation8], 64, 64, 4
    $region9: #{tpu_custom_call.1} parent=1 // pred_fallthru
      _
    // Predicated region
    $region10: #{tpu_custom_call.1} parent=1 // pred_check
      _
    $region11: #{tpu_custom_call.1} parent=1 // pred_check_branch
      %38 = sbr.rel (0) target = $region13
    $region12: #{tpu_custom_call.1} parent=1 // pred_region
      _
    $region13: #{tpu_custom_call.1} parent=1 // pred_fallthru
      _
    // Predicated region
    $region14: #{tpu_custom_call.1} parent=1 // pred_check
      _
    $region15: #{tpu_custom_call.1} parent=1 // pred_check_branch
      %40 = sbr.rel (0) target = $region17
    $region16: #{tpu_custom_call.1} parent=1 // pred_region
      %s42 = ssub.s32 256, 256
      %43 = vsyncadd [#allocation8], %s42
      %s44 = sshll.u32 [#allocation9], 4
      %s45 = int_to_ptr.vmem [resolvable:$true] %s44
      %50 = dma.hbm_to_vmem [thread:$0]  %s3, 256, %s45, [#allocation8], 64, 64, 4
    $region17: #{tpu_custom_call.1} parent=1 // pred_fallthru
      _
    // Predicated region
    $region18: #{tpu_custom_call.1} parent=1 // pred_check
      _
    $region19: #{tpu_custom_call.1} parent=1 // pred_check_branch
      %52 = sbr.rel (0) target = $region21
    $region20: #{tpu_custom_call.1} parent=1 // pred_region
      _
    $region21: #{tpu_custom_call.1} parent=1 // pred_fallthru
      _
    // Predicated region
    $region22: #{tpu_custom_call.1} parent=1 // pred_check
      _
    $region23: #{tpu_custom_call.1} parent=1 // pred_check_branch
      %54 = sbr.rel (0) target = $region25
    $region24: #{tpu_custom_call.1} parent=1 // pred_region
      %55 = dma.done [#allocation5], 256
    $region25: #{tpu_custom_call.1} parent=1 // pred_fallthru
      _
    // Predicated region
    $region26: #{tpu_custom_call.1} parent=1 // pred_check
      _
    $region27: #{tpu_custom_call.1} parent=1 // pred_check_branch
      %57 = sbr.rel (0) target = $region29
    $region28: #{tpu_custom_call.1} parent=1 // pred_region
      %58 = dma.done [#allocation8], 256
    $region29: #{tpu_custom_call.1} parent=1 // pred_fallthru
      _
    // Predicated region
    $region30: #{tpu_custom_call.1} parent=1 // pred_check
      _
    $region31: #{tpu_custom_call.1} parent=1 // pred_check_branch
      %60 = sbr.rel (0) target = $region33
    $region32: #{tpu_custom_call.1} parent=1 // pred_region
      %61 = dma.done [#allocation8], 256
    $region33: #{tpu_custom_call.1} parent=1 // pred_fallthru
      _
    %v63 = vld [vmem:[#allocation4] sm:$0xf]
    %v64 = vld [vmem:[#allocation4 + $0x4] sm:$0xf]
    %v65 = vld [vmem:[#allocation4 + $0x8] sm:$0xf]
    %v66 = vld [vmem:[#allocation4 + $0xc] sm:$0xf]
    %v67 = vld [vmem:[#allocation7] sm:$0xf]
    %v68 = vld [vmem:[#allocation7 + $0x4] sm:$0xf]
    %v69 = vld [vmem:[#allocation7 + $0x8] sm:$0xf]
    %v70 = vld [vmem:[#allocation7 + $0xc] sm:$0xf]
    %v71 = vld [vmem:[%s2] sm:$0x1]
    %v72 = vunpack.c.l.bf16 %v71
    %v73 = vlaneseq
    %v74 = vshrl.u32 %v73, 7
    %v75 = vsub.s32 0, %v74
    %v76 = vrot.slane %v72, %v75
    %v81 = vunpack.c.l.b16 %v63
    %v82 = vunpack.c.l.b16 %v64
    %v83 = vunpack.c.l.b16 %v65
    %v84 = vunpack.c.l.b16 %v66
    %v85 = vpack.c.b16 %v82, %v81
    %v86 = vpack.c.b16 %v84, %v83
    %v91 = vunpack.c.l.b16 %v67
    %v92 = vunpack.c.l.b16 %v68
    %v93 = vunpack.c.l.b16 %v69
    %v94 = vunpack.c.l.b16 %v70
    %v95 = vpack.c.b16 %v92, %v91
    %v96 = vpack.c.b16 %v94, %v93
    %vm99 = vcmask 261120
    %v101 = vsel %vm99, %v85, 0
    %v104 = vsel %vm99, %v86, 0
    %106 = vmatprep.subr.bf16.mxu0 0
    %107 = vmatpush1.bf16.msra.mxu0 %v95
    %108 = vmatprep.subr.bf16.mxu0 0
    %109 = vmatpush1.bf16.msra.mxu0 %v96
    %110 = vmatprep.subr.bf16.mxu0 0
    %111 = vmatpush1.bf16.msra.mxu0 0
    %112 = vmatprep.subr.bf16.mxu0 0
    %113 = vmatpush1.bf16.msra.mxu0 0
    %114 = vmatprep.subr.bf16.mxu0 0
    %115 = vmatpush1.bf16.msra.mxu0 0
    %116 = vmatprep.subr.bf16.mxu0 0
    %117 = vmatpush1.bf16.msra.mxu0 0
    %118 = vmatprep.subr.bf16.mxu0 0
    %119 = vmatpush1.bf16.msra.mxu0 0
    %120 = vmatprep.subr.bf16.mxu0 0
    %121 = vmatpush1.bf16.msra.mxu0 0
    %122 = vmatprep.subr.bf16.mxu0 0
    %123 = vmatpush1.bf16.msra.mxu0 0
    %124 = vmatprep.subr.bf16.mxu0 0
    %125 = vmatpush1.bf16.msra.mxu0 0
    %126 = vmatprep.subr.bf16.mxu0 0
    %127 = vmatpush1.bf16.msra.mxu0 0
    %128 = vmatprep.subr.bf16.mxu0 0
    %129 = vmatpush1.bf16.msra.mxu0 0
    %130 = vmatprep.subr.bf16.mxu0 0
    %131 = vmatpush1.bf16.msra.mxu0 0
    %132 = vmatprep.subr.bf16.mxu0 0
    %133 = vmatpush1.bf16.msra.mxu0 0
    %134 = vmatprep.subr.bf16.mxu0 0
    %135 = vmatpush1.bf16.msra.mxu0 0
    %136 = vmatprep.subr.bf16.mxu0 0
    %137 = vmatpush1.bf16.msra.mxu0 0
    %138 = vmatprep.mubr.bf16.mxu0 0
    %139 = vmatmul.mubr.bf16.gmra.mrb[0].mxu0 %v101
    %v140 = vpop.f32.mrb[0].mxu0
    %v141 = vadd.f32 %v76, %v140
    %v142 = vpop.f32.mrb[0].mxu0
    %v143 = vpop.f32.mrb[0].mxu0
    %v144 = vadd.f32 %v76, %v143
    %v145 = vpop.f32.mrb[0].mxu0
    %146 = vmatprep.mubr.bf16.mxu0 0
    %147 = vmatmul.mubr.bf16.gmra.mrb[0].mxu0 %v104
    %v148 = vpop.f32.mrb[0].mxu0
    %v149 = vadd.f32 %v76, %v148
    %v150 = vpop.f32.mrb[0].mxu0
    %v151 = vpop.f32.mrb[0].mxu0
    %v152 = vadd.f32 %v76, %v151
    %v153 = vpop.f32.mrb[0].mxu0
    %154 = vdwg.mxu0
    %v155 = vpack.c.bf16 %v141, %v141
    %v156 = vpack.c.bf16 %v144, %v144
    %v157 = vpack.c.bf16 %v149, %v149
    %v158 = vpack.c.bf16 %v152, %v152
    %vm159 = vcmask 781312
    %160 = vst.msk [vmem:[#allocation2] sm:$0xf] %vm159, %v155
    %161 = vst.msk [vmem:[#allocation2 + $0x4] sm:$0xf] %vm159, %v156
    %162 = vst.msk [vmem:[#allocation2 + $0x8] sm:$0xf] %vm159, %v157
    %163 = vst.msk [vmem:[#allocation2 + $0xc] sm:$0xf] %vm159, %v158
    %v164 = vld [vmem:[#allocation2] sm:$0xf]
    %v165 = vld [vmem:[#allocation2 + $0x4] sm:$0xf]
    %v166 = vld [vmem:[#allocation2 + $0x8] sm:$0xf]
    %v167 = vld [vmem:[#allocation2 + $0xc] sm:$0xf]
    %v169 = vunpack.c.l.b16 %v164
    %v170 = vpack.c.b16 %v169, %v169
    %171 = vrot.lane.b32.xlu0 %v170, 96
    %v172 = vpop.permute.xlu0 %171
    %vm173 = vcmask 64512
    %v175 = vsel %vm173, %v164, 0
    %v178 = vsel %vm173, %v172, 0
    %180 = vmatprep.subr.bf16.mxu0 0
    %181 = vmatpush1.bf16.xpose.msra.mxu0 %v178
    %182 = vmatprep.subr.bf16.mxu0 0
    %183 = vmatpush1.bf16.xpose.msra.mxu0 0
    %184 = vmatprep.subr.bf16.mxu0 0
    %185 = vmatpush1.bf16.xpose.msra.mxu0 0
    %186 = vmatprep.subr.bf16.mxu0 0
    %187 = vmatpush1.bf16.xpose.msra.mxu0 0
    %188 = vmatprep.subr.bf16.mxu0 0
    %189 = vmatpush1.bf16.xpose.msra.mxu0 0
    %190 = vmatprep.subr.bf16.mxu0 0
    %191 = vmatpush1.bf16.xpose.msra.mxu0 0
    %192 = vmatprep.subr.bf16.mxu0 0
    %193 = vmatpush1.bf16.xpose.msra.mxu0 0
    %194 = vmatprep.subr.bf16.mxu0 0
    %195 = vmatpush1.bf16.xpose.msra.mxu0 0
    %196 = vmatprep.subr.bf16.mxu0 0
    %197 = vmatpush1.bf16.xpose.msra.mxu0 0
    %198 = vmatprep.subr.bf16.mxu0 0
    %199 = vmatpush1.bf16.xpose.msra.mxu0 0
    %200 = vmatprep.subr.bf16.mxu0 0
    %201 = vmatpush1.bf16.xpose.msra.mxu0 0
    %202 = vmatprep.subr.bf16.mxu0 0
    %203 = vmatpush1.bf16.xpose.msra.mxu0 0
    %204 = vmatprep.subr.bf16.mxu0 0
    %205 = vmatpush1.bf16.xpose.msra.mxu0 0
    %206 = vmatprep.subr.bf16.mxu0 0
    %207 = vmatpush1.bf16.xpose.msra.mxu0 0
    %208 = vmatprep.subr.bf16.mxu0 0
    %209 = vmatpush1.bf16.xpose.msra.mxu0 0
    %210 = vmatprep.subr.bf16.mxu0 0
    %211 = vmatpush1.bf16.xpose.msra.mxu0 0
    %212 = vmatprep.mubr.bf16.mxu0 0
    %213 = vmatmul.mubr.bf16.gmra.mrb[0].mxu0 %v175
    %v214 = vpop.f32.mrb[0].mxu0
    %v215 = vadd.f32 0.0, %v214
    %v216 = vpop.f32.mrb[0].mxu0
    %v217 = vpop.f32.mrb[0].mxu0
    %v218 = vpop.f32.mrb[0].mxu0
    %219 = vdwg.mxu0
    %v221 = vunpack.c.l.b16 %v165
    %v222 = vpack.c.b16 %v221, %v221
    %223 = vrot.lane.b32.xlu0 %v222, 96
    %v224 = vpop.permute.xlu0 %223
    %v226 = vsel %vm173, %v165, 0
    %v229 = vsel %vm173, %v224, 0
    %231 = vmatprep.subr.bf16.mxu0 0
    %232 = vmatpush1.bf16.xpose.msra.mxu0 %v229
    %233 = vmatprep.subr.bf16.mxu0 0
    %234 = vmatpush1.bf16.xpose.msra.mxu0 0
    %235 = vmatprep.subr.bf16.mxu0 0
    %236 = vmatpush1.bf16.xpose.msra.mxu0 0
    %237 = vmatprep.subr.bf16.mxu0 0
    %238 = vmatpush1.bf16.xpose.msra.mxu0 0
    %239 = vmatprep.subr.bf16.mxu0 0
    %240 = vmatpush1.bf16.xpose.msra.mxu0 0
    %241 = vmatprep.subr.bf16.mxu0 0
    %242 = vmatpush1.bf16.xpose.msra.mxu0 0
    %243 = vmatprep.subr.bf16.mxu0 0
    %244 = vmatpush1.bf16.xpose.msra.mxu0 0
    %245 = vmatprep.subr.bf16.mxu0 0
    %246 = vmatpush1.bf16.xpose.msra.mxu0 0
    %247 = vmatprep.subr.bf16.mxu0 0
    %248 = vmatpush1.bf16.xpose.msra.mxu0 0
    %249 = vmatprep.subr.bf16.mxu0 0
    %250 = vmatpush1.bf16.xpose.msra.mxu0 0
    %251 = vmatprep.subr.bf16.mxu0 0
    %252 = vmatpush1.bf16.xpose.msra.mxu0 0
    %253 = vmatprep.subr.bf16.mxu0 0
    %254 = vmatpush1.bf16.xpose.msra.mxu0 0
    %255 = vmatprep.subr.bf16.mxu0 0
    %256 = vmatpush1.bf16.xpose.msra.mxu0 0
    %257 = vmatprep.subr.bf16.mxu0 0
    %258 = vmatpush1.bf16.xpose.msra.mxu0 0
    %259 = vmatprep.subr.bf16.mxu0 0
    %260 = vmatpush1.bf16.xpose.msra.mxu0 0
    %261 = vmatprep.subr.bf16.mxu0 0
    %262 = vmatpush1.bf16.xpose.msra.mxu0 0
    %263 = vmatprep.mubr.bf16.mxu0 0
    %264 = vmatmul.mubr.bf16.gmra.mrb[0].mxu0 %v226
    %v265 = vpop.f32.mrb[0].mxu0
    %v266 = vadd.f32 0.0, %v265
    %v267 = vpop.f32.mrb[0].mxu0
    %v268 = vpop.f32.mrb[0].mxu0
    %v269 = vpop.f32.mrb[0].mxu0
    %270 = vdwg.mxu0
    %v272 = vunpack.c.l.b16 %v166
    %v273 = vpack.c.b16 %v272, %v272
    %274 = vrot.lane.b32.xlu0 %v273, 96
    %v275 = vpop.permute.xlu0 %274
    %v277 = vsel %vm173, %v166, 0
    %v280 = vsel %vm173, %v275, 0
    %282 = vmatprep.subr.bf16.mxu0 0
    %283 = vmatpush1.bf16.xpose.msra.mxu0 %v280
    %284 = vmatprep.subr.bf16.mxu0 0
    %285 = vmatpush1.bf16.xpose.msra.mxu0 0
    %286 = vmatprep.subr.bf16.mxu0 0
    %287 = vmatpush1.bf16.xpose.msra.mxu0 0
    %288 = vmatprep.subr.bf16.mxu0 0
    %289 = vmatpush1.bf16.xpose.msra.mxu0 0
    %290 = vmatprep.subr.bf16.mxu0 0
    %291 = vmatpush1.bf16.xpose.msra.mxu0 0
    %292 = vmatprep.subr.bf16.mxu0 0
    %293 = vmatpush1.bf16.xpose.msra.mxu0 0
    %294 = vmatprep.subr.bf16.mxu0 0
    %295 = vmatpush1.bf16.xpose.msra.mxu0 0
    %296 = vmatprep.subr.bf16.mxu0 0
    %297 = vmatpush1.bf16.xpose.msra.mxu0 0
    %298 = vmatprep.subr.bf16.mxu0 0
    %299 = vmatpush1.bf16.xpose.msra.mxu0 0
    %300 = vmatprep.subr.bf16.mxu0 0
    %301 = vmatpush1.bf16.xpose.msra.mxu0 0
    %302 = vmatprep.subr.bf16.mxu0 0
    %303 = vmatpush1.bf16.xpose.msra.mxu0 0
    %304 = vmatprep.subr.bf16.mxu0 0
    %305 = vmatpush1.bf16.xpose.msra.mxu0 0
    %306 = vmatprep.subr.bf16.mxu0 0
    %307 = vmatpush1.bf16.xpose.msra.mxu0 0
    %308 = vmatprep.subr.bf16.mxu0 0
    %309 = vmatpush1.bf16.xpose.msra.mxu0 0
    %310 = vmatprep.subr.bf16.mxu0 0
    %311 = vmatpush1.bf16.xpose.msra.mxu0 0
    %312 = vmatprep.subr.bf16.mxu0 0
    %313 = vmatpush1.bf16.xpose.msra.mxu0 0
    %314 = vmatprep.mubr.bf16.mxu0 0
    %315 = vmatmul.mubr.bf16.gmra.mrb[0].mxu0 %v277
    %v316 = vpop.f32.mrb[0].mxu0
    %v317 = vadd.f32 0.0, %v316
    %v318 = vpop.f32.mrb[0].mxu0
    %v319 = vpop.f32.mrb[0].mxu0
    %v320 = vpop.f32.mrb[0].mxu0
    %321 = vdwg.mxu0
    %v323 = vunpack.c.l.b16 %v167
    %v324 = vpack.c.b16 %v323, %v323
    %325 = vrot.lane.b32.xlu0 %v324, 96
    %v326 = vpop.permute.xlu0 %325
    %v328 = vsel %vm173, %v167, 0
    %v331 = vsel %vm173, %v326, 0
    %333 = vmatprep.subr.bf16.mxu0 0
    %334 = vmatpush1.bf16.xpose.msra.mxu0 %v331
    %335 = vmatprep.subr.bf16.mxu0 0
    %336 = vmatpush1.bf16.xpose.msra.mxu0 0
    %337 = vmatprep.subr.bf16.mxu0 0
    %338 = vmatpush1.bf16.xpose.msra.mxu0 0
    %339 = vmatprep.subr.bf16.mxu0 0
    %340 = vmatpush1.bf16.xpose.msra.mxu0 0
    %341 = vmatprep.subr.bf16.mxu0 0
    %342 = vmatpush1.bf16.xpose.msra.mxu0 0
    %343 = vmatprep.subr.bf16.mxu0 0
    %344 = vmatpush1.bf16.xpose.msra.mxu0 0
    %345 = vmatprep.subr.bf16.mxu0 0
    %346 = vmatpush1.bf16.xpose.msra.mxu0 0
    %347 = vmatprep.subr.bf16.mxu0 0
    %348 = vmatpush1.bf16.xpose.msra.mxu0 0
    %349 = vmatprep.subr.bf16.mxu0 0
    %350 = vmatpush1.bf16.xpose.msra.mxu0 0
    %351 = vmatprep.subr.bf16.mxu0 0
    %352 = vmatpush1.bf16.xpose.msra.mxu0 0
    %353 = vmatprep.subr.bf16.mxu0 0
    %354 = vmatpush1.bf16.xpose.msra.mxu0 0
    %355 = vmatprep.subr.bf16.mxu0 0
    %356 = vmatpush1.bf16.xpose.msra.mxu0 0
    %357 = vmatprep.subr.bf16.mxu0 0
    %358 = vmatpush1.bf16.xpose.msra.mxu0 0
    %359 = vmatprep.subr.bf16.mxu0 0
    %360 = vmatpush1.bf16.xpose.msra.mxu0 0
    %361 = vmatprep.subr.bf16.mxu0 0
    %362 = vmatpush1.bf16.xpose.msra.mxu0 0
    %363 = vmatprep.subr.bf16.mxu0 0
    %364 = vmatpush1.bf16.xpose.msra.mxu0 0
    %365 = vmatprep.mubr.bf16.mxu0 0
    %366 = vmatmul.mubr.bf16.gmra.mrb[0].mxu0 %v328
    %v367 = vpop.f32.mrb[0].mxu0
    %v368 = vadd.f32 0.0, %v367
    %v369 = vpop.f32.mrb[0].mxu0
    %v370 = vpop.f32.mrb[0].mxu0
    %v371 = vpop.f32.mrb[0].mxu0
    %372 = vdwg.mxu0
    %v373 = vsel %vm173, %v215, -inf
    %374 = vmax.xlane.f32.xlu0 %v373
    %v375 = vpop.xlane.xlu0 %374
    %v376 = vsel %vm173, %v266, -inf
    %377 = vmax.xlane.f32.xlu0 %v376
    %v378 = vpop.xlane.xlu0 %377
    %v379 = vsel %vm173, %v317, -inf
    %380 = vmax.xlane.f32.xlu0 %v379
    %v381 = vpop.xlane.xlu0 %380
    %v382 = vsel %vm173, %v368, -inf
    %383 = vmax.xlane.f32.xlu0 %v382
    %v384 = vpop.xlane.xlu0 %383
    %v385 = vsub.f32 %v215, %v375
    %v386 = vsub.f32 %v266, %v378
    %v387 = vsub.f32 %v317, %v381
    %v388 = vsub.f32 %v368, %v384
    %v389 = vmul.f32 %v385, 1.442695
    %v390 = vpow.pop %v389
    %v391 = vmul.f32 %v386, 1.442695
    %v392 = vpow.pop %v391
    %v393 = vmul.f32 %v387, 1.442695
    %v394 = vpow.pop %v393
    %v395 = vmul.f32 %v388, 1.442695
    %v396 = vpow.pop %v395
    %v397 = vsel %vm173, %v390, 0.0
    %398 = vadd.xlane.f32.xlu0 %v397
    %v399 = vpop.xlane.xlu0 %398
    %v400 = vsel %vm173, %v392, 0.0
    %401 = vadd.xlane.f32.xlu0 %v400
    %v402 = vpop.xlane.xlu0 %401
    %v403 = vsel %vm173, %v394, 0.0
    %404 = vadd.xlane.f32.xlu0 %v403
    %v405 = vpop.xlane.xlu0 %404
    %v406 = vsel %vm173, %v396, 0.0
    %407 = vadd.xlane.f32.xlu0 %v406
    %v408 = vpop.xlane.xlu0 %407
    %v409 = vrcp.pop %v399
    %v410 = vrcp.pop %v402
    %v411 = vrcp.pop %v405
    %v412 = vrcp.pop %v408
    %v413 = vpack.c.bf16 %v390, %v390
    %v414 = vpack.c.bf16 %v392, %v392
    %v415 = vpack.c.bf16 %v394, %v394
    %v416 = vpack.c.bf16 %v396, %v396
    %417 = vrot.lane.b32.xlu0 %v170, 64
    %v418 = vpop.permute.xlu0 %417
    %v420 = vsel %vm173, %v413, 0
    %vm422 = vcmask 1043456
    %v424 = vsel %vm422, %v418, 0
    %426 = vmatprep.subr.bf16.mxu0 0
    %427 = vmatpush1.bf16.msra.mxu0 %v424
    %428 = vmatprep.subr.bf16.mxu0 0
    %429 = vmatpush1.bf16.msra.mxu0 0
    %430 = vmatprep.subr.bf16.mxu0 0
    %431 = vmatpush1.bf16.msra.mxu0 0
    %432 = vmatprep.subr.bf16.mxu0 0
    %433 = vmatpush1.bf16.msra.mxu0 0
    %434 = vmatprep.subr.bf16.mxu0 0
    %435 = vmatpush1.bf16.msra.mxu0 0
    %436 = vmatprep.subr.bf16.mxu0 0
    %437 = vmatpush1.bf16.msra.mxu0 0
    %438 = vmatprep.subr.bf16.mxu0 0
    %439 = vmatpush1.bf16.msra.mxu0 0
    %440 = vmatprep.subr.bf16.mxu0 0
    %441 = vmatpush1.bf16.msra.mxu0 0
    %442 = vmatprep.subr.bf16.mxu0 0
    %443 = vmatpush1.bf16.msra.mxu0 0
    %444 = vmatprep.subr.bf16.mxu0 0
    %445 = vmatpush1.bf16.msra.mxu0 0
    %446 = vmatprep.subr.bf16.mxu0 0
    %447 = vmatpush1.bf16.msra.mxu0 0
    %448 = vmatprep.subr.bf16.mxu0 0
    %449 = vmatpush1.bf16.msra.mxu0 0
    %450 = vmatprep.subr.bf16.mxu0 0
    %451 = vmatpush1.bf16.msra.mxu0 0
    %452 = vmatprep.subr.bf16.mxu0 0
    %453 = vmatpush1.bf16.msra.mxu0 0
    %454 = vmatprep.subr.bf16.mxu0 0
    %455 = vmatpush1.bf16.msra.mxu0 0
    %456 = vmatprep.subr.bf16.mxu0 0
    %457 = vmatpush1.bf16.msra.mxu0 0
    %458 = vmatprep.mubr.bf16.mxu0 0
    %459 = vmatmul.mubr.bf16.gmra.mrb[0].mxu0 %v420
    %v460 = vpop.f32.mrb[0].mxu0
    %v461 = vadd.f32 0.0, %v460
    %v462 = vpop.f32.mrb[0].mxu0
    %v463 = vpop.f32.mrb[0].mxu0
    %v464 = vpop.f32.mrb[0].mxu0
    %465 = vdwg.mxu0
    %466 = vrot.lane.b32.xlu0 %v222, 64
    %v467 = vpop.permute.xlu0 %466
    %v469 = vsel %vm173, %v414, 0
    %v472 = vsel %vm422, %v467, 0
    %474 = vmatprep.subr.bf16.mxu0 0
    %475 = vmatpush1.bf16.msra.mxu0 %v472
    %476 = vmatprep.subr.bf16.mxu0 0
    %477 = vmatpush1.bf16.msra.mxu0 0
    %478 = vmatprep.subr.bf16.mxu0 0
    %479 = vmatpush1.bf16.msra.mxu0 0
    %480 = vmatprep.subr.bf16.mxu0 0
    %481 = vmatpush1.bf16.msra.mxu0 0
    %482 = vmatprep.subr.bf16.mxu0 0
    %483 = vmatpush1.bf16.msra.mxu0 0
    %484 = vmatprep.subr.bf16.mxu0 0
    %485 = vmatpush1.bf16.msra.mxu0 0
    %486 = vmatprep.subr.bf16.mxu0 0
    %487 = vmatpush1.bf16.msra.mxu0 0
    %488 = vmatprep.subr.bf16.mxu0 0
    %489 = vmatpush1.bf16.msra.mxu0 0
    %490 = vmatprep.subr.bf16.mxu0 0
    %491 = vmatpush1.bf16.msra.mxu0 0
    %492 = vmatprep.subr.bf16.mxu0 0
    %493 = vmatpush1.bf16.msra.mxu0 0
    %494 = vmatprep.subr.bf16.mxu0 0
    %495 = vmatpush1.bf16.msra.mxu0 0
    %496 = vmatprep.subr.bf16.mxu0 0
    %497 = vmatpush1.bf16.msra.mxu0 0
    %498 = vmatprep.subr.bf16.mxu0 0
    %499 = vmatpush1.bf16.msra.mxu0 0
    %500 = vmatprep.subr.bf16.mxu0 0
    %501 = vmatpush1.bf16.msra.mxu0 0
    %502 = vmatprep.subr.bf16.mxu0 0
    %503 = vmatpush1.bf16.msra.mxu0 0
    %504 = vmatprep.subr.bf16.mxu0 0
    %505 = vmatpush1.bf16.msra.mxu0 0
    %506 = vmatprep.mubr.bf16.mxu0 0
    %507 = vmatmul.mubr.bf16.gmra.mrb[0].mxu0 %v469
    %v508 = vpop.f32.mrb[0].mxu0
    %v509 = vadd.f32 0.0, %v508
    %v510 = vpop.f32.mrb[0].mxu0
    %v511 = vpop.f32.mrb[0].mxu0
    %v512 = vpop.f32.mrb[0].mxu0
    %513 = vdwg.mxu0
    %514 = vrot.lane.b32.xlu0 %v273, 64
    %v515 = vpop.permute.xlu0 %514
    %v517 = vsel %vm173, %v415, 0
    %v520 = vsel %vm422, %v515, 0
    %522 = vmatprep.subr.bf16.mxu0 0
    %523 = vmatpush1.bf16.msra.mxu0 %v520
    %524 = vmatprep.subr.bf16.mxu0 0
    %525 = vmatpush1.bf16.msra.mxu0 0
    %526 = vmatprep.subr.bf16.mxu0 0
    %527 = vmatpush1.bf16.msra.mxu0 0
    %528 = vmatprep.subr.bf16.mxu0 0
    %529 = vmatpush1.bf16.msra.mxu0 0
    %530 = vmatprep.subr.bf16.mxu0 0
    %531 = vmatpush1.bf16.msra.mxu0 0
    %532 = vmatprep.subr.bf16.mxu0 0
    %533 = vmatpush1.bf16.msra.mxu0 0
    %534 = vmatprep.subr.bf16.mxu0 0
    %535 = vmatpush1.bf16.msra.mxu0 0
    %536 = vmatprep.subr.bf16.mxu0 0
    %537 = vmatpush1.bf16.msra.mxu0 0
    %538 = vmatprep.subr.bf16.mxu0 0
    %539 = vmatpush1.bf16.msra.mxu0 0
    %540 = vmatprep.subr.bf16.mxu0 0
    %541 = vmatpush1.bf16.msra.mxu0 0
    %542 = vmatprep.subr.bf16.mxu0 0
    %543 = vmatpush1.bf16.msra.mxu0 0
    %544 = vmatprep.subr.bf16.mxu0 0
    %545 = vmatpush1.bf16.msra.mxu0 0
    %546 = vmatprep.subr.bf16.mxu0 0
    %547 = vmatpush1.bf16.msra.mxu0 0
    %548 = vmatprep.subr.bf16.mxu0 0
    %549 = vmatpush1.bf16.msra.mxu0 0
    %550 = vmatprep.subr.bf16.mxu0 0
    %551 = vmatpush1.bf16.msra.mxu0 0
    %552 = vmatprep.subr.bf16.mxu0 0
    %553 = vmatpush1.bf16.msra.mxu0 0
    %554 = vmatprep.mubr.bf16.mxu0 0
    %555 = vmatmul.mubr.bf16.gmra.mrb[0].mxu0 %v517
    %v556 = vpop.f32.mrb[0].mxu0
    %v557 = vadd.f32 0.0, %v556
    %v558 = vpop.f32.mrb[0].mxu0
    %v559 = vpop.f32.mrb[0].mxu0
    %v560 = vpop.f32.mrb[0].mxu0
    %561 = vdwg.mxu0
    %562 = vrot.lane.b32.xlu0 %v324, 64
    %v563 = vpop.permute.xlu0 %562
    %v565 = vsel %vm173, %v416, 0
    %v568 = vsel %vm422, %v563, 0
    %570 = vmatprep.subr.bf16.mxu0 0
    %571 = vmatpush1.bf16.msra.mxu0 %v568
    %572 = vmatprep.subr.bf16.mxu0 0
    %573 = vmatpush1.bf16.msra.mxu0 0
    %574 = vmatprep.subr.bf16.mxu0 0
    %575 = vmatpush1.bf16.msra.mxu0 0
    %576 = vmatprep.subr.bf16.mxu0 0
    %577 = vmatpush1.bf16.msra.mxu0 0
    %578 = vmatprep.subr.bf16.mxu0 0
    %579 = vmatpush1.bf16.msra.mxu0 0
    %580 = vmatprep.subr.bf16.mxu0 0
    %581 = vmatpush1.bf16.msra.mxu0 0
    %582 = vmatprep.subr.bf16.mxu0 0
    %583 = vmatpush1.bf16.msra.mxu0 0
    %584 = vmatprep.subr.bf16.mxu0 0
    %585 = vmatpush1.bf16.msra.mxu0 0
    %586 = vmatprep.subr.bf16.mxu0 0
    %587 = vmatpush1.bf16.msra.mxu0 0
    %588 = vmatprep.subr.bf16.mxu0 0
    %589 = vmatpush1.bf16.msra.mxu0 0
    %590 = vmatprep.subr.bf16.mxu0 0
    %591 = vmatpush1.bf16.msra.mxu0 0
    %592 = vmatprep.subr.bf16.mxu0 0
    %593 = vmatpush1.bf16.msra.mxu0 0
    %594 = vmatprep.subr.bf16.mxu0 0
    %595 = vmatpush1.bf16.msra.mxu0 0
    %596 = vmatprep.subr.bf16.mxu0 0
    %597 = vmatpush1.bf16.msra.mxu0 0
    %598 = vmatprep.subr.bf16.mxu0 0
    %599 = vmatpush1.bf16.msra.mxu0 0
    %600 = vmatprep.subr.bf16.mxu0 0
    %601 = vmatpush1.bf16.msra.mxu0 0
    %602 = vmatprep.mubr.bf16.mxu0 0
    %603 = vmatmul.mubr.bf16.gmra.mrb[0].mxu0 %v565
    %v604 = vpop.f32.mrb[0].mxu0
    %v605 = vadd.f32 0.0, %v604
    %v606 = vpop.f32.mrb[0].mxu0
    %v607 = vpop.f32.mrb[0].mxu0
    %v608 = vpop.f32.mrb[0].mxu0
    %609 = vdwg.mxu0
    %v610 = vmul.f32 %v461, %v409
    %v611 = vmul.f32 %v509, %v410
    %v612 = vmul.f32 %v557, %v411
    %v613 = vmul.f32 %v605, %v412
    %v614 = vpack.c.bf16 %v610, %v610
    %v615 = vpack.c.bf16 %v611, %v611
    %v616 = vpack.c.bf16 %v612, %v612
    %v617 = vpack.c.bf16 %v613, %v613
    %v618 = vld [vmem:[#allocation2] sm:$0xf]
    %v619 = vld [vmem:[#allocation2 + $0x4] sm:$0xf]
    %v620 = vld [vmem:[#allocation2 + $0x8] sm:$0xf]
    %v621 = vld [vmem:[#allocation2 + $0xc] sm:$0xf]
    %v623 = vunpack.c.l.b16 %v618
    %v624 = vpack.c.b16 %v623, %v623
    %625 = vrot.lane.b32.xlu0 %v624, 120
    %v626 = vpop.permute.xlu0 %625
    %627 = vrot.lane.b32.xlu0 %v624, 88
    %v628 = vpop.permute.xlu0 %627
    %v630 = vsel %vm173, %v626, 0
    %v633 = vsel %vm173, %v628, 0
    %635 = vmatprep.subr.bf16.mxu0 0
    %636 = vmatpush1.bf16.xpose.msra.mxu0 %v633
    %637 = vmatprep.subr.bf16.mxu0 0
    %638 = vmatpush1.bf16.xpose.msra.mxu0 0
    %639 = vmatprep.subr.bf16.mxu0 0
    %640 = vmatpush1.bf16.xpose.msra.mxu0 0
    %641 = vmatprep.subr.bf16.mxu0 0
    %642 = vmatpush1.bf16.xpose.msra.mxu0 0
    %643 = vmatprep.subr.bf16.mxu0 0
    %644 = vmatpush1.bf16.xpose.msra.mxu0 0
    %645 = vmatprep.subr.bf16.mxu0 0
    %646 = vmatpush1.bf16.xpose.msra.mxu0 0
    %647 = vmatprep.subr.bf16.mxu0 0
    %648 = vmatpush1.bf16.xpose.msra.mxu0 0
    %649 = vmatprep.subr.bf16.mxu0 0
    %650 = vmatpush1.bf16.xpose.msra.mxu0 0
    %651 = vmatprep.subr.bf16.mxu0 0
    %652 = vmatpush1.bf16.xpose.msra.mxu0 0
    %653 = vmatprep.subr.bf16.mxu0 0
    %654 = vmatpush1.bf16.xpose.msra.mxu0 0
    %655 = vmatprep.subr.bf16.mxu0 0
    %656 = vmatpush1.bf16.xpose.msra.mxu0 0
    %657 = vmatprep.subr.bf16.mxu0 0
    %658 = vmatpush1.bf16.xpose.msra.mxu0 0
    %659 = vmatprep.subr.bf16.mxu0 0
    %660 = vmatpush1.bf16.xpose.msra.mxu0 0
    %661 = vmatprep.subr.bf16.mxu0 0
    %662 = vmatpush1.bf16.xpose.msra.mxu0 0
    %663 = vmatprep.subr.bf16.mxu0 0
    %664 = vmatpush1.bf16.xpose.msra.mxu0 0
    %665 = vmatprep.subr.bf16.mxu0 0
    %666 = vmatpush1.bf16.xpose.msra.mxu0 0
    %667 = vmatprep.mubr.bf16.mxu0 0
    %668 = vmatmul.mubr.bf16.gmra.mrb[0].mxu0 %v630
    %v669 = vpop.f32.mrb[0].mxu0
    %v670 = vadd.f32 0.0, %v669
    %v671 = vpop.f32.mrb[0].mxu0
    %v672 = vpop.f32.mrb[0].mxu0
    %v673 = vpop.f32.mrb[0].mxu0
    %674 = vdwg.mxu0
    %v676 = vunpack.c.l.b16 %v619
    %v677 = vpack.c.b16 %v676, %v676
    %678 = vrot.lane.b32.xlu0 %v677, 120
    %v679 = vpop.permute.xlu0 %678
    %680 = vrot.lane.b32.xlu0 %v677, 88
    %v681 = vpop.permute.xlu0 %680
    %v683 = vsel %vm173, %v679, 0
    %v686 = vsel %vm173, %v681, 0
    %688 = vmatprep.subr.bf16.mxu0 0
    %689 = vmatpush1.bf16.xpose.msra.mxu0 %v686
    %690 = vmatprep.subr.bf16.mxu0 0
    %691 = vmatpush1.bf16.xpose.msra.mxu0 0
    %692 = vmatprep.subr.bf16.mxu0 0
    %693 = vmatpush1.bf16.xpose.msra.mxu0 0
    %694 = vmatprep.subr.bf16.mxu0 0
    %695 = vmatpush1.bf16.xpose.msra.mxu0 0
    %696 = vmatprep.subr.bf16.mxu0 0
    %697 = vmatpush1.bf16.xpose.msra.mxu0 0
    %698 = vmatprep.subr.bf16.mxu0 0
    %699 = vmatpush1.bf16.xpose.msra.mxu0 0
    %700 = vmatprep.subr.bf16.mxu0 0
    %701 = vmatpush1.bf16.xpose.msra.mxu0 0
    %702 = vmatprep.subr.bf16.mxu0 0
    %703 = vmatpush1.bf16.xpose.msra.mxu0 0
    %704 = vmatprep.subr.bf16.mxu0 0
    %705 = vmatpush1.bf16.xpose.msra.mxu0 0
    %706 = vmatprep.subr.bf16.mxu0 0
    %707 = vmatpush1.bf16.xpose.msra.mxu0 0
    %708 = vmatprep.subr.bf16.mxu0 0
    %709 = vmatpush1.bf16.xpose.msra.mxu0 0
    %710 = vmatprep.subr.bf16.mxu0 0
    %711 = vmatpush1.bf16.xpose.msra.mxu0 0
    %712 = vmatprep.subr.bf16.mxu0 0
    %713 = vmatpush1.bf16.xpose.msra.mxu0 0
    %714 = vmatprep.subr.bf16.mxu0 0
    %715 = vmatpush1.bf16.xpose.msra.mxu0 0
    %716 = vmatprep.subr.bf16.mxu0 0
    %717 = vmatpush1.bf16.xpose.msra.mxu0 0
    %718 = vmatprep.subr.bf16.mxu0 0
    %719 = vmatpush1.bf16.xpose.msra.mxu0 0
    %720 = vmatprep.mubr.bf16.mxu0 0
    %721 = vmatmul.mubr.bf16.gmra.mrb[0].mxu0 %v683
    %v722 = vpop.f32.mrb[0].mxu0
    %v723 = vadd.f32 0.0, %v722
    %v724 = vpop.f32.mrb[0].mxu0
    %v725 = vpop.f32.mrb[0].mxu0
    %v726 = vpop.f32.mrb[0].mxu0
    %727 = vdwg.mxu0
    %v729 = vunpack.c.l.b16 %v620
    %v730 = vpack.c.b16 %v729, %v729
    %731 = vrot.lane.b32.xlu0 %v730, 120
    %v732 = vpop.permute.xlu0 %731
    %733 = vrot.lane.b32.xlu0 %v730, 88
    %v734 = vpop.permute.xlu0 %733
    %v736 = vsel %vm173, %v732, 0
    %v739 = vsel %vm173, %v734, 0
    %741 = vmatprep.subr.bf16.mxu0 0
    %742 = vmatpush1.bf16.xpose.msra.mxu0 %v739
    %743 = vmatprep.subr.bf16.mxu0 0
    %744 = vmatpush1.bf16.xpose.msra.mxu0 0
    %745 = vmatprep.subr.bf16.mxu0 0
    %746 = vmatpush1.bf16.xpose.msra.mxu0 0
    %747 = vmatprep.subr.bf16.mxu0 0
    %748 = vmatpush1.bf16.xpose.msra.mxu0 0
    %749 = vmatprep.subr.bf16.mxu0 0
    %750 = vmatpush1.bf16.xpose.msra.mxu0 0
    %751 = vmatprep.subr.bf16.mxu0 0
    %752 = vmatpush1.bf16.xpose.msra.mxu0 0
    %753 = vmatprep.subr.bf16.mxu0 0
    %754 = vmatpush1.bf16.xpose.msra.mxu0 0
    %755 = vmatprep.subr.bf16.mxu0 0
    %756 = vmatpush1.bf16.xpose.msra.mxu0 0
    %757 = vmatprep.subr.bf16.mxu0 0
    %758 = vmatpush1.bf16.xpose.msra.mxu0 0
    %759 = vmatprep.subr.bf16.mxu0 0
    %760 = vmatpush1.bf16.xpose.msra.mxu0 0
    %761 = vmatprep.subr.bf16.mxu0 0
    %762 = vmatpush1.bf16.xpose.msra.mxu0 0
    %763 = vmatprep.subr.bf16.mxu0 0
    %764 = vmatpush1.bf16.xpose.msra.mxu0 0
    %765 = vmatprep.subr.bf16.mxu0 0
    %766 = vmatpush1.bf16.xpose.msra.mxu0 0
    %767 = vmatprep.subr.bf16.mxu0 0
    %768 = vmatpush1.bf16.xpose.msra.mxu0 0
    %769 = vmatprep.subr.bf16.mxu0 0
    %770 = vmatpush1.bf16.xpose.msra.mxu0 0
    %771 = vmatprep.subr.bf16.mxu0 0
    %772 = vmatpush1.bf16.xpose.msra.mxu0 0
    %773 = vmatprep.mubr.bf16.mxu0 0
    %774 = vmatmul.mubr.bf16.gmra.mrb[0].mxu0 %v736
    %v775 = vpop.f32.mrb[0].mxu0
    %v776 = vadd.f32 0.0, %v775
    %v777 = vpop.f32.mrb[0].mxu0
    %v778 = vpop.f32.mrb[0].mxu0
    %v779 = vpop.f32.mrb[0].mxu0
    %780 = vdwg.mxu0
    %v782 = vunpack.c.l.b16 %v621
    %v783 = vpack.c.b16 %v782, %v782
    %784 = vrot.lane.b32.xlu0 %v783, 120
    %v785 = vpop.permute.xlu0 %784
    %786 = vrot.lane.b32.xlu0 %v783, 88
    %v787 = vpop.permute.xlu0 %786
    %v789 = vsel %vm173, %v785, 0
    %v792 = vsel %vm173, %v787, 0
    %794 = vmatprep.subr.bf16.mxu0 0
    %795 = vmatpush1.bf16.xpose.msra.mxu0 %v792
    %796 = vmatprep.subr.bf16.mxu0 0
    %797 = vmatpush1.bf16.xpose.msra.mxu0 0
    %798 = vmatprep.subr.bf16.mxu0 0
    %799 = vmatpush1.bf16.xpose.msra.mxu0 0
    %800 = vmatprep.subr.bf16.mxu0 0
    %801 = vmatpush1.bf16.xpose.msra.mxu0 0
    %802 = vmatprep.subr.bf16.mxu0 0
    %803 = vmatpush1.bf16.xpose.msra.mxu0 0
    %804 = vmatprep.subr.bf16.mxu0 0
    %805 = vmatpush1.bf16.xpose.msra.mxu0 0
    %806 = vmatprep.subr.bf16.mxu0 0
    %807 = vmatpush1.bf16.xpose.msra.mxu0 0
    %808 = vmatprep.subr.bf16.mxu0 0
    %809 = vmatpush1.bf16.xpose.msra.mxu0 0
    %810 = vmatprep.subr.bf16.mxu0 0
    %811 = vmatpush1.bf16.xpose.msra.mxu0 0
    %812 = vmatprep.subr.bf16.mxu0 0
    %813 = vmatpush1.bf16.xpose.msra.mxu0 0
    %814 = vmatprep.subr.bf16.mxu0 0
    %815 = vmatpush1.bf16.xpose.msra.mxu0 0
    %816 = vmatprep.subr.bf16.mxu0 0
    %817 = vmatpush1.bf16.xpose.msra.mxu0 0
    %818 = vmatprep.subr.bf16.mxu0 0
    %819 = vmatpush1.bf16.xpose.msra.mxu0 0
    %820 = vmatprep.subr.bf16.mxu0 0
    %821 = vmatpush1.bf16.xpose.msra.mxu0 0
    %822 = vmatprep.subr.bf16.mxu0 0
    %823 = vmatpush1.bf16.xpose.msra.mxu0 0
    %824 = vmatprep.subr.bf16.mxu0 0
    %825 = vmatpush1.bf16.xpose.msra.mxu0 0
    %826 = vmatprep.mubr.bf16.mxu0 0
    %827 = vmatmul.mubr.bf16.gmra.mrb[0].mxu0 %v789
    %v828 = vpop.f32.mrb[0].mxu0
    %v829 = vadd.f32 0.0, %v828
    %v830 = vpop.f32.mrb[0].mxu0
    %v831 = vpop.f32.mrb[0].mxu0
    %v832 = vpop.f32.mrb[0].mxu0
    %833 = vdwg.mxu0
    %v834 = vsel %vm173, %v670, -inf
    %835 = vmax.xlane.f32.xlu0 %v834
    %v836 = vpop.xlane.xlu0 %835
    %v837 = vsel %vm173, %v723, -inf
    %838 = vmax.xlane.f32.xlu0 %v837
    %v839 = vpop.xlane.xlu0 %838
    %v840 = vsel %vm173, %v776, -inf
    %841 = vmax.xlane.f32.xlu0 %v840
    %v842 = vpop.xlane.xlu0 %841
    %v843 = vsel %vm173, %v829, -inf
    %844 = vmax.xlane.f32.xlu0 %v843
    %v845 = vpop.xlane.xlu0 %844
    %v846 = vsub.f32 %v670, %v836
    %v847 = vsub.f32 %v723, %v839
    %v848 = vsub.f32 %v776, %v842
    %v849 = vsub.f32 %v829, %v845
    %v850 = vmul.f32 %v846, 1.442695
    %v851 = vpow.pop %v850
    %v852 = vmul.f32 %v847, 1.442695
    %v853 = vpow.pop %v852
    %v854 = vmul.f32 %v848, 1.442695
    %v855 = vpow.pop %v854
    %v856 = vmul.f32 %v849, 1.442695
    %v857 = vpow.pop %v856
    %v858 = vsel %vm173, %v851, 0.0
    %859 = vadd.xlane.f32.xlu0 %v858
    %v860 = vpop.xlane.xlu0 %859
    %v861 = vsel %vm173, %v853, 0.0
    %862 = vadd.xlane.f32.xlu0 %v861
    %v863 = vpop.xlane.xlu0 %862
    %v864 = vsel %vm173, %v855, 0.0
    %865 = vadd.xlane.f32.xlu0 %v864
    %v866 = vpop.xlane.xlu0 %865
    %v867 = vsel %vm173, %v857, 0.0
    %868 = vadd.xlane.f32.xlu0 %v867
    %v869 = vpop.xlane.xlu0 %868
    %v870 = vrcp.pop %v860
    %v871 = vrcp.pop %v863
    %v872 = vrcp.pop %v866
    %v873 = vrcp.pop %v869
    %v874 = vpack.c.bf16 %v851, %v851
    %v875 = vpack.c.bf16 %v853, %v853
    %v876 = vpack.c.bf16 %v855, %v855
    %v877 = vpack.c.bf16 %v857, %v857
    %878 = vrot.lane.b32.xlu0 %v624, 56
    %v879 = vpop.permute.xlu0 %878
    %v881 = vsel %vm173, %v874, 0
    %v884 = vsel %vm422, %v879, 0
    %886 = vmatprep.subr.bf16.mxu0 0
    %887 = vmatpush1.bf16.msra.mxu0 %v884
    %888 = vmatprep.subr.bf16.mxu0 0
    %889 = vmatpush1.bf16.msra.mxu0 0
    %890 = vmatprep.subr.bf16.mxu0 0
    %891 = vmatpush1.bf16.msra.mxu0 0
    %892 = vmatprep.subr.bf16.mxu0 0
    %893 = vmatpush1.bf16.msra.mxu0 0
    %894 = vmatprep.subr.bf16.mxu0 0
    %895 = vmatpush1.bf16.msra.mxu0 0
    %896 = vmatprep.subr.bf16.mxu0 0
    %897 = vmatpush1.bf16.msra.mxu0 0
    %898 = vmatprep.subr.bf16.mxu0 0
    %899 = vmatpush1.bf16.msra.mxu0 0
    %900 = vmatprep.subr.bf16.mxu0 0
    %901 = vmatpush1.bf16.msra.mxu0 0
    %902 = vmatprep.subr.bf16.mxu0 0
    %903 = vmatpush1.bf16.msra.mxu0 0
    %904 = vmatprep.subr.bf16.mxu0 0
    %905 = vmatpush1.bf16.msra.mxu0 0
    %906 = vmatprep.subr.bf16.mxu0 0
    %907 = vmatpush1.bf16.msra.mxu0 0
    %908 = vmatprep.subr.bf16.mxu0 0
    %909 = vmatpush1.bf16.msra.mxu0 0
    %910 = vmatprep.subr.bf16.mxu0 0
    %911 = vmatpush1.bf16.msra.mxu0 0
    %912 = vmatprep.subr.bf16.mxu0 0
    %913 = vmatpush1.bf16.msra.mxu0 0
    %914 = vmatprep.subr.bf16.mxu0 0
    %915 = vmatpush1.bf16.msra.mxu0 0
    %916 = vmatprep.subr.bf16.mxu0 0
    %917 = vmatpush1.bf16.msra.mxu0 0
    %918 = vmatprep.mubr.bf16.mxu0 0
    %919 = vmatmul.mubr.bf16.gmra.mrb[0].mxu0 %v881
    %v920 = vpop.f32.mrb[0].mxu0
    %v921 = vadd.f32 0.0, %v920
    %v922 = vpop.f32.mrb[0].mxu0
    %v923 = vpop.f32.mrb[0].mxu0
    %v924 = vpop.f32.mrb[0].mxu0
    %925 = vdwg.mxu0
    %926 = vrot.lane.b32.xlu0 %v677, 56
    %v927 = vpop.permute.xlu0 %926
    %v929 = vsel %vm173, %v875, 0
    %v932 = vsel %vm422, %v927, 0
    %934 = vmatprep.subr.bf16.mxu0 0
    %935 = vmatpush1.bf16.msra.mxu0 %v932
    %936 = vmatprep.subr.bf16.mxu0 0
    %937 = vmatpush1.bf16.msra.mxu0 0
    %938 = vmatprep.subr.bf16.mxu0 0
    %939 = vmatpush1.bf16.msra.mxu0 0
    %940 = vmatprep.subr.bf16.mxu0 0
    %941 = vmatpush1.bf16.msra.mxu0 0
    %942 = vmatprep.subr.bf16.mxu0 0
    %943 = vmatpush1.bf16.msra.mxu0 0
    %944 = vmatprep.subr.bf16.mxu0 0
    %945 = vmatpush1.bf16.msra.mxu0 0
    %946 = vmatprep.subr.bf16.mxu0 0
    %947 = vmatpush1.bf16.msra.mxu0 0
    %948 = vmatprep.subr.bf16.mxu0 0
    %949 = vmatpush1.bf16.msra.mxu0 0
    %950 = vmatprep.subr.bf16.mxu0 0
    %951 = vmatpush1.bf16.msra.mxu0 0
    %952 = vmatprep.subr.bf16.mxu0 0
    %953 = vmatpush1.bf16.msra.mxu0 0
    %954 = vmatprep.subr.bf16.mxu0 0
    %955 = vmatpush1.bf16.msra.mxu0 0
    %956 = vmatprep.subr.bf16.mxu0 0
    %957 = vmatpush1.bf16.msra.mxu0 0
    %958 = vmatprep.subr.bf16.mxu0 0
    %959 = vmatpush1.bf16.msra.mxu0 0
    %960 = vmatprep.subr.bf16.mxu0 0
    %961 = vmatpush1.bf16.msra.mxu0 0
    %962 = vmatprep.subr.bf16.mxu0 0
    %963 = vmatpush1.bf16.msra.mxu0 0
    %964 = vmatprep.subr.bf16.mxu0 0
    %965 = vmatpush1.bf16.msra.mxu0 0
    %966 = vmatprep.mubr.bf16.mxu0 0
    %967 = vmatmul.mubr.bf16.gmra.mrb[0].mxu0 %v929
    %v968 = vpop.f32.mrb[0].mxu0
    %v969 = vadd.f32 0.0, %v968
    %v970 = vpop.f32.mrb[0].mxu0
    %v971 = vpop.f32.mrb[0].mxu0
    %v972 = vpop.f32.mrb[0].mxu0
    %973 = vdwg.mxu0
    %974 = vrot.lane.b32.xlu0 %v730, 56
    %v975 = vpop.permute.xlu0 %974
    %v977 = vsel %vm173, %v876, 0
    %v980 = vsel %vm422, %v975, 0
    %982 = vmatprep.subr.bf16.mxu0 0
    %983 = vmatpush1.bf16.msra.mxu0 %v980
    %984 = vmatprep.subr.bf16.mxu0 0
    %985 = vmatpush1.bf16.msra.mxu0 0
    %986 = vmatprep.subr.bf16.mxu0 0
    %987 = vmatpush1.bf16.msra.mxu0 0
    %988 = vmatprep.subr.bf16.mxu0 0
    %989 = vmatpush1.bf16.msra.mxu0 0
    %990 = vmatprep.subr.bf16.mxu0 0
    %991 = vmatpush1.bf16.msra.mxu0 0
    %992 = vmatprep.subr.bf16.mxu0 0
    %993 = vmatpush1.bf16.msra.mxu0 0
    %994 = vmatprep.subr.bf16.mxu0 0
    %995 = vmatpush1.bf16.msra.mxu0 0
    %996 = vmatprep.subr.bf16.mxu0 0
    %997 = vmatpush1.bf16.msra.mxu0 0
    %998 = vmatprep.subr.bf16.mxu0 0
    %999 = vmatpush1.bf16.msra.mxu0 0
    %1000 = vmatprep.subr.bf16.mxu0 0
    %1001 = vmatpush1.bf16.msra.mxu0 0
    %1002 = vmatprep.subr.bf16.mxu0 0
    %1003 = vmatpush1.bf16.msra.mxu0 0
    %1004 = vmatprep.subr.bf16.mxu0 0
    %1005 = vmatpush1.bf16.msra.mxu0 0
    %1006 = vmatprep.subr.bf16.mxu0 0
    %1007 = vmatpush1.bf16.msra.mxu0 0
    %1008 = vmatprep.subr.bf16.mxu0 0
    %1009 = vmatpush1.bf16.msra.mxu0 0
    %1010 = vmatprep.subr.bf16.mxu0 0
    %1011 = vmatpush1.bf16.msra.mxu0 0
    %1012 = vmatprep.subr.bf16.mxu0 0
    %1013 = vmatpush1.bf16.msra.mxu0 0
    %1014 = vmatprep.mubr.bf16.mxu0 0
    %1015 = vmatmul.mubr.bf16.gmra.mrb[0].mxu0 %v977
    %v1016 = vpop.f32.mrb[0].mxu0
    %v1017 = vadd.f32 0.0, %v1016
    %v1018 = vpop.f32.mrb[0].mxu0
    %v1019 = vpop.f32.mrb[0].mxu0
    %v1020 = vpop.f32.mrb[0].mxu0
    %1021 = vdwg.mxu0
    %1022 = vrot.lane.b32.xlu0 %v783, 56
    %v1023 = vpop.permute.xlu0 %1022
    %v1025 = vsel %vm173, %v877, 0
    %v1028 = vsel %vm422, %v1023, 0
    %1030 = vmatprep.subr.bf16.mxu0 0
    %1031 = vmatpush1.bf16.msra.mxu0 %v1028
    %1032 = vmatprep.subr.bf16.mxu0 0
    %1033 = vmatpush1.bf16.msra.mxu0 0
    %1034 = vmatprep.subr.bf16.mxu0 0
    %1035 = vmatpush1.bf16.msra.mxu0 0
    %1036 = vmatprep.subr.bf16.mxu0 0
    %1037 = vmatpush1.bf16.msra.mxu0 0
    %1038 = vmatprep.subr.bf16.mxu0 0
    %1039 = vmatpush1.bf16.msra.mxu0 0
    %1040 = vmatprep.subr.bf16.mxu0 0
    %1041 = vmatpush1.bf16.msra.mxu0 0
    %1042 = vmatprep.subr.bf16.mxu0 0
    %1043 = vmatpush1.bf16.msra.mxu0 0
    %1044 = vmatprep.subr.bf16.mxu0 0
    %1045 = vmatpush1.bf16.msra.mxu0 0
    %1046 = vmatprep.subr.bf16.mxu0 0
    %1047 = vmatpush1.bf16.msra.mxu0 0
    %1048 = vmatprep.subr.bf16.mxu0 0
    %1049 = vmatpush1.bf16.msra.mxu0 0
    %1050 = vmatprep.subr.bf16.mxu0 0
    %1051 = vmatpush1.bf16.msra.mxu0 0
    %1052 = vmatprep.subr.bf16.mxu0 0
    %1053 = vmatpush1.bf16.msra.mxu0 0
    %1054 = vmatprep.subr.bf16.mxu0 0
    %1055 = vmatpush1.bf16.msra.mxu0 0
    %1056 = vmatprep.subr.bf16.mxu0 0
    %1057 = vmatpush1.bf16.msra.mxu0 0
    %1058 = vmatprep.subr.bf16.mxu0 0
    %1059 = vmatpush1.bf16.msra.mxu0 0
    %1060 = vmatprep.subr.bf16.mxu0 0
    %1061 = vmatpush1.bf16.msra.mxu0 0
    %1062 = vmatprep.mubr.bf16.mxu0 0
    %1063 = vmatmul.mubr.bf16.gmra.mrb[0].mxu0 %v1025
    %v1064 = vpop.f32.mrb[0].mxu0
    %v1065 = vadd.f32 0.0, %v1064
    %v1066 = vpop.f32.mrb[0].mxu0
    %v1067 = vpop.f32.mrb[0].mxu0
    %v1068 = vpop.f32.mrb[0].mxu0
    %1069 = vdwg.mxu0
    %v1070 = vmul.f32 %v921, %v870
    %v1071 = vmul.f32 %v969, %v871
    %v1072 = vmul.f32 %v1017, %v872
    %v1073 = vmul.f32 %v1065, %v873
    %v1074 = vpack.c.bf16 %v1070, %v1070
    %v1075 = vpack.c.bf16 %v1071, %v1071
    %v1076 = vpack.c.bf16 %v1072, %v1072
    %v1077 = vpack.c.bf16 %v1073, %v1073
    %v1078 = vld [vmem:[#allocation2] sm:$0xf]
    %v1079 = vld [vmem:[#allocation2 + $0x4] sm:$0xf]
    %v1080 = vld [vmem:[#allocation2 + $0x8] sm:$0xf]
    %v1081 = vld [vmem:[#allocation2 + $0xc] sm:$0xf]
    %v1083 = vunpack.c.l.b16 %v1078
    %v1084 = vpack.c.b16 %v1083, %v1083
    %1085 = vrot.lane.b32.xlu0 %v1084, 112
    %v1086 = vpop.permute.xlu0 %1085
    %1087 = vrot.lane.b32.xlu0 %v1084, 80
    %v1088 = vpop.permute.xlu0 %1087
    %v1090 = vsel %vm173, %v1086, 0
    %v1093 = vsel %vm173, %v1088, 0
    %1095 = vmatprep.subr.bf16.mxu0 0
    %1096 = vmatpush1.bf16.xpose.msra.mxu0 %v1093
    %1097 = vmatprep.subr.bf16.mxu0 0
    %1098 = vmatpush1.bf16.xpose.msra.mxu0 0
    %1099 = vmatprep.subr.bf16.mxu0 0
    %1100 = vmatpush1.bf16.xpose.msra.mxu0 0
    %1101 = vmatprep.subr.bf16.mxu0 0
    %1102 = vmatpush1.bf16.xpose.msra.mxu0 0
    %1103 = vmatprep.subr.bf16.mxu0 0
    %1104 = vmatpush1.bf16.xpose.msra.mxu0 0
    %1105 = vmatprep.subr.bf16.mxu0 0
    %1106 = vmatpush1.bf16.xpose.msra.mxu0 0
    %1107 = vmatprep.subr.bf16.mxu0 0
    %1108 = vmatpush1.bf16.xpose.msra.mxu0 0
    %1109 = vmatprep.subr.bf16.mxu0 0
    %1110 = vmatpush1.bf16.xpose.msra.mxu0 0
    %1111 = vmatprep.subr.bf16.mxu0 0
    %1112 = vmatpush1.bf16.xpose.msra.mxu0 0
    %1113 = vmatprep.subr.bf16.mxu0 0
    %1114 = vmatpush1.bf16.xpose.msra.mxu0 0
    %1115 = vmatprep.subr.bf16.mxu0 0
    %1116 = vmatpush1.bf16.xpose.msra.mxu0 0
    %1117 = vmatprep.subr.bf16.mxu0 0
    %1118 = vmatpush1.bf16.xpose.msra.mxu0 0
    %1119 = vmatprep.subr.bf16.mxu0 0
    %1120 = vmatpush1.bf16.xpose.msra.mxu0 0
    %1121 = vmatprep.subr.bf16.mxu0 0
    %1122 = vmatpush1.bf16.xpose.msra.mxu0 0
    %1123 = vmatprep.subr.bf16.mxu0 0
    %1124 = vmatpush1.bf16.xpose.msra.mxu0 0
    %1125 = vmatprep.subr.bf16.mxu0 0
    %1126 = vmatpush1.bf16.xpose.msra.mxu0 0
    %1127 = vmatprep.mubr.bf16.mxu0 0
    %1128 = vmatmul.mubr.bf16.gmra.mrb[0].mxu0 %v1090
    %v1129 = vpop.f32.mrb[0].mxu0
    %v1130 = vadd.f32 0.0, %v1129
    %v1131 = vpop.f32.mrb[0].mxu0
    %v1132 = vpop.f32.mrb[0].mxu0
    %v1133 = vpop.f32.mrb[0].mxu0
    %1134 = vdwg.mxu0
    %v1136 = vunpack.c.l.b16 %v1079
    %v1137 = vpack.c.b16 %v1136, %v1136
    %1138 = vrot.lane.b32.xlu0 %v1137, 112
    %v1139 = vpop.permute.xlu0 %1138
    %1140 = vrot.lane.b32.xlu0 %v1137, 80
    %v1141 = vpop.permute.xlu0 %1140
    %v1143 = vsel %vm173, %v1139, 0
    %v1146 = vsel %vm173, %v1141, 0
    %1148 = vmatprep.subr.bf16.mxu0 0
    %1149 = vmatpush1.bf16.xpose.msra.mxu0 %v1146
    %1150 = vmatprep.subr.bf16.mxu0 0
    %1151 = vmatpush1.bf16.xpose.msra.mxu0 0
    %1152 = vmatprep.subr.bf16.mxu0 0
    %1153 = vmatpush1.bf16.xpose.msra.mxu0 0
    %1154 = vmatprep.subr.bf16.mxu0 0
    %1155 = vmatpush1.bf16.xpose.msra.mxu0 0
    %1156 = vmatprep.subr.bf16.mxu0 0
    %1157 = vmatpush1.bf16.xpose.msra.mxu0 0
    %1158 = vmatprep.subr.bf16.mxu0 0
    %1159 = vmatpush1.bf16.xpose.msra.mxu0 0
    %1160 = vmatprep.subr.bf16.mxu0 0
    %1161 = vmatpush1.bf16.xpose.msra.mxu0 0
    %1162 = vmatprep.subr.bf16.mxu0 0
    %1163 = vmatpush1.bf16.xpose.msra.mxu0 0
    %1164 = vmatprep.subr.bf16.mxu0 0
    %1165 = vmatpush1.bf16.xpose.msra.mxu0 0
    %1166 = vmatprep.subr.bf16.mxu0 0
    %1167 = vmatpush1.bf16.xpose.msra.mxu0 0
    %1168 = vmatprep.subr.bf16.mxu0 0
    %1169 = vmatpush1.bf16.xpose.msra.mxu0 0
    %1170 = vmatprep.subr.bf16.mxu0 0
    %1171 = vmatpush1.bf16.xpose.msra.mxu0 0
    %1172 = vmatprep.subr.bf16.mxu0 0
    %1173 = vmatpush1.bf16.xpose.msra.mxu0 0
    %1174 = vmatprep.subr.bf16.mxu0 0
    %1175 = vmatpush1.bf16.xpose.msra.mxu0 0
    %1176 = vmatprep.subr.bf16.mxu0 0
    %1177 = vmatpush1.bf16.xpose.msra.mxu0 0
    %1178 = vmatprep.subr.bf16.mxu0 0
    %1179 = vmatpush1.bf16.xpose.msra.mxu0 0
    %1180 = vmatprep.mubr.bf16.mxu0 0
    %1181 = vmatmul.mubr.bf16.gmra.mrb[0].mxu0 %v1143
    %v1182 = vpop.f32.mrb[0].mxu0
    %v1183 = vadd.f32 0.0, %v1182
    %v1184 = vpop.f32.mrb[0].mxu0
    %v1185 = vpop.f32.mrb[0].mxu0
    %v1186 = vpop.f32.mrb[0].mxu0
    %1187 = vdwg.mxu0
    %v1189 = vunpack.c.l.b16 %v1080
    %v1190 = vpack.c.b16 %v1189, %v1189
    %1191 = vrot.lane.b32.xlu0 %v1190, 112
    %v1192 = vpop.permute.xlu0 %1191
    %1193 = vrot.lane.b32.xlu0 %v1190, 80
    %v1194 = vpop.permute.xlu0 %1193
    %v1196 = vsel %vm173, %v1192, 0
    %v1199 = vsel %vm173, %v1194, 0
    %1201 = vmatprep.subr.bf16.mxu0 0
    %1202 = vmatpush1.bf16.xpose.msra.mxu0 %v1199
    %1203 = vmatprep.subr.bf16.mxu0 0
    %1204 = vmatpush1.bf16.xpose.msra.mxu0 0
    %1205 = vmatprep.subr.bf16.mxu0 0
    %1206 = vmatpush1.bf16.xpose.msra.mxu0 0
    %1207 = vmatprep.subr.bf16.mxu0 0
    %1208 = vmatpush1.bf16.xpose.msra.mxu0 0
    %1209 = vmatprep.subr.bf16.mxu0 0
    %1210 = vmatpush1.bf16.xpose.msra.mxu0 0
    %1211 = vmatprep.subr.bf16.mxu0 0
    %1212 = vmatpush1.bf16.xpose.msra.mxu0 0
    %1213 = vmatprep.subr.bf16.mxu0 0
    %1214 = vmatpush1.bf16.xpose.msra.mxu0 0
    %1215 = vmatprep.subr.bf16.mxu0 0
    %1216 = vmatpush1.bf16.xpose.msra.mxu0 0
    %1217 = vmatprep.subr.bf16.mxu0 0
    %1218 = vmatpush1.bf16.xpose.msra.mxu0 0
    %1219 = vmatprep.subr.bf16.mxu0 0
    %1220 = vmatpush1.bf16.xpose.msra.mxu0 0
    %1221 = vmatprep.subr.bf16.mxu0 0
    %1222 = vmatpush1.bf16.xpose.msra.mxu0 0
    %1223 = vmatprep.subr.bf16.mxu0 0
    %1224 = vmatpush1.bf16.xpose.msra.mxu0 0
    %1225 = vmatprep.subr.bf16.mxu0 0
    %1226 = vmatpush1.bf16.xpose.msra.mxu0 0
    %1227 = vmatprep.subr.bf16.mxu0 0
    %1228 = vmatpush1.bf16.xpose.msra.mxu0 0
    %1229 = vmatprep.subr.bf16.mxu0 0
    %1230 = vmatpush1.bf16.xpose.msra.mxu0 0
    %1231 = vmatprep.subr.bf16.mxu0 0
    %1232 = vmatpush1.bf16.xpose.msra.mxu0 0
    %1233 = vmatprep.mubr.bf16.mxu0 0
    %1234 = vmatmul.mubr.bf16.gmra.mrb[0].mxu0 %v1196
    %v1235 = vpop.f32.mrb[0].mxu0
    %v1236 = vadd.f32 0.0, %v1235
    %v1237 = vpop.f32.mrb[0].mxu0
    %v1238 = vpop.f32.mrb[0].mxu0
    %v1239 = vpop.f32.mrb[0].mxu0
    %1240 = vdwg.mxu0
    %v1242 = vunpack.c.l.b16 %v1081
    %v1243 = vpack.c.b16 %v1242, %v1242
    %1244 = vrot.lane.b32.xlu0 %v1243, 112
    %v1245 = vpop.permute.xlu0 %1244
    %1246 = vrot.lane.b32.xlu0 %v1243, 80
    %v1247 = vpop.permute.xlu0 %1246
    %v1249 = vsel %vm173, %v1245, 0
    %v1252 = vsel %vm173, %v1247, 0
    %1254 = vmatprep.subr.bf16.mxu0 0
    %1255 = vmatpush1.bf16.xpose.msra.mxu0 %v1252
    %1256 = vmatprep.subr.bf16.mxu0 0
    %1257 = vmatpush1.bf16.xpose.msra.mxu0 0
    %1258 = vmatprep.subr.bf16.mxu0 0
    %1259 = vmatpush1.bf16.xpose.msra.mxu0 0
    %1260 = vmatprep.subr.bf16.mxu0 0
    %1261 = vmatpush1.bf16.xpose.msra.mxu0 0
    %1262 = vmatprep.subr.bf16.mxu0 0
    %1263 = vmatpush1.bf16.xpose.msra.mxu0 0
    %1264 = vmatprep.subr.bf16.mxu0 0
    %1265 = vmatpush1.bf16.xpose.msra.mxu0 0
    %1266 = vmatprep.subr.bf16.mxu0 0
    %1267 = vmatpush1.bf16.xpose.msra.mxu0 0
    %1268 = vmatprep.subr.bf16.mxu0 0
    %1269 = vmatpush1.bf16.xpose.msra.mxu0 0
    %1270 = vmatprep.subr.bf16.mxu0 0
    %1271 = vmatpush1.bf16.xpose.msra.mxu0 0
    %1272 = vmatprep.subr.bf16.mxu0 0
    %1273 = vmatpush1.bf16.xpose.msra.mxu0 0
    %1274 = vmatprep.subr.bf16.mxu0 0
    %1275 = vmatpush1.bf16.xpose.msra.mxu0 0
    %1276 = vmatprep.subr.bf16.mxu0 0
    %1277 = vmatpush1.bf16.xpose.msra.mxu0 0
    %1278 = vmatprep.subr.bf16.mxu0 0
    %1279 = vmatpush1.bf16.xpose.msra.mxu0 0
    %1280 = vmatprep.subr.bf16.mxu0 0
    %1281 = vmatpush1.bf16.xpose.msra.mxu0 0
    %1282 = vmatprep.subr.bf16.mxu0 0
    %1283 = vmatpush1.bf16.xpose.msra.mxu0 0
    %1284 = vmatprep.subr.bf16.mxu0 0
    %1285 = vmatpush1.bf16.xpose.msra.mxu0 0
    %1286 = vmatprep.mubr.bf16.mxu0 0
    %1287 = vmatmul.mubr.bf16.gmra.mrb[0].mxu0 %v1249
    %v1288 = vpop.f32.mrb[0].mxu0
    %v1289 = vadd.f32 0.0, %v1288
    %v1290 = vpop.f32.mrb[0].mxu0
    %v1291 = vpop.f32.mrb[0].mxu0
    %v1292 = vpop.f32.mrb[0].mxu0
    %1293 = vdwg.mxu0
    %v1294 = vsel %vm173, %v1130, -inf
    %1295 = vmax.xlane.f32.xlu0 %v1294
    %v1296 = vpop.xlane.xlu0 %1295
    %v1297 = vsel %vm173, %v1183, -inf
    %1298 = vmax.xlane.f32.xlu0 %v1297
    %v1299 = vpop.xlane.xlu0 %1298
    %v1300 = vsel %vm173, %v1236, -inf
    %1301 = vmax.xlane.f32.xlu0 %v1300
    %v1302 = vpop.xlane.xlu0 %1301
    %v1303 = vsel %vm173, %v1289, -inf
    %1304 = vmax.xlane.f32.xlu0 %v1303
    %v1305 = vpop.xlane.xlu0 %1304
    %v1306 = vsub.f32 %v1130, %v1296
    %v1307 = vsub.f32 %v1183, %v1299
    %v1308 = vsub.f32 %v1236, %v1302
    %v1309 = vsub.f32 %v1289, %v1305
    %v1310 = vmul.f32 %v1306, 1.442695
    %v1311 = vpow.pop %v1310
    %v1312 = vmul.f32 %v1307, 1.442695
    %v1313 = vpow.pop %v1312
    %v1314 = vmul.f32 %v1308, 1.442695
    %v1315 = vpow.pop %v1314
    %v1316 = vmul.f32 %v1309, 1.442695
    %v1317 = vpow.pop %v1316
    %v1318 = vsel %vm173, %v1311, 0.0
    %1319 = vadd.xlane.f32.xlu0 %v1318
    %v1320 = vpop.xlane.xlu0 %1319
    %v1321 = vsel %vm173, %v1313, 0.0
    %1322 = vadd.xlane.f32.xlu0 %v1321
    %v1323 = vpop.xlane.xlu0 %1322
    %v1324 = vsel %vm173, %v1315, 0.0
    %1325 = vadd.xlane.f32.xlu0 %v1324
    %v1326 = vpop.xlane.xlu0 %1325
    %v1327 = vsel %vm173, %v1317, 0.0
    %1328 = vadd.xlane.f32.xlu0 %v1327
    %v1329 = vpop.xlane.xlu0 %1328
    %v1330 = vrcp.pop %v1320
    %v1331 = vrcp.pop %v1323
    %v1332 = vrcp.pop %v1326
    %v1333 = vrcp.pop %v1329
    %v1334 = vpack.c.bf16 %v1311, %v1311
    %v1335 = vpack.c.bf16 %v1313, %v1313
    %v1336 = vpack.c.bf16 %v1315, %v1315
    %v1337 = vpack.c.bf16 %v1317, %v1317
    %1338 = vrot.lane.b32.xlu0 %v1084, 48
    %v1339 = vpop.permute.xlu0 %1338
    %v1341 = vsel %vm173, %v1334, 0
    %v1344 = vsel %vm422, %v1339, 0
    %1346 = vmatprep.subr.bf16.mxu0 0
    %1347 = vmatpush1.bf16.msra.mxu0 %v1344
    %1348 = vmatprep.subr.bf16.mxu0 0
    %1349 = vmatpush1.bf16.msra.mxu0 0
    %1350 = vmatprep.subr.bf16.mxu0 0
    %1351 = vmatpush1.bf16.msra.mxu0 0
    %1352 = vmatprep.subr.bf16.mxu0 0
    %1353 = vmatpush1.bf16.msra.mxu0 0
    %1354 = vmatprep.subr.bf16.mxu0 0
    %1355 = vmatpush1.bf16.msra.mxu0 0
    %1356 = vmatprep.subr.bf16.mxu0 0
    %1357 = vmatpush1.bf16.msra.mxu0 0
    %1358 = vmatprep.subr.bf16.mxu0 0
    %1359 = vmatpush1.bf16.msra.mxu0 0
    %1360 = vmatprep.subr.bf16.mxu0 0
    %1361 = vmatpush1.bf16.msra.mxu0 0
    %1362 = vmatprep.subr.bf16.mxu0 0
    %1363 = vmatpush1.bf16.msra.mxu0 0
    %1364 = vmatprep.subr.bf16.mxu0 0
    %1365 = vmatpush1.bf16.msra.mxu0 0
    %1366 = vmatprep.subr.bf16.mxu0 0
    %1367 = vmatpush1.bf16.msra.mxu0 0
    %1368 = vmatprep.subr.bf16.mxu0 0
    %1369 = vmatpush1.bf16.msra.mxu0 0
    %1370 = vmatprep.subr.bf16.mxu0 0
    %1371 = vmatpush1.bf16.msra.mxu0 0
    %1372 = vmatprep.subr.bf16.mxu0 0
    %1373 = vmatpush1.bf16.msra.mxu0 0
    %1374 = vmatprep.subr.bf16.mxu0 0
    %1375 = vmatpush1.bf16.msra.mxu0 0
    %1376 = vmatprep.subr.bf16.mxu0 0
    %1377 = vmatpush1.bf16.msra.mxu0 0
    %1378 = vmatprep.mubr.bf16.mxu0 0
    %1379 = vmatmul.mubr.bf16.gmra.mrb[0].mxu0 %v1341
    %v1380 = vpop.f32.mrb[0].mxu0
    %v1381 = vadd.f32 0.0, %v1380
    %v1382 = vpop.f32.mrb[0].mxu0
    %v1383 = vpop.f32.mrb[0].mxu0
    %v1384 = vpop.f32.mrb[0].mxu0
    %1385 = vdwg.mxu0
    %1386 = vrot.lane.b32.xlu0 %v1137, 48
    %v1387 = vpop.permute.xlu0 %1386
    %v1389 = vsel %vm173, %v1335, 0
    %v1392 = vsel %vm422, %v1387, 0
    %1394 = vmatprep.subr.bf16.mxu0 0
    %1395 = vmatpush1.bf16.msra.mxu0 %v1392
    %1396 = vmatprep.subr.bf16.mxu0 0
    %1397 = vmatpush1.bf16.msra.mxu0 0
    %1398 = vmatprep.subr.bf16.mxu0 0
    %1399 = vmatpush1.bf16.msra.mxu0 0
    %1400 = vmatprep.subr.bf16.mxu0 0
    %1401 = vmatpush1.bf16.msra.mxu0 0
    %1402 = vmatprep.subr.bf16.mxu0 0
    %1403 = vmatpush1.bf16.msra.mxu0 0
    %1404 = vmatprep.subr.bf16.mxu0 0
    %1405 = vmatpush1.bf16.msra.mxu0 0
    %1406 = vmatprep.subr.bf16.mxu0 0
    %1407 = vmatpush1.bf16.msra.mxu0 0
    %1408 = vmatprep.subr.bf16.mxu0 0
    %1409 = vmatpush1.bf16.msra.mxu0 0
    %1410 = vmatprep.subr.bf16.mxu0 0
    %1411 = vmatpush1.bf16.msra.mxu0 0
    %1412 = vmatprep.subr.bf16.mxu0 0
    %1413 = vmatpush1.bf16.msra.mxu0 0
    %1414 = vmatprep.subr.bf16.mxu0 0
    %1415 = vmatpush1.bf16.msra.mxu0 0
    %1416 = vmatprep.subr.bf16.mxu0 0
    %1417 = vmatpush1.bf16.msra.mxu0 0
    %1418 = vmatprep.subr.bf16.mxu0 0
    %1419 = vmatpush1.bf16.msra.mxu0 0
    %1420 = vmatprep.subr.bf16.mxu0 0
    %1421 = vmatpush1.bf16.msra.mxu0 0
    %1422 = vmatprep.subr.bf16.mxu0 0
    %1423 = vmatpush1.bf16.msra.mxu0 0
    %1424 = vmatprep.subr.bf16.mxu0 0
    %1425 = vmatpush1.bf16.msra.mxu0 0
    %1426 = vmatprep.mubr.bf16.mxu0 0
    %1427 = vmatmul.mubr.bf16.gmra.mrb[0].mxu0 %v1389
    %v1428 = vpop.f32.mrb[0].mxu0
    %v1429 = vadd.f32 0.0, %v1428
    %v1430 = vpop.f32.mrb[0].mxu0
    %v1431 = vpop.f32.mrb[0].mxu0
    %v1432 = vpop.f32.mrb[0].mxu0
    %1433 = vdwg.mxu0
    %1434 = vrot.lane.b32.xlu0 %v1190, 48
    %v1435 = vpop.permute.xlu0 %1434
    %v1437 = vsel %vm173, %v1336, 0
    %v1440 = vsel %vm422, %v1435, 0
    %1442 = vmatprep.subr.bf16.mxu0 0
    %1443 = vmatpush1.bf16.msra.mxu0 %v1440
    %1444 = vmatprep.subr.bf16.mxu0 0
    %1445 = vmatpush1.bf16.msra.mxu0 0
    %1446 = vmatprep.subr.bf16.mxu0 0
    %1447 = vmatpush1.bf16.msra.mxu0 0
    %1448 = vmatprep.subr.bf16.mxu0 0
    %1449 = vmatpush1.bf16.msra.mxu0 0
    %1450 = vmatprep.subr.bf16.mxu0 0
    %1451 = vmatpush1.bf16.msra.mxu0 0
    %1452 = vmatprep.subr.bf16.mxu0 0
    %1453 = vmatpush1.bf16.msra.mxu0 0
    %1454 = vmatprep.subr.bf16.mxu0 0
    %1455 = vmatpush1.bf16.msra.mxu0 0
    %1456 = vmatprep.subr.bf16.mxu0 0
    %1457 = vmatpush1.bf16.msra.mxu0 0
    %1458 = vmatprep.subr.bf16.mxu0 0
    %1459 = vmatpush1.bf16.msra.mxu0 0
    %1460 = vmatprep.subr.bf16.mxu0 0
    %1461 = vmatpush1.bf16.msra.mxu0 0
    %1462 = vmatprep.subr.bf16.mxu0 0
    %1463 = vmatpush1.bf16.msra.mxu0 0
    %1464 = vmatprep.subr.bf16.mxu0 0
    %1465 = vmatpush1.bf16.msra.mxu0 0
    %1466 = vmatprep.subr.bf16.mxu0 0
    %1467 = vmatpush1.bf16.msra.mxu0 0
    %1468 = vmatprep.subr.bf16.mxu0 0
    %1469 = vmatpush1.bf16.msra.mxu0 0
    %1470 = vmatprep.subr.bf16.mxu0 0
    %1471 = vmatpush1.bf16.msra.mxu0 0
    %1472 = vmatprep.subr.bf16.mxu0 0
    %1473 = vmatpush1.bf16.msra.mxu0 0
    %1474 = vmatprep.mubr.bf16.mxu0 0
    %1475 = vmatmul.mubr.bf16.gmra.mrb[0].mxu0 %v1437
    %v1476 = vpop.f32.mrb[0].mxu0
    %v1477 = vadd.f32 0.0, %v1476
    %v1478 = vpop.f32.mrb[0].mxu0
    %v1479 = vpop.f32.mrb[0].mxu0
    %v1480 = vpop.f32.mrb[0].mxu0
    %1481 = vdwg.mxu0
    %1482 = vrot.lane.b32.xlu0 %v1243, 48
    %v1483 = vpop.permute.xlu0 %1482
    %v1485 = vsel %vm173, %v1337, 0
    %v1488 = vsel %vm422, %v1483, 0
    %1490 = vmatprep.subr.bf16.mxu0 0
    %1491 = vmatpush1.bf16.msra.mxu0 %v1488
    %1492 = vmatprep.subr.bf16.mxu0 0
    %1493 = vmatpush1.bf16.msra.mxu0 0
    %1494 = vmatprep.subr.bf16.mxu0 0
    %1495 = vmatpush1.bf16.msra.mxu0 0
    %1496 = vmatprep.subr.bf16.mxu0 0
    %1497 = vmatpush1.bf16.msra.mxu0 0
    %1498 = vmatprep.subr.bf16.mxu0 0
    %1499 = vmatpush1.bf16.msra.mxu0 0
    %1500 = vmatprep.subr.bf16.mxu0 0
    %1501 = vmatpush1.bf16.msra.mxu0 0
    %1502 = vmatprep.subr.bf16.mxu0 0
    %1503 = vmatpush1.bf16.msra.mxu0 0
    %1504 = vmatprep.subr.bf16.mxu0 0
    %1505 = vmatpush1.bf16.msra.mxu0 0
    %1506 = vmatprep.subr.bf16.mxu0 0
    %1507 = vmatpush1.bf16.msra.mxu0 0
    %1508 = vmatprep.subr.bf16.mxu0 0
    %1509 = vmatpush1.bf16.msra.mxu0 0
    %1510 = vmatprep.subr.bf16.mxu0 0
    %1511 = vmatpush1.bf16.msra.mxu0 0
    %1512 = vmatprep.subr.bf16.mxu0 0
    %1513 = vmatpush1.bf16.msra.mxu0 0
    %1514 = vmatprep.subr.bf16.mxu0 0
    %1515 = vmatpush1.bf16.msra.mxu0 0
    %1516 = vmatprep.subr.bf16.mxu0 0
    %1517 = vmatpush1.bf16.msra.mxu0 0
    %1518 = vmatprep.subr.bf16.mxu0 0
    %1519 = vmatpush1.bf16.msra.mxu0 0
    %1520 = vmatprep.subr.bf16.mxu0 0
    %1521 = vmatpush1.bf16.msra.mxu0 0
    %1522 = vmatprep.mubr.bf16.mxu0 0
    %1523 = vmatmul.mubr.bf16.gmra.mrb[0].mxu0 %v1485
    %v1524 = vpop.f32.mrb[0].mxu0
    %v1525 = vadd.f32 0.0, %v1524
    %v1526 = vpop.f32.mrb[0].mxu0
    %v1527 = vpop.f32.mrb[0].mxu0
    %v1528 = vpop.f32.mrb[0].mxu0
    %1529 = vdwg.mxu0
    %v1530 = vmul.f32 %v1381, %v1330
    %v1531 = vmul.f32 %v1429, %v1331
    %v1532 = vmul.f32 %v1477, %v1332
    %v1533 = vmul.f32 %v1525, %v1333
    %v1534 = vpack.c.bf16 %v1530, %v1530
    %v1535 = vpack.c.bf16 %v1531, %v1531
    %v1536 = vpack.c.bf16 %v1532, %v1532
    %v1537 = vpack.c.bf16 %v1533, %v1533
    %v1538 = vld [vmem:[#allocation2] sm:$0xf]
    %v1539 = vld [vmem:[#allocation2 + $0x4] sm:$0xf]
    %v1540 = vld [vmem:[#allocation2 + $0x8] sm:$0xf]
    %v1541 = vld [vmem:[#allocation2 + $0xc] sm:$0xf]
    %v1543 = vunpack.c.l.b16 %v1538
    %v1544 = vpack.c.b16 %v1543, %v1543
    %1545 = vrot.lane.b32.xlu0 %v1544, 104
    %v1546 = vpop.permute.xlu0 %1545
    %1547 = vrot.lane.b32.xlu0 %v1544, 72
    %v1548 = vpop.permute.xlu0 %1547
    %v1550 = vsel %vm173, %v1546, 0
    %v1553 = vsel %vm173, %v1548, 0
    %1555 = vmatprep.subr.bf16.mxu0 0
    %1556 = vmatpush1.bf16.xpose.msra.mxu0 %v1553
    %1557 = vmatprep.subr.bf16.mxu0 0
    %1558 = vmatpush1.bf16.xpose.msra.mxu0 0
    %1559 = vmatprep.subr.bf16.mxu0 0
    %1560 = vmatpush1.bf16.xpose.msra.mxu0 0
    %1561 = vmatprep.subr.bf16.mxu0 0
    %1562 = vmatpush1.bf16.xpose.msra.mxu0 0
    %1563 = vmatprep.subr.bf16.mxu0 0
    %1564 = vmatpush1.bf16.xpose.msra.mxu0 0
    %1565 = vmatprep.subr.bf16.mxu0 0
    %1566 = vmatpush1.bf16.xpose.msra.mxu0 0
    %1567 = vmatprep.subr.bf16.mxu0 0
    %1568 = vmatpush1.bf16.xpose.msra.mxu0 0
    %1569 = vmatprep.subr.bf16.mxu0 0
    %1570 = vmatpush1.bf16.xpose.msra.mxu0 0
    %1571 = vmatprep.subr.bf16.mxu0 0
    %1572 = vmatpush1.bf16.xpose.msra.mxu0 0
    %1573 = vmatprep.subr.bf16.mxu0 0
    %1574 = vmatpush1.bf16.xpose.msra.mxu0 0
    %1575 = vmatprep.subr.bf16.mxu0 0
    %1576 = vmatpush1.bf16.xpose.msra.mxu0 0
    %1577 = vmatprep.subr.bf16.mxu0 0
    %1578 = vmatpush1.bf16.xpose.msra.mxu0 0
    %1579 = vmatprep.subr.bf16.mxu0 0
    %1580 = vmatpush1.bf16.xpose.msra.mxu0 0
    %1581 = vmatprep.subr.bf16.mxu0 0
    %1582 = vmatpush1.bf16.xpose.msra.mxu0 0
    %1583 = vmatprep.subr.bf16.mxu0 0
    %1584 = vmatpush1.bf16.xpose.msra.mxu0 0
    %1585 = vmatprep.subr.bf16.mxu0 0
    %1586 = vmatpush1.bf16.xpose.msra.mxu0 0
    %1587 = vmatprep.mubr.bf16.mxu0 0
    %1588 = vmatmul.mubr.bf16.gmra.mrb[0].mxu0 %v1550
    %v1589 = vpop.f32.mrb[0].mxu0
    %v1590 = vadd.f32 0.0, %v1589
    %v1591 = vpop.f32.mrb[0].mxu0
    %v1592 = vpop.f32.mrb[0].mxu0
    %v1593 = vpop.f32.mrb[0].mxu0
    %1594 = vdwg.mxu0
    %v1596 = vunpack.c.l.b16 %v1539
    %v1597 = vpack.c.b16 %v1596, %v1596
    %1598 = vrot.lane.b32.xlu0 %v1597, 104
    %v1599 = vpop.permute.xlu0 %1598
    %1600 = vrot.lane.b32.xlu0 %v1597, 72
    %v1601 = vpop.permute.xlu0 %1600
    %v1603 = vsel %vm173, %v1599, 0
    %v1606 = vsel %vm173, %v1601, 0
    %1608 = vmatprep.subr.bf16.mxu0 0
    %1609 = vmatpush1.bf16.xpose.msra.mxu0 %v1606
    %1610 = vmatprep.subr.bf16.mxu0 0
    %1611 = vmatpush1.bf16.xpose.msra.mxu0 0
    %1612 = vmatprep.subr.bf16.mxu0 0
    %1613 = vmatpush1.bf16.xpose.msra.mxu0 0
    %1614 = vmatprep.subr.bf16.mxu0 0
    %1615 = vmatpush1.bf16.xpose.msra.mxu0 0
    %1616 = vmatprep.subr.bf16.mxu0 0
    %1617 = vmatpush1.bf16.xpose.msra.mxu0 0
    %1618 = vmatprep.subr.bf16.mxu0 0
    %1619 = vmatpush1.bf16.xpose.msra.mxu0 0
    %1620 = vmatprep.subr.bf16.mxu0 0
    %1621 = vmatpush1.bf16.xpose.msra.mxu0 0
    %1622 = vmatprep.subr.bf16.mxu0 0
    %1623 = vmatpush1.bf16.xpose.msra.mxu0 0
    %1624 = vmatprep.subr.bf16.mxu0 0
    %1625 = vmatpush1.bf16.xpose.msra.mxu0 0
    %1626 = vmatprep.subr.bf16.mxu0 0
    %1627 = vmatpush1.bf16.xpose.msra.mxu0 0
    %1628 = vmatprep.subr.bf16.mxu0 0
    %1629 = vmatpush1.bf16.xpose.msra.mxu0 0
    %1630 = vmatprep.subr.bf16.mxu0 0
    %1631 = vmatpush1.bf16.xpose.msra.mxu0 0
    %1632 = vmatprep.subr.bf16.mxu0 0
    %1633 = vmatpush1.bf16.xpose.msra.mxu0 0
    %1634 = vmatprep.subr.bf16.mxu0 0
    %1635 = vmatpush1.bf16.xpose.msra.mxu0 0
    %1636 = vmatprep.subr.bf16.mxu0 0
    %1637 = vmatpush1.bf16.xpose.msra.mxu0 0
    %1638 = vmatprep.subr.bf16.mxu0 0
    %1639 = vmatpush1.bf16.xpose.msra.mxu0 0
    %1640 = vmatprep.mubr.bf16.mxu0 0
    %1641 = vmatmul.mubr.bf16.gmra.mrb[0].mxu0 %v1603
    %v1642 = vpop.f32.mrb[0].mxu0
    %v1643 = vadd.f32 0.0, %v1642
    %v1644 = vpop.f32.mrb[0].mxu0
    %v1645 = vpop.f32.mrb[0].mxu0
    %v1646 = vpop.f32.mrb[0].mxu0
    %1647 = vdwg.mxu0
    %v1649 = vunpack.c.l.b16 %v1540
    %v1650 = vpack.c.b16 %v1649, %v1649
    %1651 = vrot.lane.b32.xlu0 %v1650, 104
    %v1652 = vpop.permute.xlu0 %1651
    %1653 = vrot.lane.b32.xlu0 %v1650, 72
    %v1654 = vpop.permute.xlu0 %1653
    %v1656 = vsel %vm173, %v1652, 0
    %v1659 = vsel %vm173, %v1654, 0
    %1661 = vmatprep.subr.bf16.mxu0 0
    %1662 = vmatpush1.bf16.xpose.msra.mxu0 %v1659
    %1663 = vmatprep.subr.bf16.mxu0 0
    %1664 = vmatpush1.bf16.xpose.msra.mxu0 0
    %1665 = vmatprep.subr.bf16.mxu0 0
    %1666 = vmatpush1.bf16.xpose.msra.mxu0 0
    %1667 = vmatprep.subr.bf16.mxu0 0
    %1668 = vmatpush1.bf16.xpose.msra.mxu0 0
    %1669 = vmatprep.subr.bf16.mxu0 0
    %1670 = vmatpush1.bf16.xpose.msra.mxu0 0
    %1671 = vmatprep.subr.bf16.mxu0 0
    %1672 = vmatpush1.bf16.xpose.msra.mxu0 0
    %1673 = vmatprep.subr.bf16.mxu0 0
    %1674 = vmatpush1.bf16.xpose.msra.mxu0 0
    %1675 = vmatprep.subr.bf16.mxu0 0
    %1676 = vmatpush1.bf16.xpose.msra.mxu0 0
    %1677 = vmatprep.subr.bf16.mxu0 0
    %1678 = vmatpush1.bf16.xpose.msra.mxu0 0
    %1679 = vmatprep.subr.bf16.mxu0 0
    %1680 = vmatpush1.bf16.xpose.msra.mxu0 0
    %1681 = vmatprep.subr.bf16.mxu0 0
    %1682 = vmatpush1.bf16.xpose.msra.mxu0 0
    %1683 = vmatprep.subr.bf16.mxu0 0
    %1684 = vmatpush1.bf16.xpose.msra.mxu0 0
    %1685 = vmatprep.subr.bf16.mxu0 0
    %1686 = vmatpush1.bf16.xpose.msra.mxu0 0
    %1687 = vmatprep.subr.bf16.mxu0 0
    %1688 = vmatpush1.bf16.xpose.msra.mxu0 0
    %1689 = vmatprep.subr.bf16.mxu0 0
    %1690 = vmatpush1.bf16.xpose.msra.mxu0 0
    %1691 = vmatprep.subr.bf16.mxu0 0
    %1692 = vmatpush1.bf16.xpose.msra.mxu0 0
    %1693 = vmatprep.mubr.bf16.mxu0 0
    %1694 = vmatmul.mubr.bf16.gmra.mrb[0].mxu0 %v1656
    %v1695 = vpop.f32.mrb[0].mxu0
    %v1696 = vadd.f32 0.0, %v1695
    %v1697 = vpop.f32.mrb[0].mxu0
    %v1698 = vpop.f32.mrb[0].mxu0
    %v1699 = vpop.f32.mrb[0].mxu0
    %1700 = vdwg.mxu0
    %v1702 = vunpack.c.l.b16 %v1541
    %v1703 = vpack.c.b16 %v1702, %v1702
    %1704 = vrot.lane.b32.xlu0 %v1703, 104
    %v1705 = vpop.permute.xlu0 %1704
    %1706 = vrot.lane.b32.xlu0 %v1703, 72
    %v1707 = vpop.permute.xlu0 %1706
    %v1709 = vsel %vm173, %v1705, 0
    %v1712 = vsel %vm173, %v1707, 0
    %1714 = vmatprep.subr.bf16.mxu0 0
    %1715 = vmatpush1.bf16.xpose.msra.mxu0 %v1712
    %1716 = vmatprep.subr.bf16.mxu0 0
    %1717 = vmatpush1.bf16.xpose.msra.mxu0 0
    %1718 = vmatprep.subr.bf16.mxu0 0
    %1719 = vmatpush1.bf16.xpose.msra.mxu0 0
    %1720 = vmatprep.subr.bf16.mxu0 0
    %1721 = vmatpush1.bf16.xpose.msra.mxu0 0
    %1722 = vmatprep.subr.bf16.mxu0 0
    %1723 = vmatpush1.bf16.xpose.msra.mxu0 0
    %1724 = vmatprep.subr.bf16.mxu0 0
    %1725 = vmatpush1.bf16.xpose.msra.mxu0 0
    %1726 = vmatprep.subr.bf16.mxu0 0
    %1727 = vmatpush1.bf16.xpose.msra.mxu0 0
    %1728 = vmatprep.subr.bf16.mxu0 0
    %1729 = vmatpush1.bf16.xpose.msra.mxu0 0
    %1730 = vmatprep.subr.bf16.mxu0 0
    %1731 = vmatpush1.bf16.xpose.msra.mxu0 0
    %1732 = vmatprep.subr.bf16.mxu0 0
    %1733 = vmatpush1.bf16.xpose.msra.mxu0 0
    %1734 = vmatprep.subr.bf16.mxu0 0
    %1735 = vmatpush1.bf16.xpose.msra.mxu0 0
    %1736 = vmatprep.subr.bf16.mxu0 0
    %1737 = vmatpush1.bf16.xpose.msra.mxu0 0
    %1738 = vmatprep.subr.bf16.mxu0 0
    %1739 = vmatpush1.bf16.xpose.msra.mxu0 0
    %1740 = vmatprep.subr.bf16.mxu0 0
    %1741 = vmatpush1.bf16.xpose.msra.mxu0 0
    %1742 = vmatprep.subr.bf16.mxu0 0
    %1743 = vmatpush1.bf16.xpose.msra.mxu0 0
    %1744 = vmatprep.subr.bf16.mxu0 0
    %1745 = vmatpush1.bf16.xpose.msra.mxu0 0
    %1746 = vmatprep.mubr.bf16.mxu0 0
    %1747 = vmatmul.mubr.bf16.gmra.mrb[0].mxu0 %v1709
    %v1748 = vpop.f32.mrb[0].mxu0
    %v1749 = vadd.f32 0.0, %v1748
    %v1750 = vpop.f32.mrb[0].mxu0
    %v1751 = vpop.f32.mrb[0].mxu0
    %v1752 = vpop.f32.mrb[0].mxu0
    %1753 = vdwg.mxu0
    %v1754 = vsel %vm173, %v1590, -inf
    %1755 = vmax.xlane.f32.xlu0 %v1754
    %v1756 = vpop.xlane.xlu0 %1755
    %v1757 = vsel %vm173, %v1643, -inf
    %1758 = vmax.xlane.f32.xlu0 %v1757
    %v1759 = vpop.xlane.xlu0 %1758
    %v1760 = vsel %vm173, %v1696, -inf
    %1761 = vmax.xlane.f32.xlu0 %v1760
    %v1762 = vpop.xlane.xlu0 %1761
    %v1763 = vsel %vm173, %v1749, -inf
    %1764 = vmax.xlane.f32.xlu0 %v1763
    %v1765 = vpop.xlane.xlu0 %1764
    %v1766 = vsub.f32 %v1590, %v1756
    %v1767 = vsub.f32 %v1643, %v1759
    %v1768 = vsub.f32 %v1696, %v1762
    %v1769 = vsub.f32 %v1749, %v1765
    %v1770 = vmul.f32 %v1766, 1.442695
    %v1771 = vpow.pop %v1770
    %v1772 = vmul.f32 %v1767, 1.442695
    %v1773 = vpow.pop %v1772
    %v1774 = vmul.f32 %v1768, 1.442695
    %v1775 = vpow.pop %v1774
    %v1776 = vmul.f32 %v1769, 1.442695
    %v1777 = vpow.pop %v1776
    %v1778 = vsel %vm173, %v1771, 0.0
    %1779 = vadd.xlane.f32.xlu0 %v1778
    %v1780 = vpop.xlane.xlu0 %1779
    %v1781 = vsel %vm173, %v1773, 0.0
    %1782 = vadd.xlane.f32.xlu0 %v1781
    %v1783 = vpop.xlane.xlu0 %1782
    %v1784 = vsel %vm173, %v1775, 0.0
    %1785 = vadd.xlane.f32.xlu0 %v1784
    %v1786 = vpop.xlane.xlu0 %1785
    %v1787 = vsel %vm173, %v1777, 0.0
    %1788 = vadd.xlane.f32.xlu0 %v1787
    %v1789 = vpop.xlane.xlu0 %1788
    %v1790 = vrcp.pop %v1780
    %v1791 = vrcp.pop %v1783
    %v1792 = vrcp.pop %v1786
    %v1793 = vrcp.pop %v1789
    %v1794 = vpack.c.bf16 %v1771, %v1771
    %v1795 = vpack.c.bf16 %v1773, %v1773
    %v1796 = vpack.c.bf16 %v1775, %v1775
    %v1797 = vpack.c.bf16 %v1777, %v1777
    %1798 = vrot.lane.b32.xlu0 %v1544, 40
    %v1799 = vpop.permute.xlu0 %1798
    %v1801 = vsel %vm173, %v1794, 0
    %v1804 = vsel %vm422, %v1799, 0
    %1806 = vmatprep.subr.bf16.mxu0 0
    %1807 = vmatpush1.bf16.msra.mxu0 %v1804
    %1808 = vmatprep.subr.bf16.mxu0 0
    %1809 = vmatpush1.bf16.msra.mxu0 0
    %1810 = vmatprep.subr.bf16.mxu0 0
    %1811 = vmatpush1.bf16.msra.mxu0 0
    %1812 = vmatprep.subr.bf16.mxu0 0
    %1813 = vmatpush1.bf16.msra.mxu0 0
    %1814 = vmatprep.subr.bf16.mxu0 0
    %1815 = vmatpush1.bf16.msra.mxu0 0
    %1816 = vmatprep.subr.bf16.mxu0 0
    %1817 = vmatpush1.bf16.msra.mxu0 0
    %1818 = vmatprep.subr.bf16.mxu0 0
    %1819 = vmatpush1.bf16.msra.mxu0 0
    %1820 = vmatprep.subr.bf16.mxu0 0
    %1821 = vmatpush1.bf16.msra.mxu0 0
    %1822 = vmatprep.subr.bf16.mxu0 0
    %1823 = vmatpush1.bf16.msra.mxu0 0
    %1824 = vmatprep.subr.bf16.mxu0 0
    %1825 = vmatpush1.bf16.msra.mxu0 0
    %1826 = vmatprep.subr.bf16.mxu0 0
    %1827 = vmatpush1.bf16.msra.mxu0 0
    %1828 = vmatprep.subr.bf16.mxu0 0
    %1829 = vmatpush1.bf16.msra.mxu0 0
    %1830 = vmatprep.subr.bf16.mxu0 0
    %1831 = vmatpush1.bf16.msra.mxu0 0
    %1832 = vmatprep.subr.bf16.mxu0 0
    %1833 = vmatpush1.bf16.msra.mxu0 0
    %1834 = vmatprep.subr.bf16.mxu0 0
    %1835 = vmatpush1.bf16.msra.mxu0 0
    %1836 = vmatprep.subr.bf16.mxu0 0
    %1837 = vmatpush1.bf16.msra.mxu0 0
    %1838 = vmatprep.mubr.bf16.mxu0 0
    %1839 = vmatmul.mubr.bf16.gmra.mrb[0].mxu0 %v1801
    %v1840 = vpop.f32.mrb[0].mxu0
    %v1841 = vadd.f32 0.0, %v1840
    %v1842 = vpop.f32.mrb[0].mxu0
    %v1843 = vpop.f32.mrb[0].mxu0
    %v1844 = vpop.f32.mrb[0].mxu0
    %1845 = vdwg.mxu0
    %1846 = vrot.lane.b32.xlu0 %v1597, 40
    %v1847 = vpop.permute.xlu0 %1846
    %v1849 = vsel %vm173, %v1795, 0
    %v1852 = vsel %vm422, %v1847, 0
    %1854 = vmatprep.subr.bf16.mxu0 0
    %1855 = vmatpush1.bf16.msra.mxu0 %v1852
    %1856 = vmatprep.subr.bf16.mxu0 0
    %1857 = vmatpush1.bf16.msra.mxu0 0
    %1858 = vmatprep.subr.bf16.mxu0 0
    %1859 = vmatpush1.bf16.msra.mxu0 0
    %1860 = vmatprep.subr.bf16.mxu0 0
    %1861 = vmatpush1.bf16.msra.mxu0 0
    %1862 = vmatprep.subr.bf16.mxu0 0
    %1863 = vmatpush1.bf16.msra.mxu0 0
    %1864 = vmatprep.subr.bf16.mxu0 0
    %1865 = vmatpush1.bf16.msra.mxu0 0
    %1866 = vmatprep.subr.bf16.mxu0 0
    %1867 = vmatpush1.bf16.msra.mxu0 0
    %1868 = vmatprep.subr.bf16.mxu0 0
    %1869 = vmatpush1.bf16.msra.mxu0 0
    %1870 = vmatprep.subr.bf16.mxu0 0
    %1871 = vmatpush1.bf16.msra.mxu0 0
    %1872 = vmatprep.subr.bf16.mxu0 0
    %1873 = vmatpush1.bf16.msra.mxu0 0
    %1874 = vmatprep.subr.bf16.mxu0 0
    %1875 = vmatpush1.bf16.msra.mxu0 0
    %1876 = vmatprep.subr.bf16.mxu0 0
    %1877 = vmatpush1.bf16.msra.mxu0 0
    %1878 = vmatprep.subr.bf16.mxu0 0
    %1879 = vmatpush1.bf16.msra.mxu0 0
    %1880 = vmatprep.subr.bf16.mxu0 0
    %1881 = vmatpush1.bf16.msra.mxu0 0
    %1882 = vmatprep.subr.bf16.mxu0 0
    %1883 = vmatpush1.bf16.msra.mxu0 0
    %1884 = vmatprep.subr.bf16.mxu0 0
    %1885 = vmatpush1.bf16.msra.mxu0 0
    %1886 = vmatprep.mubr.bf16.mxu0 0
    %1887 = vmatmul.mubr.bf16.gmra.mrb[0].mxu0 %v1849
    %v1888 = vpop.f32.mrb[0].mxu0
    %v1889 = vadd.f32 0.0, %v1888
    %v1890 = vpop.f32.mrb[0].mxu0
    %v1891 = vpop.f32.mrb[0].mxu0
    %v1892 = vpop.f32.mrb[0].mxu0
    %1893 = vdwg.mxu0
    %1894 = vrot.lane.b32.xlu0 %v1650, 40
    %v1895 = vpop.permute.xlu0 %1894
    %v1897 = vsel %vm173, %v1796, 0
    %v1900 = vsel %vm422, %v1895, 0
    %1902 = vmatprep.subr.bf16.mxu0 0
    %1903 = vmatpush1.bf16.msra.mxu0 %v1900
    %1904 = vmatprep.subr.bf16.mxu0 0
    %1905 = vmatpush1.bf16.msra.mxu0 0
    %1906 = vmatprep.subr.bf16.mxu0 0
    %1907 = vmatpush1.bf16.msra.mxu0 0
    %1908 = vmatprep.subr.bf16.mxu0 0
    %1909 = vmatpush1.bf16.msra.mxu0 0
    %1910 = vmatprep.subr.bf16.mxu0 0
    %1911 = vmatpush1.bf16.msra.mxu0 0
    %1912 = vmatprep.subr.bf16.mxu0 0
    %1913 = vmatpush1.bf16.msra.mxu0 0
    %1914 = vmatprep.subr.bf16.mxu0 0
    %1915 = vmatpush1.bf16.msra.mxu0 0
    %1916 = vmatprep.subr.bf16.mxu0 0
    %1917 = vmatpush1.bf16.msra.mxu0 0
    %1918 = vmatprep.subr.bf16.mxu0 0
    %1919 = vmatpush1.bf16.msra.mxu0 0
    %1920 = vmatprep.subr.bf16.mxu0 0
    %1921 = vmatpush1.bf16.msra.mxu0 0
    %1922 = vmatprep.subr.bf16.mxu0 0
    %1923 = vmatpush1.bf16.msra.mxu0 0
    %1924 = vmatprep.subr.bf16.mxu0 0
    %1925 = vmatpush1.bf16.msra.mxu0 0
    %1926 = vmatprep.subr.bf16.mxu0 0
    %1927 = vmatpush1.bf16.msra.mxu0 0
    %1928 = vmatprep.subr.bf16.mxu0 0
    %1929 = vmatpush1.bf16.msra.mxu0 0
    %1930 = vmatprep.subr.bf16.mxu0 0
    %1931 = vmatpush1.bf16.msra.mxu0 0
    %1932 = vmatprep.subr.bf16.mxu0 0
    %1933 = vmatpush1.bf16.msra.mxu0 0
    %1934 = vmatprep.mubr.bf16.mxu0 0
    %1935 = vmatmul.mubr.bf16.gmra.mrb[0].mxu0 %v1897
    %v1936 = vpop.f32.mrb[0].mxu0
    %v1937 = vadd.f32 0.0, %v1936
    %v1938 = vpop.f32.mrb[0].mxu0
    %v1939 = vpop.f32.mrb[0].mxu0
    %v1940 = vpop.f32.mrb[0].mxu0
    %1941 = vdwg.mxu0
    %1942 = vrot.lane.b32.xlu0 %v1703, 40
    %v1943 = vpop.permute.xlu0 %1942
    %v1945 = vsel %vm173, %v1797, 0
    %v1948 = vsel %vm422, %v1943, 0
    %1950 = vmatprep.subr.bf16.mxu0 0
    %1951 = vmatpush1.bf16.msra.mxu0 %v1948
    %1952 = vmatprep.subr.bf16.mxu0 0
    %1953 = vmatpush1.bf16.msra.mxu0 0
    %1954 = vmatprep.subr.bf16.mxu0 0
    %1955 = vmatpush1.bf16.msra.mxu0 0
    %1956 = vmatprep.subr.bf16.mxu0 0
    %1957 = vmatpush1.bf16.msra.mxu0 0
    %1958 = vmatprep.subr.bf16.mxu0 0
    %1959 = vmatpush1.bf16.msra.mxu0 0
    %1960 = vmatprep.subr.bf16.mxu0 0
    %1961 = vmatpush1.bf16.msra.mxu0 0
    %1962 = vmatprep.subr.bf16.mxu0 0
    %1963 = vmatpush1.bf16.msra.mxu0 0
    %1964 = vmatprep.subr.bf16.mxu0 0
    %1965 = vmatpush1.bf16.msra.mxu0 0
    %1966 = vmatprep.subr.bf16.mxu0 0
    %1967 = vmatpush1.bf16.msra.mxu0 0
    %1968 = vmatprep.subr.bf16.mxu0 0
    %1969 = vmatpush1.bf16.msra.mxu0 0
    %1970 = vmatprep.subr.bf16.mxu0 0
    %1971 = vmatpush1.bf16.msra.mxu0 0
    %1972 = vmatprep.subr.bf16.mxu0 0
    %1973 = vmatpush1.bf16.msra.mxu0 0
    %1974 = vmatprep.subr.bf16.mxu0 0
    %1975 = vmatpush1.bf16.msra.mxu0 0
    %1976 = vmatprep.subr.bf16.mxu0 0
    %1977 = vmatpush1.bf16.msra.mxu0 0
    %1978 = vmatprep.subr.bf16.mxu0 0
    %1979 = vmatpush1.bf16.msra.mxu0 0
    %1980 = vmatprep.subr.bf16.mxu0 0
    %1981 = vmatpush1.bf16.msra.mxu0 0
    %1982 = vmatprep.mubr.bf16.mxu0 0
    %1983 = vmatmul.mubr.bf16.gmra.mrb[0].mxu0 %v1945
    %v1984 = vpop.f32.mrb[0].mxu0
    %v1985 = vadd.f32 0.0, %v1984
    %v1986 = vpop.f32.mrb[0].mxu0
    %v1987 = vpop.f32.mrb[0].mxu0
    %v1988 = vpop.f32.mrb[0].mxu0
    %1989 = vdwg.mxu0
    %v1990 = vmul.f32 %v1841, %v1790
    %v1991 = vmul.f32 %v1889, %v1791
    %v1992 = vmul.f32 %v1937, %v1792
    %v1993 = vmul.f32 %v1985, %v1793
    %v1994 = vpack.c.bf16 %v1990, %v1990
    %v1995 = vpack.c.bf16 %v1991, %v1991
    %v1996 = vpack.c.bf16 %v1992, %v1992
    %v1997 = vpack.c.bf16 %v1993, %v1993
    %2002 = vrot.lane.b32.xlu0 %v1074, 8
    %v2003 = vpop.permute.xlu0 %2002
    %2004 = vrot.lane.b32.xlu0 %v1075, 8
    %v2005 = vpop.permute.xlu0 %2004
    %2006 = vrot.lane.b32.xlu0 %v1076, 8
    %v2007 = vpop.permute.xlu0 %2006
    %2008 = vrot.lane.b32.xlu0 %v1077, 8
    %v2009 = vpop.permute.xlu0 %2008
    %2014 = vrot.lane.b32.xlu0 %v1534, 16
    %v2015 = vpop.permute.xlu0 %2014
    %2016 = vrot.lane.b32.xlu0 %v1535, 16
    %v2017 = vpop.permute.xlu0 %2016
    %2018 = vrot.lane.b32.xlu0 %v1536, 16
    %v2019 = vpop.permute.xlu0 %2018
    %2020 = vrot.lane.b32.xlu0 %v1537, 16
    %v2021 = vpop.permute.xlu0 %2020
    %2026 = vrot.lane.b32.xlu0 %v1994, 24
    %v2027 = vpop.permute.xlu0 %2026
    %2028 = vrot.lane.b32.xlu0 %v1995, 24
    %v2029 = vpop.permute.xlu0 %2028
    %2030 = vrot.lane.b32.xlu0 %v1996, 24
    %v2031 = vpop.permute.xlu0 %2030
    %2032 = vrot.lane.b32.xlu0 %v1997, 24
    %v2033 = vpop.permute.xlu0 %2032
    %v2036 = vsel %vm173, %v614, %v2003
    %v2039 = vsel %vm173, %v615, %v2005
    %v2042 = vsel %vm173, %v616, %v2007
    %v2045 = vsel %vm173, %v617, %v2009
    %vm2046 = vcmask 130048
    %v2048 = vsel %vm2046, %v2036, %v2015
    %v2050 = vsel %vm2046, %v2039, %v2017
    %v2052 = vsel %vm2046, %v2042, %v2019
    %v2054 = vsel %vm2046, %v2045, %v2021
    %vm2055 = vcmask 195584
    %v2057 = vsel %vm2055, %v2048, %v2027
    %v2060 = vsel %vm2055, %v2050, %v2029
    %v2063 = vsel %vm2055, %v2052, %v2031
    %v2066 = vsel %vm2055, %v2054, %v2033
    %vm2068 = vcmask 257024
    %2069 = vst.msk [vmem:[#allocation3] sm:$0xf] %vm2068, %v2057
    %2070 = vst.msk [vmem:[#allocation3 + $0x4] sm:$0xf] %vm2068, %v2060
    %2071 = vst.msk [vmem:[#allocation3 + $0x8] sm:$0xf] %vm2068, %v2063
    %2072 = vst.msk [vmem:[#allocation3 + $0xc] sm:$0xf] %vm2068, %v2066
    %v2073 = vld [vmem:[#allocation3] sm:$0xf]
    %v2074 = vld [vmem:[#allocation3 + $0x4] sm:$0xf]
    %v2075 = vld [vmem:[#allocation3 + $0x8] sm:$0xf]
    %v2076 = vld [vmem:[#allocation3 + $0xc] sm:$0xf]
    %v2077 = vld [vmem:[#allocation9] sm:$0xf]
    %v2078 = vld [vmem:[#allocation9 + $0x4] sm:$0xf]
    %v2079 = vld [vmem:[#allocation9 + $0x8] sm:$0xf]
    %v2080 = vld [vmem:[#allocation9 + $0xc] sm:$0xf]
    %v2081 = vld [vmem:[%s4] sm:$0x1]
    %v2082 = vunpack.c.l.bf16 %v2081
    %v2083 = vlaneseq
    %v2084 = vshrl.u32 %v2083, 7
    %v2085 = vsub.s32 0, %v2084
    %v2086 = vrot.slane %v2082, %v2085
    %v2091 = vunpack.c.l.b16 %v2073
    %v2092 = vunpack.c.l.b16 %v2074
    %v2093 = vunpack.c.l.b16 %v2075
    %v2094 = vunpack.c.l.b16 %v2076
    %v2095 = vpack.c.b16 %v2092, %v2091
    %v2096 = vpack.c.b16 %v2094, %v2093
    %v2101 = vunpack.c.l.b16 %v2077
    %v2102 = vunpack.c.l.b16 %v2078
    %v2103 = vunpack.c.l.b16 %v2079
    %v2104 = vunpack.c.l.b16 %v2080
    %v2105 = vpack.c.b16 %v2102, %v2101
    %v2106 = vpack.c.b16 %v2104, %v2103
    %v2110 = vsel %vm99, %v2095, 0
    %v2113 = vsel %vm99, %v2096, 0
    %2115 = vmatprep.subr.bf16.mxu0 0
    %2116 = vmatpush1.bf16.msra.mxu0 %v2105
    %2117 = vmatprep.subr.bf16.mxu0 0
    %2118 = vmatpush1.bf16.msra.mxu0 %v2106
    %2119 = vmatprep.subr.bf16.mxu0 0
    %2120 = vmatpush1.bf16.msra.mxu0 0
    %2121 = vmatprep.subr.bf16.mxu0 0
    %2122 = vmatpush1.bf16.msra.mxu0 0
    %2123 = vmatprep.subr.bf16.mxu0 0
    %2124 = vmatpush1.bf16.msra.mxu0 0
    %2125 = vmatprep.subr.bf16.mxu0 0
    %2126 = vmatpush1.bf16.msra.mxu0 0
    %2127 = vmatprep.subr.bf16.mxu0 0
    %2128 = vmatpush1.bf16.msra.mxu0 0
    %2129 = vmatprep.subr.bf16.mxu0 0
    %2130 = vmatpush1.bf16.msra.mxu0 0
    %2131 = vmatprep.subr.bf16.mxu0 0
    %2132 = vmatpush1.bf16.msra.mxu0 0
    %2133 = vmatprep.subr.bf16.mxu0 0
    %2134 = vmatpush1.bf16.msra.mxu0 0
    %2135 = vmatprep.subr.bf16.mxu0 0
    %2136 = vmatpush1.bf16.msra.mxu0 0
    %2137 = vmatprep.subr.bf16.mxu0 0
    %2138 = vmatpush1.bf16.msra.mxu0 0
    %2139 = vmatprep.subr.bf16.mxu0 0
    %2140 = vmatpush1.bf16.msra.mxu0 0
    %2141 = vmatprep.subr.bf16.mxu0 0
    %2142 = vmatpush1.bf16.msra.mxu0 0
    %2143 = vmatprep.subr.bf16.mxu0 0
    %2144 = vmatpush1.bf16.msra.mxu0 0
    %2145 = vmatprep.subr.bf16.mxu0 0
    %2146 = vmatpush1.bf16.msra.mxu0 0
    %2147 = vmatprep.mubr.bf16.mxu0 0
    %2148 = vmatmul.mubr.bf16.gmra.mrb[0].mxu0 %v2110
    %v2149 = vpop.f32.mrb[0].mxu0
    %v2150 = vadd.f32 %v2086, %v2149
    %v2151 = vpop.f32.mrb[0].mxu0
    %v2152 = vpop.f32.mrb[0].mxu0
    %v2153 = vadd.f32 %v2086, %v2152
    %v2154 = vpop.f32.mrb[0].mxu0
    %2155 = vmatprep.mubr.bf16.mxu0 0
    %2156 = vmatmul.mubr.bf16.gmra.mrb[0].mxu0 %v2113
    %v2157 = vpop.f32.mrb[0].mxu0
    %v2158 = vadd.f32 %v2086, %v2157
    %v2159 = vpop.f32.mrb[0].mxu0
    %v2160 = vpop.f32.mrb[0].mxu0
    %v2161 = vadd.f32 %v2086, %v2160
    %v2162 = vpop.f32.mrb[0].mxu0
    %2163 = vdwg.mxu0
    %2164 = vst.msk [vmem:[#allocation10] sm:$0xff] %vm99, %v2150
    %2165 = vst.msk [vmem:[#allocation10 + $0x8] sm:$0xff] %vm99, %v2153
    %2166 = vst.msk [vmem:[#allocation10 + $0x10] sm:$0xff] %vm99, %v2158
    %2167 = vst.msk [vmem:[#allocation10 + $0x18] sm:$0xff] %vm99, %v2161
    // Predicated region
    $region34: #{tpu_custom_call.1} parent=1 // pred_check
      _
    $region35: #{tpu_custom_call.1} parent=1 // pred_check_branch
      %2169 = sbr.rel (0) target = $region37
    $region36: #{tpu_custom_call.1} parent=1 // pred_region
      %s2171 = ssub.s32 512, 512
      %2172 = vsyncadd [#allocation6], %s2171
      %s2173 = sshll.u32 [#allocation10], 4
      %s2174 = int_to_ptr.vmem [resolvable:$true] %s2173
      %2179 = dma.vmem_to_hbm [thread:$0]  %s2174, 512, %s5, [#allocation6], 128, 128, 8
    $region37: #{tpu_custom_call.1} parent=1 // pred_fallthru
      _
    // Predicated region
    $region38: #{tpu_custom_call.1} parent=1 // pred_check
      _
    $region39: #{tpu_custom_call.1} parent=1 // pred_check_branch
      %2181 = sbr.rel (0) target = $region41
    $region40: #{tpu_custom_call.1} parent=1 // pred_region
      %2182 = dma.done [#allocation6], 512
    $region41: #{tpu_custom_call.1} parent=1 // pred_fallthru
      _
    %2183 = vsyncpa [#allocation5], 1
    %2184 = vsyncpa [#allocation8], 1
    %2185 = vsyncpa [#allocation6], 1

// kernel: tpu_custom_call.1
$region0: #{tpu_custom_call.1}
  #allocation0 [shape = 'u32[]', space=smem, size = 0x4, offset = 0x4, fixed_abs, tag = 'smem constant byte address 0x4 - core index']
  #allocation1 [shape = 'u32[144,128]{1,0:T(1,128)}', space=vmem, size = 0x12000, scoped, tag = 'internal scratch']
  #allocation2 [shape = 'bf16[4,8,96]{2,1,0:T(8,128)(2,1)}', space=vmem, size = 0x2000, scoped, tag = 'scratch operand']
  #allocation3 [shape = 'bf16[4,8,32]{2,1,0:T(8,128)(2,1)}', space=vmem, size = 0x2000, scoped, tag = 'scratch operand']
  %s0 = inlined_call_operand.hbm [shape: bf16[4,8,32], index: 0, kind: input, shape index: {}]
  %s1 = inlined_call_operand.hbm [shape: bf16[32,96], index: 1, kind: input, shape index: {}]
  %s2 = inlined_call_operand.vmem [shape: bf16[1,96], index: 2, kind: input, shape index: {}]
  %s3 = inlined_call_operand.hbm [shape: bf16[32,32], index: 3, kind: input, shape index: {}]
  %s4 = inlined_call_operand.vmem [shape: bf16[1,32], index: 4, kind: input, shape index: {}]
  %s5 = inlined_call_operand.hbm [shape: f32[4,8,32], index: 5, kind: output, shape index: {}]
  %s6 = sld [smem:[#allocation0]]
  $region42: #{tpu_custom_call.1} parent=0
    _
  %s8 = ssub.s32 1, %s6
  %s9 = scalar_select 0, %s8, %s6
  $region1: #{tpu_custom_call.1} parent=0
    #allocation4 [shape = 'u8[8192]{0}', space=vmem, size = 0x2000, scoped, tag = 'input window, operand 0, single buffered']
    #allocation5 [shape = 's32[1]{0}', space=sflag, size = 0x4, scoped, tag = 'scoped memory for tpu_custom_call.1']
    #allocation6 [shape = 's32[1]{0}', space=sflag, size = 0x4, scoped, tag = 'scoped memory for tpu_custom_call.1']
    #allocation7 [shape = 'u8[8192]{0}', space=vmem, size = 0x2000, scoped, tag = 'input window, operand 1, single buffered']
    #allocation8 [shape = 's32[1]{0}', space=sflag, size = 0x4, scoped, tag = 'scoped memory for tpu_custom_call.1']
    #allocation9 [shape = 'u8[8192]{0}', space=vmem, size = 0x2000, scoped, tag = 'input window, operand 3, single buffered']
    #allocation10 [shape = 'u8[16384]{0}', space=vmem, size = 0x4000, scoped, tag = 'output window, operand 0, single buffered']
    %10 = vsyncpa [#allocation5], 0
    %11 = vsyncpa [#allocation8], 0
    %12 = vsyncpa [#allocation6], 0
    // Predicated region
    $region2: #{tpu_custom_call.1} parent=1 // pred_check
      _
    $region3: #{tpu_custom_call.1} parent=1 // pred_check_branch
      %14 = sbr.rel (0) target = $region5
    $region4: #{tpu_custom_call.1} parent=1 // pred_region
      %s16 = ssub.s32 256, 256
      %17 = vsyncadd [#allocation5], %s16
      %s18 = sshll.u32 [#allocation4], 4
      %s19 = int_to_ptr.vmem [resolvable:$true] %s18
      %24 = dma.hbm_to_vmem [thread:$0]  %s0, 256, %s19, [#allocation5], 64, 64, 4
    $region5: #{tpu_custom_call.1} parent=1 // pred_fallthru
      _
    // Predicated region
    $region6: #{tpu_custom_call.1} parent=1 // pred_check
      _
    $region7: #{tpu_custom_call.1} parent=1 // pred_check_branch
      %26 = sbr.rel (0) target = $region9
    $region8: #{tpu_custom_call.1} parent=1 // pred_region
      %s28 = ssub.s32 256, 256
      %29 = vsyncadd [#allocation8], %s28
      %s30 = sshll.u32 [#allocation7], 4
      %s31 = int_to_ptr.vmem [resolvable:$true] %s30
      %36 = dma.hbm_to_vmem [thread:$0]  %s1, 256, %s31, [#allocation8], 64, 64, 4
    $region9: #{tpu_custom_call.1} parent=1 // pred_fallthru
      _
    // Predicated region
    $region10: #{tpu_custom_call.1} parent=1 // pred_check
      _
    $region11: #{tpu_custom_call.1} parent=1 // pred_check_branch
      %38 = sbr.rel (0) target = $region13
    $region12: #{tpu_custom_call.1} parent=1 // pred_region
      _
    $region13: #{tpu_custom_call.1} parent=1 // pred_fallthru
      _
    // Predicated region
    $region14: #{tpu_custom_call.1} parent=1 // pred_check
      _
    $region15: #{tpu_custom_call.1} parent=1 // pred_check_branch
      %40 = sbr.rel (0) target = $region17
    $region16: #{tpu_custom_call.1} parent=1 // pred_region
      %s42 = ssub.s32 256, 256
      %43 = vsyncadd [#allocation8], %s42
      %s44 = sshll.u32 [#allocation9], 4
      %s45 = int_to_ptr.vmem [resolvable:$true] %s44
      %50 = dma.hbm_to_vmem [thread:$0]  %s3, 256, %s45, [#allocation8], 64, 64, 4
    $region17: #{tpu_custom_call.1} parent=1 // pred_fallthru
      _
    // Predicated region
    $region18: #{tpu_custom_call.1} parent=1 // pred_check
      _
    $region19: #{tpu_custom_call.1} parent=1 // pred_check_branch
      %52 = sbr.rel (0) target = $region21
    $region20: #{tpu_custom_call.1} parent=1 // pred_region
      _
    $region21: #{tpu_custom_call.1} parent=1 // pred_fallthru
      _
    // Predicated region
    $region22: #{tpu_custom_call.1} parent=1 // pred_check
      _
    $region23: #{tpu_custom_call.1} parent=1 // pred_check_branch
      %54 = sbr.rel (0) target = $region25
    $region24: #{tpu_custom_call.1} parent=1 // pred_region
      %55 = dma.done [#allocation5], 256
    $region25: #{tpu_custom_call.1} parent=1 // pred_fallthru
      _
    // Predicated region
    $region26: #{tpu_custom_call.1} parent=1 // pred_check
      _
    $region27: #{tpu_custom_call.1} parent=1 // pred_check_branch
      %57 = sbr.rel (0) target = $region29
    $region28: #{tpu_custom_call.1} parent=1 // pred_region
      %58 = dma.done [#allocation8], 256
    $region29: #{tpu_custom_call.1} parent=1 // pred_fallthru
      _
    // Predicated region
    $region30: #{tpu_custom_call.1} parent=1 // pred_check
      _
    $region31: #{tpu_custom_call.1} parent=1 // pred_check_branch
      %60 = sbr.rel (0) target = $region33
    $region32: #{tpu_custom_call.1} parent=1 // pred_region
      %61 = dma.done [#allocation8], 256
    $region33: #{tpu_custom_call.1} parent=1 // pred_fallthru
      _
    %v63 = vld [vmem:[#allocation4] sm:$0xf]
    %v64 = vld [vmem:[#allocation4 + $0x4] sm:$0xf]
    %v65 = vld [vmem:[#allocation4 + $0x8] sm:$0xf]
    %v66 = vld [vmem:[#allocation4 + $0xc] sm:$0xf]
    %v67 = vld [vmem:[#allocation7] sm:$0xf]
    %v68 = vld [vmem:[#allocation7 + $0x4] sm:$0xf]
    %v69 = vld [vmem:[#allocation7 + $0x8] sm:$0xf]
    %v70 = vld [vmem:[#allocation7 + $0xc] sm:$0xf]
    %v71 = vld [vmem:[%s2] sm:$0x1]
    %v72 = vunpack.c.l.bf16 %v71
    %v73 = vlaneseq
    %v74 = vshrl.u32 %v73, 7
    %v75 = vsub.s32 0, %v74
    %v76 = vrot.slane %v72, %v75
    %v81 = vunpack.c.l.b16 %v63
    %v82 = vunpack.c.l.b16 %v64
    %v83 = vunpack.c.l.b16 %v65
    %v84 = vunpack.c.l.b16 %v66
    %v85 = vpack.c.b16 %v82, %v81
    %v86 = vpack.c.b16 %v84, %v83
    %v91 = vunpack.c.l.b16 %v67
    %v92 = vunpack.c.l.b16 %v68
    %v93 = vunpack.c.l.b16 %v69
    %v94 = vunpack.c.l.b16 %v70
    %v95 = vpack.c.b16 %v92, %v91
    %v96 = vpack.c.b16 %v94, %v93
    %vm99 = vcmask 261120
    %v101 = vsel %vm99, %v85, 0
    %v104 = vsel %vm99, %v86, 0
    %106 = vmatprep.subr.bf16.mxu0 0
    %107 = vmatpush1.bf16.msra.mxu0 %v95
    %108 = vmatprep.subr.bf16.mxu0 0
    %109 = vmatpush1.bf16.msra.mxu0 %v96
    %110 = vmatprep.subr.bf16.mxu0 0
    %111 = vmatpush1.bf16.msra.mxu0 0
    %112 = vmatprep.subr.bf16.mxu0 0
    %113 = vmatpush1.bf16.msra.mxu0 0
    %114 = vmatprep.subr.bf16.mxu0 0
    %115 = vmatpush1.bf16.msra.mxu0 0
    %116 = vmatprep.subr.bf16.mxu0 0
    %117 = vmatpush1.bf16.msra.mxu0 0
    %118 = vmatprep.subr.bf16.mxu0 0
    %119 = vmatpush1.bf16.msra.mxu0 0
    %120 = vmatprep.subr.bf16.mxu0 0
    %121 = vmatpush1.bf16.msra.mxu0 0
    %122 = vmatprep.subr.bf16.mxu0 0
    %123 = vmatpush1.bf16.msra.mxu0 0
    %124 = vmatprep.subr.bf16.mxu0 0
    %125 = vmatpush1.bf16.msra.mxu0 0
    %126 = vmatprep.subr.bf16.mxu0 0
    %127 = vmatpush1.bf16.msra.mxu0 0
    %128 = vmatprep.subr.bf16.mxu0 0
    %129 = vmatpush1.bf16.msra.mxu0 0
    %130 = vmatprep.subr.bf16.mxu0 0
    %131 = vmatpush1.bf16.msra.mxu0 0
    %132 = vmatprep.subr.bf16.mxu0 0
    %133 = vmatpush1.bf16.msra.mxu0 0
    %134 = vmatprep.subr.bf16.mxu0 0
    %135 = vmatpush1.bf16.msra.mxu0 0
    %136 = vmatprep.subr.bf16.mxu0 0
    %137 = vmatpush1.bf16.msra.mxu0 0
    %138 = vmatprep.mubr.bf16.mxu0 0
    %139 = vmatmul.mubr.bf16.gmra.mrb[0].mxu0 %v101
    %v140 = vpop.f32.mrb[0].mxu0
    %v141 = vadd.f32 %v76, %v140
    %v142 = vpop.f32.mrb[0].mxu0
    %v143 = vpop.f32.mrb[0].mxu0
    %v144 = vadd.f32 %v76, %v143
    %v145 = vpop.f32.mrb[0].mxu0
    %146 = vmatprep.mubr.bf16.mxu0 0
    %147 = vmatmul.mubr.bf16.gmra.mrb[0].mxu0 %v104
    %v148 = vpop.f32.mrb[0].mxu0
    %v149 = vadd.f32 %v76, %v148
    %v150 = vpop.f32.mrb[0].mxu0
    %v151 = vpop.f32.mrb[0].mxu0
    %v152 = vadd.f32 %v76, %v151
    %v153 = vpop.f32.mrb[0].mxu0
    %154 = vdwg.mxu0
    %v155 = vpack.c.bf16 %v141, %v141
    %v156 = vpack.c.bf16 %v144, %v144
    %v157 = vpack.c.bf16 %v149, %v149
    %v158 = vpack.c.bf16 %v152, %v152
    %vm159 = vcmask 781312
    %160 = vst.msk [vmem:[#allocation2] sm:$0xf] %vm159, %v155
    %161 = vst.msk [vmem:[#allocation2 + $0x4] sm:$0xf] %vm159, %v156
    %162 = vst.msk [vmem:[#allocation2 + $0x8] sm:$0xf] %vm159, %v157
    %163 = vst.msk [vmem:[#allocation2 + $0xc] sm:$0xf] %vm159, %v158
    %v164 = vld [vmem:[#allocation2] sm:$0xf]
    %v165 = vld [vmem:[#allocation2 + $0x4] sm:$0xf]
    %v166 = vld [vmem:[#allocation2 + $0x8] sm:$0xf]
    %v167 = vld [vmem:[#allocation2 + $0xc] sm:$0xf]
    %v169 = vunpack.c.l.b16 %v164
    %v170 = vpack.c.b16 %v169, %v169
    %171 = vrot.lane.b32.xlu0 %v170, 96
    %v172 = vpop.permute.xlu0 %171
    %vm173 = vcmask 64512
    %v175 = vsel %vm173, %v164, 0
    %v178 = vsel %vm173, %v172, 0
    %180 = vmatprep.subr.bf16.mxu0 0
    %181 = vmatpush1.bf16.xpose.msra.mxu0 %v178
    %182 = vmatprep.subr.bf16.mxu0 0
    %183 = vmatpush1.bf16.xpose.msra.mxu0 0
    %184 = vmatprep.subr.bf16.mxu0 0
    %185 = vmatpush1.bf16.xpose.msra.mxu0 0
    %186 = vmatprep.subr.bf16.mxu0 0
    %187 = vmatpush1.bf16.xpose.msra.mxu0 0
    %188 = vmatprep.subr.bf16.mxu0 0
    %189 = vmatpush1.bf16.xpose.msra.mxu0 0
    %190 = vmatprep.subr.bf16.mxu0 0
    %191 = vmatpush1.bf16.xpose.msra.mxu0 0
    %192 = vmatprep.subr.bf16.mxu0 0
    %193 = vmatpush1.bf16.xpose.msra.mxu0 0
    %194 = vmatprep.subr.bf16.mxu0 0
    %195 = vmatpush1.bf16.xpose.msra.mxu0 0
    %196 = vmatprep.subr.bf16.mxu0 0
    %197 = vmatpush1.bf16.xpose.msra.mxu0 0
    %198 = vmatprep.subr.bf16.mxu0 0
    %199 = vmatpush1.bf16.xpose.msra.mxu0 0
    %200 = vmatprep.subr.bf16.mxu0 0
    %201 = vmatpush1.bf16.xpose.msra.mxu0 0
    %202 = vmatprep.subr.bf16.mxu0 0
    %203 = vmatpush1.bf16.xpose.msra.mxu0 0
    %204 = vmatprep.subr.bf16.mxu0 0
    %205 = vmatpush1.bf16.xpose.msra.mxu0 0
    %206 = vmatprep.subr.bf16.mxu0 0
    %207 = vmatpush1.bf16.xpose.msra.mxu0 0
    %208 = vmatprep.subr.bf16.mxu0 0
    %209 = vmatpush1.bf16.xpose.msra.mxu0 0
    %210 = vmatprep.subr.bf16.mxu0 0
    %211 = vmatpush1.bf16.xpose.msra.mxu0 0
    %212 = vmatprep.mubr.bf16.mxu0 0
    %213 = vmatmul.mubr.bf16.gmra.mrb[0].mxu0 %v175
    %v214 = vpop.f32.mrb[0].mxu0
    %v215 = vadd.f32 0.0, %v214
    %v216 = vpop.f32.mrb[0].mxu0
    %v217 = vpop.f32.mrb[0].mxu0
    %v218 = vpop.f32.mrb[0].mxu0
    %219 = vdwg.mxu0
    %v221 = vunpack.c.l.b16 %v165
    %v222 = vpack.c.b16 %v221, %v221
    %223 = vrot.lane.b32.xlu0 %v222, 96
    %v224 = vpop.permute.xlu0 %223
    %v226 = vsel %vm173, %v165, 0
    %v229 = vsel %vm173, %v224, 0
    %231 = vmatprep.subr.bf16.mxu0 0
    %232 = vmatpush1.bf16.xpose.msra.mxu0 %v229
    %233 = vmatprep.subr.bf16.mxu0 0
    %234 = vmatpush1.bf16.xpose.msra.mxu0 0
    %235 = vmatprep.subr.bf16.mxu0 0
    %236 = vmatpush1.bf16.xpose.msra.mxu0 0
    %237 = vmatprep.subr.bf16.mxu0 0
    %238 = vmatpush1.bf16.xpose.msra.mxu0 0
    %239 = vmatprep.subr.bf16.mxu0 0
    %240 = vmatpush1.bf16.xpose.msra.mxu0 0
    %241 = vmatprep.subr.bf16.mxu0 0
    %242 = vmatpush1.bf16.xpose.msra.mxu0 0
    %243 = vmatprep.subr.bf16.mxu0 0
    %244 = vmatpush1.bf16.xpose.msra.mxu0 0
    %245 = vmatprep.subr.bf16.mxu0 0
    %246 = vmatpush1.bf16.xpose.msra.mxu0 0
    %247 = vmatprep.subr.bf16.mxu0 0
    %248 = vmatpush1.bf16.xpose.msra.mxu0 0
    %249 = vmatprep.subr.bf16.mxu0 0
    %250 = vmatpush1.bf16.xpose.msra.mxu0 0
    %251 = vmatprep.subr.bf16.mxu0 0
    %252 = vmatpush1.bf16.xpose.msra.mxu0 0
    %253 = vmatprep.subr.bf16.mxu0 0
    %254 = vmatpush1.bf16.xpose.msra.mxu0 0
    %255 = vmatprep.subr.bf16.mxu0 0
    %256 = vmatpush1.bf16.xpose.msra.mxu0 0
    %257 = vmatprep.subr.bf16.mxu0 0
    %258 = vmatpush1.bf16.xpose.msra.mxu0 0
    %259 = vmatprep.subr.bf16.mxu0 0
    %260 = vmatpush1.bf16.xpose.msra.mxu0 0
    %261 = vmatprep.subr.bf16.mxu0 0
    %262 = vmatpush1.bf16.xpose.msra.mxu0 0
    %263 = vmatprep.mubr.bf16.mxu0 0
    %264 = vmatmul.mubr.bf16.gmra.mrb[0].mxu0 %v226
    %v265 = vpop.f32.mrb[0].mxu0
    %v266 = vadd.f32 0.0, %v265
    %v267 = vpop.f32.mrb[0].mxu0
    %v268 = vpop.f32.mrb[0].mxu0
    %v269 = vpop.f32.mrb[0].mxu0
    %270 = vdwg.mxu0
    %v272 = vunpack.c.l.b16 %v166
    %v273 = vpack.c.b16 %v272, %v272
    %274 = vrot.lane.b32.xlu0 %v273, 96
    %v275 = vpop.permute.xlu0 %274
    %v277 = vsel %vm173, %v166, 0
    %v280 = vsel %vm173, %v275, 0
    %282 = vmatprep.subr.bf16.mxu0 0
    %283 = vmatpush1.bf16.xpose.msra.mxu0 %v280
    %284 = vmatprep.subr.bf16.mxu0 0
    %285 = vmatpush1.bf16.xpose.msra.mxu0 0
    %286 = vmatprep.subr.bf16.mxu0 0
    %287 = vmatpush1.bf16.xpose.msra.mxu0 0
    %288 = vmatprep.subr.bf16.mxu0 0
    %289 = vmatpush1.bf16.xpose.msra.mxu0 0
    %290 = vmatprep.subr.bf16.mxu0 0
    %291 = vmatpush1.bf16.xpose.msra.mxu0 0
    %292 = vmatprep.subr.bf16.mxu0 0
    %293 = vmatpush1.bf16.xpose.msra.mxu0 0
    %294 = vmatprep.subr.bf16.mxu0 0
    %295 = vmatpush1.bf16.xpose.msra.mxu0 0
    %296 = vmatprep.subr.bf16.mxu0 0
    %297 = vmatpush1.bf16.xpose.msra.mxu0 0
    %298 = vmatprep.subr.bf16.mxu0 0
    %299 = vmatpush1.bf16.xpose.msra.mxu0 0
    %300 = vmatprep.subr.bf16.mxu0 0
    %301 = vmatpush1.bf16.xpose.msra.mxu0 0
    %302 = vmatprep.subr.bf16.mxu0 0
    %303 = vmatpush1.bf16.xpose.msra.mxu0 0
    %304 = vmatprep.subr.bf16.mxu0 0
    %305 = vmatpush1.bf16.xpose.msra.mxu0 0
    %306 = vmatprep.subr.bf16.mxu0 0
    %307 = vmatpush1.bf16.xpose.msra.mxu0 0
    %308 = vmatprep.subr.bf16.mxu0 0
    %309 = vmatpush1.bf16.xpose.msra.mxu0 0
    %310 = vmatprep.subr.bf16.mxu0 0
    %311 = vmatpush1.bf16.xpose.msra.mxu0 0
    %312 = vmatprep.subr.bf16.mxu0 0
    %313 = vmatpush1.bf16.xpose.msra.mxu0 0
    %314 = vmatprep.mubr.bf16.mxu0 0
    %315 = vmatmul.mubr.bf16.gmra.mrb[0].mxu0 %v277
    %v316 = vpop.f32.mrb[0].mxu0
    %v317 = vadd.f32 0.0, %v316
    %v318 = vpop.f32.mrb[0].mxu0
    %v319 = vpop.f32.mrb[0].mxu0
    %v320 = vpop.f32.mrb[0].mxu0
    %321 = vdwg.mxu0
    %v323 = vunpack.c.l.b16 %v167
    %v324 = vpack.c.b16 %v323, %v323
    %325 = vrot.lane.b32.xlu0 %v324, 96
    %v326 = vpop.permute.xlu0 %325
    %v328 = vsel %vm173, %v167, 0
    %v331 = vsel %vm173, %v326, 0
    %333 = vmatprep.subr.bf16.mxu0 0
    %334 = vmatpush1.bf16.xpose.msra.mxu0 %v331
    %335 = vmatprep.subr.bf16.mxu0 0
    %336 = vmatpush1.bf16.xpose.msra.mxu0 0
    %337 = vmatprep.subr.bf16.mxu0 0
    %338 = vmatpush1.bf16.xpose.msra.mxu0 0
    %339 = vmatprep.subr.bf16.mxu0 0
    %340 = vmatpush1.bf16.xpose.msra.mxu0 0
    %341 = vmatprep.subr.bf16.mxu0 0
    %342 = vmatpush1.bf16.xpose.msra.mxu0 0
    %343 = vmatprep.subr.bf16.mxu0 0
    %344 = vmatpush1.bf16.xpose.msra.mxu0 0
    %345 = vmatprep.subr.bf16.mxu0 0
    %346 = vmatpush1.bf16.xpose.msra.mxu0 0
    %347 = vmatprep.subr.bf16.mxu0 0
    %348 = vmatpush1.bf16.xpose.msra.mxu0 0
    %349 = vmatprep.subr.bf16.mxu0 0
    %350 = vmatpush1.bf16.xpose.msra.mxu0 0
    %351 = vmatprep.subr.bf16.mxu0 0
    %352 = vmatpush1.bf16.xpose.msra.mxu0 0
    %353 = vmatprep.subr.bf16.mxu0 0
    %354 = vmatpush1.bf16.xpose.msra.mxu0 0
    %355 = vmatprep.subr.bf16.mxu0 0
    %356 = vmatpush1.bf16.xpose.msra.mxu0 0
    %357 = vmatprep.subr.bf16.mxu0 0
    %358 = vmatpush1.bf16.xpose.msra.mxu0 0
    %359 = vmatprep.subr.bf16.mxu0 0
    %360 = vmatpush1.bf16.xpose.msra.mxu0 0
    %361 = vmatprep.subr.bf16.mxu0 0
    %362 = vmatpush1.bf16.xpose.msra.mxu0 0
    %363 = vmatprep.subr.bf16.mxu0 0
    %364 = vmatpush1.bf16.xpose.msra.mxu0 0
    %365 = vmatprep.mubr.bf16.mxu0 0
    %366 = vmatmul.mubr.bf16.gmra.mrb[0].mxu0 %v328
    %v367 = vpop.f32.mrb[0].mxu0
    %v368 = vadd.f32 0.0, %v367
    %v369 = vpop.f32.mrb[0].mxu0
    %v370 = vpop.f32.mrb[0].mxu0
    %v371 = vpop.f32.mrb[0].mxu0
    %372 = vdwg.mxu0
    %v373 = vsel %vm173, %v215, -inf
    %374 = vmax.xlane.f32.xlu0 %v373
    %v375 = vpop.xlane.xlu0 %374
    %v376 = vsel %vm173, %v266, -inf
    %377 = vmax.xlane.f32.xlu0 %v376
    %v378 = vpop.xlane.xlu0 %377
    %v379 = vsel %vm173, %v317, -inf
    %380 = vmax.xlane.f32.xlu0 %v379
    %v381 = vpop.xlane.xlu0 %380
    %v382 = vsel %vm173, %v368, -inf
    %383 = vmax.xlane.f32.xlu0 %v382
    %v384 = vpop.xlane.xlu0 %383
    %v385 = vsub.f32 %v215, %v375
    %v386 = vsub.f32 %v266, %v378
    %v387 = vsub.f32 %v317, %v381
    %v388 = vsub.f32 %v368, %v384
    %v389 = vmul.f32 %v385, 1.442695
    %v390 = vpow.pop %v389
    %v391 = vmul.f32 %v386, 1.442695
    %v392 = vpow.pop %v391
    %v393 = vmul.f32 %v387, 1.442695
    %v394 = vpow.pop %v393
    %v395 = vmul.f32 %v388, 1.442695
    %v396 = vpow.pop %v395
    %v397 = vsel %vm173, %v390, 0.0
    %398 = vadd.xlane.f32.xlu0 %v397
    %v399 = vpop.xlane.xlu0 %398
    %v400 = vsel %vm173, %v392, 0.0
    %401 = vadd.xlane.f32.xlu0 %v400
    %v402 = vpop.xlane.xlu0 %401
    %v403 = vsel %vm173, %v394, 0.0
    %404 = vadd.xlane.f32.xlu0 %v403
    %v405 = vpop.xlane.xlu0 %404
    %v406 = vsel %vm173, %v396, 0.0
    %407 = vadd.xlane.f32.xlu0 %v406
    %v408 = vpop.xlane.xlu0 %407
    %v409 = vrcp.pop %v399
    %v410 = vrcp.pop %v402
    %v411 = vrcp.pop %v405
    %v412 = vrcp.pop %v408
    %v413 = vpack.c.bf16 %v390, %v390
    %v414 = vpack.c.bf16 %v392, %v392
    %v415 = vpack.c.bf16 %v394, %v394
    %v416 = vpack.c.bf16 %v396, %v396
    %417 = vrot.lane.b32.xlu0 %v170, 64
    %v418 = vpop.permute.xlu0 %417
    %v420 = vsel %vm173, %v413, 0
    %vm422 = vcmask 1043456
    %v424 = vsel %vm422, %v418, 0
    %426 = vmatprep.subr.bf16.mxu0 0
    %427 = vmatpush1.bf16.msra.mxu0 %v424
    %428 = vmatprep.subr.bf16.mxu0 0
    %429 = vmatpush1.bf16.msra.mxu0 0
    %430 = vmatprep.subr.bf16.mxu0 0
    %431 = vmatpush1.bf16.msra.mxu0 0
    %432 = vmatprep.subr.bf16.mxu0 0
    %433 = vmatpush1.bf16.msra.mxu0 0
    %434 = vmatprep.subr.bf16.mxu0 0
    %435 = vmatpush1.bf16.msra.mxu0 0
    %436 = vmatprep.subr.bf16.mxu0 0
    %437 = vmatpush1.bf16.msra.mxu0 0
    %438 = vmatprep.subr.bf16.mxu0 0
    %439 = vmatpush1.bf16.msra.mxu0 0
    %440 = vmatprep.subr.bf16.mxu0 0
    %441 = vmatpush1.bf16.msra.mxu0 0
    %442 = vmatprep.subr.bf16.mxu0 0
    %443 = vmatpush1.bf16.msra.mxu0 0
    %444 = vmatprep.subr.bf16.mxu0 0
    %445 = vmatpush1.bf16.msra.mxu0 0
    %446 = vmatprep.subr.bf16.mxu0 0
    %447 = vmatpush1.bf16.msra.mxu0 0
    %448 = vmatprep.subr.bf16.mxu0 0
    %449 = vmatpush1.bf16.msra.mxu0 0
    %450 = vmatprep.subr.bf16.mxu0 0
    %451 = vmatpush1.bf16.msra.mxu0 0
    %452 = vmatprep.subr.bf16.mxu0 0
    %453 = vmatpush1.bf16.msra.mxu0 0
    %454 = vmatprep.subr.bf16.mxu0 0
    %455 = vmatpush1.bf16.msra.mxu0 0
    %456 = vmatprep.subr.bf16.mxu0 0
    %457 = vmatpush1.bf16.msra.mxu0 0
    %458 = vmatprep.mubr.bf16.mxu0 0
    %459 = vmatmul.mubr.bf16.gmra.mrb[0].mxu0 %v420
    %v460 = vpop.f32.mrb[0].mxu0
    %v461 = vadd.f32 0.0, %v460
    %v462 = vpop.f32.mrb[0].mxu0
    %v463 = vpop.f32.mrb[0].mxu0
    %v464 = vpop.f32.mrb[0].mxu0
    %465 = vdwg.mxu0
    %466 = vrot.lane.b32.xlu0 %v222, 64
    %v467 = vpop.permute.xlu0 %466
    %v469 = vsel %vm173, %v414, 0
    %v472 = vsel %vm422, %v467, 0
    %474 = vmatprep.subr.bf16.mxu0 0
    %475 = vmatpush1.bf16.msra.mxu0 %v472
    %476 = vmatprep.subr.bf16.mxu0 0
    %477 = vmatpush1.bf16.msra.mxu0 0
    %478 = vmatprep.subr.bf16.mxu0 0
    %479 = vmatpush1.bf16.msra.mxu0 0
    %480 = vmatprep.subr.bf16.mxu0 0
    %481 = vmatpush1.bf16.msra.mxu0 0
    %482 = vmatprep.subr.bf16.mxu0 0
    %483 = vmatpush1.bf16.msra.mxu0 0
    %484 = vmatprep.subr.bf16.mxu0 0
    %485 = vmatpush1.bf16.msra.mxu0 0
    %486 = vmatprep.subr.bf16.mxu0 0
    %487 = vmatpush1.bf16.msra.mxu0 0
    %488 = vmatprep.subr.bf16.mxu0 0
    %489 = vmatpush1.bf16.msra.mxu0 0
    %490 = vmatprep.subr.bf16.mxu0 0
    %491 = vmatpush1.bf16.msra.mxu0 0
    %492 = vmatprep.subr.bf16.mxu0 0
    %493 = vmatpush1.bf16.msra.mxu0 0
    %494 = vmatprep.subr.bf16.mxu0 0
    %495 = vmatpush1.bf16.msra.mxu0 0
    %496 = vmatprep.subr.bf16.mxu0 0
    %497 = vmatpush1.bf16.msra.mxu0 0
    %498 = vmatprep.subr.bf16.mxu0 0
    %499 = vmatpush1.bf16.msra.mxu0 0
    %500 = vmatprep.subr.bf16.mxu0 0
    %501 = vmatpush1.bf16.msra.mxu0 0
    %502 = vmatprep.subr.bf16.mxu0 0
    %503 = vmatpush1.bf16.msra.mxu0 0
    %504 = vmatprep.subr.bf16.mxu0 0
    %505 = vmatpush1.bf16.msra.mxu0 0
    %506 = vmatprep.mubr.bf16.mxu0 0
    %507 = vmatmul.mubr.bf16.gmra.mrb[0].mxu0 %v469
    %v508 = vpop.f32.mrb[0].mxu0
    %v509 = vadd.f32 0.0, %v508
    %v510 = vpop.f32.mrb[0].mxu0
    %v511 = vpop.f32.mrb[0].mxu0
    %v512 = vpop.f32.mrb[0].mxu0
    %513 = vdwg.mxu0
    %514 = vrot.lane.b32.xlu0 %v273, 64
    %v515 = vpop.permute.xlu0 %514
    %v517 = vsel %vm173, %v415, 0
    %v520 = vsel %vm422, %v515, 0
    %522 = vmatprep.subr.bf16.mxu0 0
    %523 = vmatpush1.bf16.msra.mxu0 %v520
    %524 = vmatprep.subr.bf16.mxu0 0
    %525 = vmatpush1.bf16.msra.mxu0 0
    %526 = vmatprep.subr.bf16.mxu0 0
    %527 = vmatpush1.bf16.msra.mxu0 0
    %528 = vmatprep.subr.bf16.mxu0 0
    %529 = vmatpush1.bf16.msra.mxu0 0
    %530 = vmatprep.subr.bf16.mxu0 0
    %531 = vmatpush1.bf16.msra.mxu0 0
    %532 = vmatprep.subr.bf16.mxu0 0
    %533 = vmatpush1.bf16.msra.mxu0 0
    %534 = vmatprep.subr.bf16.mxu0 0
    %535 = vmatpush1.bf16.msra.mxu0 0
    %536 = vmatprep.subr.bf16.mxu0 0
    %537 = vmatpush1.bf16.msra.mxu0 0
    %538 = vmatprep.subr.bf16.mxu0 0
    %539 = vmatpush1.bf16.msra.mxu0 0
    %540 = vmatprep.subr.bf16.mxu0 0
    %541 = vmatpush1.bf16.msra.mxu0 0
    %542 = vmatprep.subr.bf16.mxu0 0
    %543 = vmatpush1.bf16.msra.mxu0 0
    %544 = vmatprep.subr.bf16.mxu0 0
    %545 = vmatpush1.bf16.msra.mxu0 0
    %546 = vmatprep.subr.bf16.mxu0 0
    %547 = vmatpush1.bf16.msra.mxu0 0
    %548 = vmatprep.subr.bf16.mxu0 0
    %549 = vmatpush1.bf16.msra.mxu0 0
    %550 = vmatprep.subr.bf16.mxu0 0
    %551 = vmatpush1.bf16.msra.mxu0 0
    %552 = vmatprep.subr.bf16.mxu0 0
    %553 = vmatpush1.bf16.msra.mxu0 0
    %554 = vmatprep.mubr.bf16.mxu0 0
    %555 = vmatmul.mubr.bf16.gmra.mrb[0].mxu0 %v517
    %v556 = vpop.f32.mrb[0].mxu0
    %v557 = vadd.f32 0.0, %v556
    %v558 = vpop.f32.mrb[0].mxu0
    %v559 = vpop.f32.mrb[0].mxu0
    %v560 = vpop.f32.mrb[0].mxu0
    %561 = vdwg.mxu0
    %562 = vrot.lane.b32.xlu0 %v324, 64
    %v563 = vpop.permute.xlu0 %562
    %v565 = vsel %vm173, %v416, 0
    %v568 = vsel %vm422, %v563, 0
    %570 = vmatprep.subr.bf16.mxu0 0
    %571 = vmatpush1.bf16.msra.mxu0 %v568
    %572 = vmatprep.subr.bf16.mxu0 0
    %573 = vmatpush1.bf16.msra.mxu0 0
    %574 = vmatprep.subr.bf16.mxu0 0
    %575 = vmatpush1.bf16.msra.mxu0 0
    %576 = vmatprep.subr.bf16.mxu0 0
    %577 = vmatpush1.bf16.msra.mxu0 0
    %578 = vmatprep.subr.bf16.mxu0 0
    %579 = vmatpush1.bf16.msra.mxu0 0
    %580 = vmatprep.subr.bf16.mxu0 0
    %581 = vmatpush1.bf16.msra.mxu0 0
    %582 = vmatprep.subr.bf16.mxu0 0
    %583 = vmatpush1.bf16.msra.mxu0 0
    %584 = vmatprep.subr.bf16.mxu0 0
    %585 = vmatpush1.bf16.msra.mxu0 0
    %586 = vmatprep.subr.bf16.mxu0 0
    %587 = vmatpush1.bf16.msra.mxu0 0
    %588 = vmatprep.subr.bf16.mxu0 0
    %589 = vmatpush1.bf16.msra.mxu0 0
    %590 = vmatprep.subr.bf16.mxu0 0
    %591 = vmatpush1.bf16.msra.mxu0 0
    %592 = vmatprep.subr.bf16.mxu0 0
    %593 = vmatpush1.bf16.msra.mxu0 0
    %594 = vmatprep.subr.bf16.mxu0 0
    %595 = vmatpush1.bf16.msra.mxu0 0
    %596 = vmatprep.subr.bf16.mxu0 0
    %597 = vmatpush1.bf16.msra.mxu0 0
    %598 = vmatprep.subr.bf16.mxu0 0
    %599 = vmatpush1.bf16.msra.mxu0 0
    %600 = vmatprep.subr.bf16.mxu0 0
    %601 = vmatpush1.bf16.msra.mxu0 0
    %602 = vmatprep.mubr.bf16.mxu0 0
    %603 = vmatmul.mubr.bf16.gmra.mrb[0].mxu0 %v565
    %v604 = vpop.f32.mrb[0].mxu0
    %v605 = vadd.f32 0.0, %v604
    %v606 = vpop.f32.mrb[0].mxu0
    %v607 = vpop.f32.mrb[0].mxu0
    %v608 = vpop.f32.mrb[0].mxu0
    %609 = vdwg.mxu0
    %v610 = vmul.f32 %v461, %v409
    %v611 = vmul.f32 %v509, %v410
    %v612 = vmul.f32 %v557, %v411
    %v613 = vmul.f32 %v605, %v412
    %v614 = vpack.c.bf16 %v610, %v610
    %v615 = vpack.c.bf16 %v611, %v611
    %v616 = vpack.c.bf16 %v612, %v612
    %v617 = vpack.c.bf16 %v613, %v613
    %v618 = vld [vmem:[#allocation2] sm:$0xf]
    %v619 = vld [vmem:[#allocation2 + $0x4] sm:$0xf]
    %v620 = vld [vmem:[#allocation2 + $0x8] sm:$0xf]
    %v621 = vld [vmem:[#allocation2 + $0xc] sm:$0xf]
    %v623 = vunpack.c.l.b16 %v618
    %v624 = vpack.c.b16 %v623, %v623
    %625 = vrot.lane.b32.xlu0 %v624, 120
    %v626 = vpop.permute.xlu0 %625
    %627 = vrot.lane.b32.xlu0 %v624, 88
    %v628 = vpop.permute.xlu0 %627
    %v630 = vsel %vm173, %v626, 0
    %v633 = vsel %vm173, %v628, 0
    %635 = vmatprep.subr.bf16.mxu0 0
    %636 = vmatpush1.bf16.xpose.msra.mxu0 %v633
    %637 = vmatprep.subr.bf16.mxu0 0
    %638 = vmatpush1.bf16.xpose.msra.mxu0 0
    %639 = vmatprep.subr.bf16.mxu0 0
    %640 = vmatpush1.bf16.xpose.msra.mxu0 0
    %641 = vmatprep.subr.bf16.mxu0 0
    %642 = vmatpush1.bf16.xpose.msra.mxu0 0
    %643 = vmatprep.subr.bf16.mxu0 0
    %644 = vmatpush1.bf16.xpose.msra.mxu0 0
    %645 = vmatprep.subr.bf16.mxu0 0
    %646 = vmatpush1.bf16.xpose.msra.mxu0 0
    %647 = vmatprep.subr.bf16.mxu0 0
    %648 = vmatpush1.bf16.xpose.msra.mxu0 0
    %649 = vmatprep.subr.bf16.mxu0 0
    %650 = vmatpush1.bf16.xpose.msra.mxu0 0
    %651 = vmatprep.subr.bf16.mxu0 0
    %652 = vmatpush1.bf16.xpose.msra.mxu0 0
    %653 = vmatprep.subr.bf16.mxu0 0
    %654 = vmatpush1.bf16.xpose.msra.mxu0 0
    %655 = vmatprep.subr.bf16.mxu0 0
    %656 = vmatpush1.bf16.xpose.msra.mxu0 0
    %657 = vmatprep.subr.bf16.mxu0 0
    %658 = vmatpush1.bf16.xpose.msra.mxu0 0
    %659 = vmatprep.subr.bf16.mxu0 0
    %660 = vmatpush1.bf16.xpose.msra.mxu0 0
    %661 = vmatprep.subr.bf16.mxu0 0
    %662 = vmatpush1.bf16.xpose.msra.mxu0 0
    %663 = vmatprep.subr.bf16.mxu0 0
    %664 = vmatpush1.bf16.xpose.msra.mxu0 0
    %665 = vmatprep.subr.bf16.mxu0 0
    %666 = vmatpush1.bf16.xpose.msra.mxu0 0
    %667 = vmatprep.mubr.bf16.mxu0 0
    %668 = vmatmul.mubr.bf16.gmra.mrb[0].mxu0 %v630
    %v669 = vpop.f32.mrb[0].mxu0
    %v670 = vadd.f32 0.0, %v669
    %v671 = vpop.f32.mrb[0].mxu0
    %v672 = vpop.f32.mrb[0].mxu0
    %v673 = vpop.f32.mrb[0].mxu0
    %674 = vdwg.mxu0
    %v676 = vunpack.c.l.b16 %v619
    %v677 = vpack.c.b16 %v676, %v676
    %678 = vrot.lane.b32.xlu0 %v677, 120
    %v679 = vpop.permute.xlu0 %678
    %680 = vrot.lane.b32.xlu0 %v677, 88
    %v681 = vpop.permute.xlu0 %680
    %v683 = vsel %vm173, %v679, 0
    %v686 = vsel %vm173, %v681, 0
    %688 = vmatprep.subr.bf16.mxu0 0
    %689 = vmatpush1.bf16.xpose.msra.mxu0 %v686
    %690 = vmatprep.subr.bf16.mxu0 0
    %691 = vmatpush1.bf16.xpose.msra.mxu0 0
    %692 = vmatprep.subr.bf16.mxu0 0
    %693 = vmatpush1.bf16.xpose.msra.mxu0 0
    %694 = vmatprep.subr.bf16.mxu0 0
    %695 = vmatpush1.bf16.xpose.msra.mxu0 0
    %696 = vmatprep.subr.bf16.mxu0 0
    %697 = vmatpush1.bf16.xpose.msra.mxu0 0
    %698 = vmatprep.subr.bf16.mxu0 0
    %699 = vmatpush1.bf16.xpose.msra.mxu0 0
    %700 = vmatprep.subr.bf16.mxu0 0
    %701 = vmatpush1.bf16.xpose.msra.mxu0 0
    %702 = vmatprep.subr.bf16.mxu0 0
    %703 = vmatpush1.bf16.xpose.msra.mxu0 0
    %704 = vmatprep.subr.bf16.mxu0 0
    %705 = vmatpush1.bf16.xpose.msra.mxu0 0
    %706 = vmatprep.subr.bf16.mxu0 0
    %707 = vmatpush1.bf16.xpose.msra.mxu0 0
    %708 = vmatprep.subr.bf16.mxu0 0
    %709 = vmatpush1.bf16.xpose.msra.mxu0 0
    %710 = vmatprep.subr.bf16.mxu0 0
    %711 = vmatpush1.bf16.xpose.msra.mxu0 0
    %712 = vmatprep.subr.bf16.mxu0 0
    %713 = vmatpush1.bf16.xpose.msra.mxu0 0
    %714 = vmatprep.subr.bf16.mxu0 0
    %715 = vmatpush1.bf16.xpose.msra.mxu0 0
    %716 = vmatprep.subr.bf16.mxu0 0
    %717 = vmatpush1.bf16.xpose.msra.mxu0 0
    %718 = vmatprep.subr.bf16.mxu0 0
    %719 = vmatpush1.bf16.xpose.msra.mxu0 0
    %720 = vmatprep.mubr.bf16.mxu0 0
    %721 = vmatmul.mubr.bf16.gmra.mrb[0].mxu0 %v683
    %v722 = vpop.f32.mrb[0].mxu0
    %v723 = vadd.f32 0.0, %v722
    %v724 = vpop.f32.mrb[0].mxu0
    %v725 = vpop.f32.mrb[0].mxu0
    %v726 = vpop.f32.mrb[0].mxu0
    %727 = vdwg.mxu0
    %v729 = vunpack.c.l.b16 %v620
    %v730 = vpack.c.b16 %v729, %v729
    %731 = vrot.lane.b32.xlu0 %v730, 120
    %v732 = vpop.permute.xlu0 %731
    %733 = vrot.lane.b32.xlu0 %v730, 88
    %v734 = vpop.permute.xlu0 %733
    %v736 = vsel %vm173, %v732, 0
    %v739 = vsel %vm173, %v734, 0
    %741 = vmatprep.subr.bf16.mxu0 0
    %742 = vmatpush1.bf16.xpose.msra.mxu0 %v739
    %743 = vmatprep.subr.bf16.mxu0 0
    %744 = vmatpush1.bf16.xpose.msra.mxu0 0
    %745 = vmatprep.subr.bf16.mxu0 0
    %746 = vmatpush1.bf16.xpose.msra.mxu0 0
    %747 = vmatprep.subr.bf16.mxu0 0
    %748 = vmatpush1.bf16.xpose.msra.mxu0 0
    %749 = vmatprep.subr.bf16.mxu0 0
    %750 = vmatpush1.bf16.xpose.msra.mxu0 0
    %751 = vmatprep.subr.bf16.mxu0 0
    %752 = vmatpush1.bf16.xpose.msra.mxu0 0
    %753 = vmatprep.subr.bf16.mxu0 0
    %754 = vmatpush1.bf16.xpose.msra.mxu0 0
    %755 = vmatprep.subr.bf16.mxu0 0
    %756 = vmatpush1.bf16.xpose.msra.mxu0 0
    %757 = vmatprep.subr.bf16.mxu0 0
    %758 = vmatpush1.bf16.xpose.msra.mxu0 0
    %759 = vmatprep.subr.bf16.mxu0 0
    %760 = vmatpush1.bf16.xpose.msra.mxu0 0
    %761 = vmatprep.subr.bf16.mxu0 0
    %762 = vmatpush1.bf16.xpose.msra.mxu0 0
    %763 = vmatprep.subr.bf16.mxu0 0
    %764 = vmatpush1.bf16.xpose.msra.mxu0 0
    %765 = vmatprep.subr.bf16.mxu0 0
    %766 = vmatpush1.bf16.xpose.msra.mxu0 0
    %767 = vmatprep.subr.bf16.mxu0 0
    %768 = vmatpush1.bf16.xpose.msra.mxu0 0
    %769 = vmatprep.subr.bf16.mxu0 0
    %770 = vmatpush1.bf16.xpose.msra.mxu0 0
    %771 = vmatprep.subr.bf16.mxu0 0
    %772 = vmatpush1.bf16.xpose.msra.mxu0 0
    %773 = vmatprep.mubr.bf16.mxu0 0
    %774 = vmatmul.mubr.bf16.gmra.mrb[0].mxu0 %v736
    %v775 = vpop.f32.mrb[0].mxu0
    %v776 = vadd.f32 0.0, %v775
    %v777 = vpop.f32.mrb[0].mxu0
    %v778 = vpop.f32.mrb[0].mxu0
    %v779 = vpop.f32.mrb[0].mxu0
    %780 = vdwg.mxu0
    %v782 = vunpack.c.l.b16 %v621
    %v783 = vpack.c.b16 %v782, %v782
    %784 = vrot.lane.b32.xlu0 %v783, 120
    %v785 = vpop.permute.xlu0 %784
    %786 = vrot.lane.b32.xlu0 %v783, 88
    %v787 = vpop.permute.xlu0 %786
    %v789 = vsel %vm173, %v785, 0
    %v792 = vsel %vm173, %v787, 0
    %794 = vmatprep.subr.bf16.mxu0 0
    %795 = vmatpush1.bf16.xpose.msra.mxu0 %v792
    %796 = vmatprep.subr.bf16.mxu0 0
    %797 = vmatpush1.bf16.xpose.msra.mxu0 0
    %798 = vmatprep.subr.bf16.mxu0 0
    %799 = vmatpush1.bf16.xpose.msra.mxu0 0
    %800 = vmatprep.subr.bf16.mxu0 0
    %801 = vmatpush1.bf16.xpose.msra.mxu0 0
    %802 = vmatprep.subr.bf16.mxu0 0
    %803 = vmatpush1.bf16.xpose.msra.mxu0 0
    %804 = vmatprep.subr.bf16.mxu0 0
    %805 = vmatpush1.bf16.xpose.msra.mxu0 0
    %806 = vmatprep.subr.bf16.mxu0 0
    %807 = vmatpush1.bf16.xpose.msra.mxu0 0
    %808 = vmatprep.subr.bf16.mxu0 0
    %809 = vmatpush1.bf16.xpose.msra.mxu0 0
    %810 = vmatprep.subr.bf16.mxu0 0
    %811 = vmatpush1.bf16.xpose.msra.mxu0 0
    %812 = vmatprep.subr.bf16.mxu0 0
    %813 = vmatpush1.bf16.xpose.msra.mxu0 0
    %814 = vmatprep.subr.bf16.mxu0 0
    %815 = vmatpush1.bf16.xpose.msra.mxu0 0
    %816 = vmatprep.subr.bf16.mxu0 0
    %817 = vmatpush1.bf16.xpose.msra.mxu0 0
    %818 = vmatprep.subr.bf16.mxu0 0
    %819 = vmatpush1.bf16.xpose.msra.mxu0 0
    %820 = vmatprep.subr.bf16.mxu0 0
    %821 = vmatpush1.bf16.xpose.msra.mxu0 0
    %822 = vmatprep.subr.bf16.mxu0 0
    %823 = vmatpush1.bf16.xpose.msra.mxu0 0
    %824 = vmatprep.subr.bf16.mxu0 0
    %825 = vmatpush1.bf16.xpose.msra.mxu0 0
    %826 = vmatprep.mubr.bf16.mxu0 0
    %827 = vmatmul.mubr.bf16.gmra.mrb[0].mxu0 %v789
    %v828 = vpop.f32.mrb[0].mxu0
    %v829 = vadd.f32 0.0, %v828
    %v830 = vpop.f32.mrb[0].mxu0
    %v831 = vpop.f32.mrb[0].mxu0
    %v832 = vpop.f32.mrb[0].mxu0
    %833 = vdwg.mxu0
    %v834 = vsel %vm173, %v670, -inf
    %835 = vmax.xlane.f32.xlu0 %v834
    %v836 = vpop.xlane.xlu0 %835
    %v837 = vsel %vm173, %v723, -inf
    %838 = vmax.xlane.f32.xlu0 %v837
    %v839 = vpop.xlane.xlu0 %838
    %v840 = vsel %vm173, %v776, -inf
    %841 = vmax.xlane.f32.xlu0 %v840
    %v842 = vpop.xlane.xlu0 %841
    %v843 = vsel %vm173, %v829, -inf
    %844 = vmax.xlane.f32.xlu0 %v843
    %v845 = vpop.xlane.xlu0 %844
    %v846 = vsub.f32 %v670, %v836
    %v847 = vsub.f32 %v723, %v839
    %v848 = vsub.f32 %v776, %v842
    %v849 = vsub.f32 %v829, %v845
    %v850 = vmul.f32 %v846, 1.442695
    %v851 = vpow.pop %v850
    %v852 = vmul.f32 %v847, 1.442695
    %v853 = vpow.pop %v852
    %v854 = vmul.f32 %v848, 1.442695
    %v855 = vpow.pop %v854
    %v856 = vmul.f32 %v849, 1.442695
    %v857 = vpow.pop %v856
    %v858 = vsel %vm173, %v851, 0.0
    %859 = vadd.xlane.f32.xlu0 %v858
    %v860 = vpop.xlane.xlu0 %859
    %v861 = vsel %vm173, %v853, 0.0
    %862 = vadd.xlane.f32.xlu0 %v861
    %v863 = vpop.xlane.xlu0 %862
    %v864 = vsel %vm173, %v855, 0.0
    %865 = vadd.xlane.f32.xlu0 %v864
    %v866 = vpop.xlane.xlu0 %865
    %v867 = vsel %vm173, %v857, 0.0
    %868 = vadd.xlane.f32.xlu0 %v867
    %v869 = vpop.xlane.xlu0 %868
    %v870 = vrcp.pop %v860
    %v871 = vrcp.pop %v863
    %v872 = vrcp.pop %v866
    %v873 = vrcp.pop %v869
    %v874 = vpack.c.bf16 %v851, %v851
    %v875 = vpack.c.bf16 %v853, %v853
    %v876 = vpack.c.bf16 %v855, %v855
    %v877 = vpack.c.bf16 %v857, %v857
    %878 = vrot.lane.b32.xlu0 %v624, 56
    %v879 = vpop.permute.xlu0 %878
    %v881 = vsel %vm173, %v874, 0
    %v884 = vsel %vm422, %v879, 0
    %886 = vmatprep.subr.bf16.mxu0 0
    %887 = vmatpush1.bf16.msra.mxu0 %v884
    %888 = vmatprep.subr.bf16.mxu0 0
    %889 = vmatpush1.bf16.msra.mxu0 0
    %890 = vmatprep.subr.bf16.mxu0 0
    %891 = vmatpush1.bf16.msra.mxu0 0
    %892 = vmatprep.subr.bf16.mxu0 0
    %893 = vmatpush1.bf16.msra.mxu0 0
    %894 = vmatprep.subr.bf16.mxu0 0
    %895 = vmatpush1.bf16.msra.mxu0 0
    %896 = vmatprep.subr.bf16.mxu0 0
    %897 = vmatpush1.bf16.msra.mxu0 0
    %898 = vmatprep.subr.bf16.mxu0 0
    %899 = vmatpush1.bf16.msra.mxu0 0
    %900 = vmatprep.subr.bf16.mxu0 0
    %901 = vmatpush1.bf16.msra.mxu0 0
    %902 = vmatprep.subr.bf16.mxu0 0
    %903 = vmatpush1.bf16.msra.mxu0 0
    %904 = vmatprep.subr.bf16.mxu0 0
    %905 = vmatpush1.bf16.msra.mxu0 0
    %906 = vmatprep.subr.bf16.mxu0 0
    %907 = vmatpush1.bf16.msra.mxu0 0
    %908 = vmatprep.subr.bf16.mxu0 0
    %909 = vmatpush1.bf16.msra.mxu0 0
    %910 = vmatprep.subr.bf16.mxu0 0
    %911 = vmatpush1.bf16.msra.mxu0 0
    %912 = vmatprep.subr.bf16.mxu0 0
    %913 = vmatpush1.bf16.msra.mxu0 0
    %914 = vmatprep.subr.bf16.mxu0 0
    %915 = vmatpush1.bf16.msra.mxu0 0
    %916 = vmatprep.subr.bf16.mxu0 0
    %917 = vmatpush1.bf16.msra.mxu0 0
    %918 = vmatprep.mubr.bf16.mxu0 0
    %919 = vmatmul.mubr.bf16.gmra.mrb[0].mxu0 %v881
    %v920 = vpop.f32.mrb[0].mxu0
    %v921 = vadd.f32 0.0, %v920
    %v922 = vpop.f32.mrb[0].mxu0
    %v923 = vpop.f32.mrb[0].mxu0
    %v924 = vpop.f32.mrb[0].mxu0
    %925 = vdwg.mxu0
    %926 = vrot.lane.b32.xlu0 %v677, 56
    %v927 = vpop.permute.xlu0 %926
    %v929 = vsel %vm173, %v875, 0
    %v932 = vsel %vm422, %v927, 0
    %934 = vmatprep.subr.bf16.mxu0 0
    %935 = vmatpush1.bf16.msra.mxu0 %v932
    %936 = vmatprep.subr.bf16.mxu0 0
    %937 = vmatpush1.bf16.msra.mxu0 0
    %938 = vmatprep.subr.bf16.mxu0 0
    %939 = vmatpush1.bf16.msra.mxu0 0
    %940 = vmatprep.subr.bf16.mxu0 0
    %941 = vmatpush1.bf16.msra.mxu0 0
    %942 = vmatprep.subr.bf16.mxu0 0
    %943 = vmatpush1.bf16.msra.mxu0 0
    %944 = vmatprep.subr.bf16.mxu0 0
    %945 = vmatpush1.bf16.msra.mxu0 0
    %946 = vmatprep.subr.bf16.mxu0 0
    %947 = vmatpush1.bf16.msra.mxu0 0
    %948 = vmatprep.subr.bf16.mxu0 0
    %949 = vmatpush1.bf16.msra.mxu0 0
    %950 = vmatprep.subr.bf16.mxu0 0
    %951 = vmatpush1.bf16.msra.mxu0 0
    %952 = vmatprep.subr.bf16.mxu0 0
    %953 = vmatpush1.bf16.msra.mxu0 0
    %954 = vmatprep.subr.bf16.mxu0 0
    %955 = vmatpush1.bf16.msra.mxu0 0
    %956 = vmatprep.subr.bf16.mxu0 0
    %957 = vmatpush1.bf16.msra.mxu0 0
    %958 = vmatprep.subr.bf16.mxu0 0
    %959 = vmatpush1.bf16.msra.mxu0 0
    %960 = vmatprep.subr.bf16.mxu0 0
    %961 = vmatpush1.bf16.msra.mxu0 0
    %962 = vmatprep.subr.bf16.mxu0 0
    %963 = vmatpush1.bf16.msra.mxu0 0
    %964 = vmatprep.subr.bf16.mxu0 0
    %965 = vmatpush1.bf16.msra.mxu0 0
    %966 = vmatprep.mubr.bf16.mxu0 0
    %967 = vmatmul.mubr.bf16.gmra.mrb[0].mxu0 %v929
    %v968 = vpop.f32.mrb[0].mxu0
    %v969 = vadd.f32 0.0, %v968
    %v970 = vpop.f32.mrb[0].mxu0
    %v971 = vpop.f32.mrb[0].mxu0
    %v972 = vpop.f32.mrb[0].mxu0
    %973 = vdwg.mxu0
    %974 = vrot.lane.b32.xlu0 %v730, 56
    %v975 = vpop.permute.xlu0 %974
    %v977 = vsel %vm173, %v876, 0
    %v980 = vsel %vm422, %v975, 0
    %982 = vmatprep.subr.bf16.mxu0 0
    %983 = vmatpush1.bf16.msra.mxu0 %v980
    %984 = vmatprep.subr.bf16.mxu0 0
    %985 = vmatpush1.bf16.msra.mxu0 0
    %986 = vmatprep.subr.bf16.mxu0 0
    %987 = vmatpush1.bf16.msra.mxu0 0
    %988 = vmatprep.subr.bf16.mxu0 0
    %989 = vmatpush1.bf16.msra.mxu0 0
    %990 = vmatprep.subr.bf16.mxu0 0
    %991 = vmatpush1.bf16.msra.mxu0 0
    %992 = vmatprep.subr.bf16.mxu0 0
    %993 = vmatpush1.bf16.msra.mxu0 0
    %994 = vmatprep.subr.bf16.mxu0 0
    %995 = vmatpush1.bf16.msra.mxu0 0
    %996 = vmatprep.subr.bf16.mxu0 0
    %997 = vmatpush1.bf16.msra.mxu0 0
    %998 = vmatprep.subr.bf16.mxu0 0
    %999 = vmatpush1.bf16.msra.mxu0 0
    %1000 = vmatprep.subr.bf16.mxu0 0
    %1001 = vmatpush1.bf16.msra.mxu0 0
    %1002 = vmatprep.subr.bf16.mxu0 0
    %1003 = vmatpush1.bf16.msra.mxu0 0
    %1004 = vmatprep.subr.bf16.mxu0 0
    %1005 = vmatpush1.bf16.msra.mxu0 0
    %1006 = vmatprep.subr.bf16.mxu0 0
    %1007 = vmatpush1.bf16.msra.mxu0 0
    %1008 = vmatprep.subr.bf16.mxu0 0
    %1009 = vmatpush1.bf16.msra.mxu0 0
    %1010 = vmatprep.subr.bf16.mxu0 0
    %1011 = vmatpush1.bf16.msra.mxu0 0
    %1012 = vmatprep.subr.bf16.mxu0 0
    %1013 = vmatpush1.bf16.msra.mxu0 0
    %1014 = vmatprep.mubr.bf16.mxu0 0
    %1015 = vmatmul.mubr.bf16.gmra.mrb[0].mxu0 %v977
    %v1016 = vpop.f32.mrb[0].mxu0
    %v1017 = vadd.f32 0.0, %v1016
    %v1018 = vpop.f32.mrb[0].mxu0
    %v1019 = vpop.f32.mrb[0].mxu0
    %v1020 = vpop.f32.mrb[0].mxu0
    %1021 = vdwg.mxu0
    %1022 = vrot.lane.b32.xlu0 %v783, 56
    %v1023 = vpop.permute.xlu0 %1022
    %v1025 = vsel %vm173, %v877, 0
    %v1028 = vsel %vm422, %v1023, 0
    %1030 = vmatprep.subr.bf16.mxu0 0
    %1031 = vmatpush1.bf16.msra.mxu0 %v1028
    %1032 = vmatprep.subr.bf16.mxu0 0
    %1033 = vmatpush1.bf16.msra.mxu0 0
    %1034 = vmatprep.subr.bf16.mxu0 0
    %1035 = vmatpush1.bf16.msra.mxu0 0
    %1036 = vmatprep.subr.bf16.mxu0 0
    %1037 = vmatpush1.bf16.msra.mxu0 0
    %1038 = vmatprep.subr.bf16.mxu0 0
    %1039 = vmatpush1.bf16.msra.mxu0 0
    %1040 = vmatprep.subr.bf16.mxu0 0
    %1041 = vmatpush1.bf16.msra.mxu0 0
    %1042 = vmatprep.subr.bf16.mxu0 0
    %1043 = vmatpush1.bf16.msra.mxu0 0
    %1044 = vmatprep.subr.bf16.mxu0 0
    %1045 = vmatpush1.bf16.msra.mxu0 0
    %1046 = vmatprep.subr.bf16.mxu0 0
    %1047 = vmatpush1.bf16.msra.mxu0 0
    %1048 = vmatprep.subr.bf16.mxu0 0
    %1049 = vmatpush1.bf16.msra.mxu0 0
    %1050 = vmatprep.subr.bf16.mxu0 0
    %1051 = vmatpush1.bf16.msra.mxu0 0
    %1052 = vmatprep.subr.bf16.mxu0 0
    %1053 = vmatpush1.bf16.msra.mxu0 0
    %1054 = vmatprep.subr.bf16.mxu0 0
    %1055 = vmatpush1.bf16.msra.mxu0 0
    %1056 = vmatprep.subr.bf16.mxu0 0
    %1057 = vmatpush1.bf16.msra.mxu0 0
    %1058 = vmatprep.subr.bf16.mxu0 0
    %1059 = vmatpush1.bf16.msra.mxu0 0
    %1060 = vmatprep.subr.bf16.mxu0 0
    %1061 = vmatpush1.bf16.msra.mxu0 0
    %1062 = vmatprep.mubr.bf16.mxu0 0
    %1063 = vmatmul.mubr.bf16.gmra.mrb[0].mxu0 %v1025
    %v1064 = vpop.f32.mrb[0].mxu0
    %v1065 = vadd.f32 0.0, %v1064
    %v1066 = vpop.f32.mrb[0].mxu0
    %v1067 = vpop.f32.mrb[0].mxu0
    %v1068 = vpop.f32.mrb[0].mxu0
    %1069 = vdwg.mxu0
    %v1070 = vmul.f32 %v921, %v870
    %v1071 = vmul.f32 %v969, %v871
    %v1072 = vmul.f32 %v1017, %v872
    %v1073 = vmul.f32 %v1065, %v873
    %v1074 = vpack.c.bf16 %v1070, %v1070
    %v1075 = vpack.c.bf16 %v1071, %v1071
    %v1076 = vpack.c.bf16 %v1072, %v1072
    %v1077 = vpack.c.bf16 %v1073, %v1073
    %v1078 = vld [vmem:[#allocation2] sm:$0xf]
    %v1079 = vld [vmem:[#allocation2 + $0x4] sm:$0xf]
    %v1080 = vld [vmem:[#allocation2 + $0x8] sm:$0xf]
    %v1081 = vld [vmem:[#allocation2 + $0xc] sm:$0xf]
    %v1083 = vunpack.c.l.b16 %v1078
    %v1084 = vpack.c.b16 %v1083, %v1083
    %1085 = vrot.lane.b32.xlu0 %v1084, 112
    %v1086 = vpop.permute.xlu0 %1085
    %1087 = vrot.lane.b32.xlu0 %v1084, 80
    %v1088 = vpop.permute.xlu0 %1087
    %v1090 = vsel %vm173, %v1086, 0
    %v1093 = vsel %vm173, %v1088, 0
    %1095 = vmatprep.subr.bf16.mxu0 0
    %1096 = vmatpush1.bf16.xpose.msra.mxu0 %v1093
    %1097 = vmatprep.subr.bf16.mxu0 0
    %1098 = vmatpush1.bf16.xpose.msra.mxu0 0
    %1099 = vmatprep.subr.bf16.mxu0 0
    %1100 = vmatpush1.bf16.xpose.msra.mxu0 0
    %1101 = vmatprep.subr.bf16.mxu0 0
    %1102 = vmatpush1.bf16.xpose.msra.mxu0 0
    %1103 = vmatprep.subr.bf16.mxu0 0
    %1104 = vmatpush1.bf16.xpose.msra.mxu0 0
    %1105 = vmatprep.subr.bf16.mxu0 0
    %1106 = vmatpush1.bf16.xpose.msra.mxu0 0
    %1107 = vmatprep.subr.bf16.mxu0 0
    %1108 = vmatpush1.bf16.xpose.msra.mxu0 0
    %1109 = vmatprep.subr.bf16.mxu0 0
    %1110 = vmatpush1.bf16.xpose.msra.mxu0 0
    %1111 = vmatprep.subr.bf16.mxu0 0
    %1112 = vmatpush1.bf16.xpose.msra.mxu0 0
    %1113 = vmatprep.subr.bf16.mxu0 0
    %1114 = vmatpush1.bf16.xpose.msra.mxu0 0
    %1115 = vmatprep.subr.bf16.mxu0 0
    %1116 = vmatpush1.bf16.xpose.msra.mxu0 0
    %1117 = vmatprep.subr.bf16.mxu0 0
    %1118 = vmatpush1.bf16.xpose.msra.mxu0 0
    %1119 = vmatprep.subr.bf16.mxu0 0
    %1120 = vmatpush1.bf16.xpose.msra.mxu0 0
    %1121 = vmatprep.subr.bf16.mxu0 0
    %1122 = vmatpush1.bf16.xpose.msra.mxu0 0
    %1123 = vmatprep.subr.bf16.mxu0 0
    %1124 = vmatpush1.bf16.xpose.msra.mxu0 0
    %1125 = vmatprep.subr.bf16.mxu0 0
    %1126 = vmatpush1.bf16.xpose.msra.mxu0 0
    %1127 = vmatprep.mubr.bf16.mxu0 0
    %1128 = vmatmul.mubr.bf16.gmra.mrb[0].mxu0 %v1090
    %v1129 = vpop.f32.mrb[0].mxu0
    %v1130 = vadd.f32 0.0, %v1129
    %v1131 = vpop.f32.mrb[0].mxu0
    %v1132 = vpop.f32.mrb[0].mxu0
    %v1133 = vpop.f32.mrb[0].mxu0
    %1134 = vdwg.mxu0
    %v1136 = vunpack.c.l.b16 %v1079
    %v1137 = vpack.c.b16 %v1136, %v1136
    %1138 = vrot.lane.b32.xlu0 %v1137, 112
    %v1139 = vpop.permute.xlu0 %1138
    %1140 = vrot.lane.b32.xlu0 %v1137, 80
    %v1141 = vpop.permute.xlu0 %1140
    %v1143 = vsel %vm173, %v1139, 0
    %v1146 = vsel %vm173, %v1141, 0
    %1148 = vmatprep.subr.bf16.mxu0 0
    %1149 = vmatpush1.bf16.xpose.msra.mxu0 %v1146
    %1150 = vmatprep.subr.bf16.mxu0 0
    %1151 = vmatpush1.bf16.xpose.msra.mxu0 0
    %1152 = vmatprep.subr.bf16.mxu0 0
    %1153 = vmatpush1.bf16.xpose.msra.mxu0 0
    %1154 = vmatprep.subr.bf16.mxu0 0
    %1155 = vmatpush1.bf16.xpose.msra.mxu0 0
    %1156 = vmatprep.subr.bf16.mxu0 0
    %1157 = vmatpush1.bf16.xpose.msra.mxu0 0
    %1158 = vmatprep.subr.bf16.mxu0 0
    %1159 = vmatpush1.bf16.xpose.msra.mxu0 0
    %1160 = vmatprep.subr.bf16.mxu0 0
    %1161 = vmatpush1.bf16.xpose.msra.mxu0 0
    %1162 = vmatprep.subr.bf16.mxu0 0
    %1163 = vmatpush1.bf16.xpose.msra.mxu0 0
    %1164 = vmatprep.subr.bf16.mxu0 0
    %1165 = vmatpush1.bf16.xpose.msra.mxu0 0
    %1166 = vmatprep.subr.bf16.mxu0 0
    %1167 = vmatpush1.bf16.xpose.msra.mxu0 0
    %1168 = vmatprep.subr.bf16.mxu0 0
    %1169 = vmatpush1.bf16.xpose.msra.mxu0 0
    %1170 = vmatprep.subr.bf16.mxu0 0
    %1171 = vmatpush1.bf16.xpose.msra.mxu0 0
    %1172 = vmatprep.subr.bf16.mxu0 0
    %1173 = vmatpush1.bf16.xpose.msra.mxu0 0
    %1174 = vmatprep.subr.bf16.mxu0 0
    %1175 = vmatpush1.bf16.xpose.msra.mxu0 0
    %1176 = vmatprep.subr.bf16.mxu0 0
    %1177 = vmatpush1.bf16.xpose.msra.mxu0 0
    %1178 = vmatprep.subr.bf16.mxu0 0
    %1179 = vmatpush1.bf16.xpose.msra.mxu0 0
    %1180 = vmatprep.mubr.bf16.mxu0 0
    %1181 = vmatmul.mubr.bf16.gmra.mrb[0].mxu0 %v1143
    %v1182 = vpop.f32.mrb[0].mxu0
    %v1183 = vadd.f32 0.0, %v1182
    %v1184 = vpop.f32.mrb[0].mxu0
    %v1185 = vpop.f32.mrb[0].mxu0
    %v1186 = vpop.f32.mrb[0].mxu0
    %1187 = vdwg.mxu0
    %v1189 = vunpack.c.l.b16 %v1080
    %v1190 = vpack.c.b16 %v1189, %v1189
    %1191 = vrot.lane.b32.xlu0 %v1190, 112
    %v1192 = vpop.permute.xlu0 %1191
    %1193 = vrot.lane.b32.xlu0 %v1190, 80
    %v1194 = vpop.permute.xlu0 %1193
    %v1196 = vsel %vm173, %v1192, 0
    %v1199 = vsel %vm173, %v1194, 0
    %1201 = vmatprep.subr.bf16.mxu0 0
    %1202 = vmatpush1.bf16.xpose.msra.mxu0 %v1199
    %1203 = vmatprep.subr.bf16.mxu0 0
    %1204 = vmatpush1.bf16.xpose.msra.mxu0 0
    %1205 = vmatprep.subr.bf16.mxu0 0
    %1206 = vmatpush1.bf16.xpose.msra.mxu0 0
    %1207 = vmatprep.subr.bf16.mxu0 0
    %1208 = vmatpush1.bf16.xpose.msra.mxu0 0
    %1209 = vmatprep.subr.bf16.mxu0 0
    %1210 = vmatpush1.bf16.xpose.msra.mxu0 0
    %1211 = vmatprep.subr.bf16.mxu0 0
    %1212 = vmatpush1.bf16.xpose.msra.mxu0 0
    %1213 = vmatprep.subr.bf16.mxu0 0
    %1214 = vmatpush1.bf16.xpose.msra.mxu0 0
    %1215 = vmatprep.subr.bf16.mxu0 0
    %1216 = vmatpush1.bf16.xpose.msra.mxu0 0
    %1217 = vmatprep.subr.bf16.mxu0 0
    %1218 = vmatpush1.bf16.xpose.msra.mxu0 0
    %1219 = vmatprep.subr.bf16.mxu0 0
    %1220 = vmatpush1.bf16.xpose.msra.mxu0 0
    %1221 = vmatprep.subr.bf16.mxu0 0
    %1222 = vmatpush1.bf16.xpose.msra.mxu0 0
    %1223 = vmatprep.subr.bf16.mxu0 0
    %1224 = vmatpush1.bf16.xpose.msra.mxu0 0
    %1225 = vmatprep.subr.bf16.mxu0 0
    %1226 = vmatpush1.bf16.xpose.msra.mxu0 0
    %1227 = vmatprep.subr.bf16.mxu0 0
    %1228 = vmatpush1.bf16.xpose.msra.mxu0 0
    %1229 = vmatprep.subr.bf16.mxu0 0
    %1230 = vmatpush1.bf16.xpose.msra.mxu0 0
    %1231 = vmatprep.subr.bf16.mxu0 0
    %1232 = vmatpush1.bf16.xpose.msra.mxu0 0
    %1233 = vmatprep.mubr.bf16.mxu0 0
    %1234 = vmatmul.mubr.bf16.gmra.mrb[0].mxu0 %v1196
    %v1235 = vpop.f32.mrb[0].mxu0
    %v1236 = vadd.f32 0.0, %v1235
    %v1237 = vpop.f32.mrb[0].mxu0
    %v1238 = vpop.f32.mrb[0].mxu0
    %v1239 = vpop.f32.mrb[0].mxu0
    %1240 = vdwg.mxu0
    %v1242 = vunpack.c.l.b16 %v1081
    %v1243 = vpack.c.b16 %v1242, %v1242
    %1244 = vrot.lane.b32.xlu0 %v1243, 112
    %v1245 = vpop.permute.xlu0 %1244
    %1246 = vrot.lane.b32.xlu0 %v1243, 80
    %v1247 = vpop.permute.xlu0 %1246
    %v1249 = vsel %vm173, %v1245, 0
    %v1252 = vsel %vm173, %v1247, 0
    %1254 = vmatprep.subr.bf16.mxu0 0
    %1255 = vmatpush1.bf16.xpose.msra.mxu0 %v1252
    %1256 = vmatprep.subr.bf16.mxu0 0
    %1257 = vmatpush1.bf16.xpose.msra.mxu0 0
    %1258 = vmatprep.subr.bf16.mxu0 0
    %1259 = vmatpush1.bf16.xpose.msra.mxu0 0
    %1260 = vmatprep.subr.bf16.mxu0 0
    %1261 = vmatpush1.bf16.xpose.msra.mxu0 0
    %1262 = vmatprep.subr.bf16.mxu0 0
    %1263 = vmatpush1.bf16.xpose.msra.mxu0 0
    %1264 = vmatprep.subr.bf16.mxu0 0
    %1265 = vmatpush1.bf16.xpose.msra.mxu0 0
    %1266 = vmatprep.subr.bf16.mxu0 0
    %1267 = vmatpush1.bf16.xpose.msra.mxu0 0
    %1268 = vmatprep.subr.bf16.mxu0 0
    %1269 = vmatpush1.bf16.xpose.msra.mxu0 0
    %1270 = vmatprep.subr.bf16.mxu0 0
    %1271 = vmatpush1.bf16.xpose.msra.mxu0 0
    %1272 = vmatprep.subr.bf16.mxu0 0
    %1273 = vmatpush1.bf16.xpose.msra.mxu0 0
    %1274 = vmatprep.subr.bf16.mxu0 0
    %1275 = vmatpush1.bf16.xpose.msra.mxu0 0
    %1276 = vmatprep.subr.bf16.mxu0 0
    %1277 = vmatpush1.bf16.xpose.msra.mxu0 0
    %1278 = vmatprep.subr.bf16.mxu0 0
    %1279 = vmatpush1.bf16.xpose.msra.mxu0 0
    %1280 = vmatprep.subr.bf16.mxu0 0
    %1281 = vmatpush1.bf16.xpose.msra.mxu0 0
    %1282 = vmatprep.subr.bf16.mxu0 0
    %1283 = vmatpush1.bf16.xpose.msra.mxu0 0
    %1284 = vmatprep.subr.bf16.mxu0 0
    %1285 = vmatpush1.bf16.xpose.msra.mxu0 0
    %1286 = vmatprep.mubr.bf16.mxu0 0
    %1287 = vmatmul.mubr.bf16.gmra.mrb[0].mxu0 %v1249
    %v1288 = vpop.f32.mrb[0].mxu0
    %v1289 = vadd.f32 0.0, %v1288
    %v1290 = vpop.f32.mrb[0].mxu0
    %v1291 = vpop.f32.mrb[0].mxu0
    %v1292 = vpop.f32.mrb[0].mxu0
    %1293 = vdwg.mxu0
    %v1294 = vsel %vm173, %v1130, -inf
    %1295 = vmax.xlane.f32.xlu0 %v1294
    %v1296 = vpop.xlane.xlu0 %1295
    %v1297 = vsel %vm173, %v1183, -inf
    %1298 = vmax.xlane.f32.xlu0 %v1297
    %v1299 = vpop.xlane.xlu0 %1298
    %v1300 = vsel %vm173, %v1236, -inf
    %1301 = vmax.xlane.f32.xlu0 %v1300
    %v1302 = vpop.xlane.xlu0 %1301
    %v1303 = vsel %vm173, %v1289, -inf
    %1304 = vmax.xlane.f32.xlu0 %v1303
    %v1305 = vpop.xlane.xlu0 %1304
    %v1306 = vsub.f32 %v1130, %v1296
    %v1307 = vsub.f32 %v1183, %v1299
    %v1308 = vsub.f32 %v1236, %v1302
    %v1309 = vsub.f32 %v1289, %v1305
    %v1310 = vmul.f32 %v1306, 1.442695
    %v1311 = vpow.pop %v1310
    %v1312 = vmul.f32 %v1307, 1.442695
    %v1313 = vpow.pop %v1312
    %v1314 = vmul.f32 %v1308, 1.442695
    %v1315 = vpow.pop %v1314
    %v1316 = vmul.f32 %v1309, 1.442695
    %v1317 = vpow.pop %v1316
    %v1318 = vsel %vm173, %v1311, 0.0
    %1319 = vadd.xlane.f32.xlu0 %v1318
    %v1320 = vpop.xlane.xlu0 %1319
    %v1321 = vsel %vm173, %v1313, 0.0
    %1322 = vadd.xlane.f32.xlu0 %v1321
    %v1323 = vpop.xlane.xlu0 %1322
    %v1324 = vsel %vm173, %v1315, 0.0
    %1325 = vadd.xlane.f32.xlu0 %v1324
    %v1326 = vpop.xlane.xlu0 %1325
    %v1327 = vsel %vm173, %v1317, 0.0
    %1328 = vadd.xlane.f32.xlu0 %v1327
    %v1329 = vpop.xlane.xlu0 %1328
    %v1330 = vrcp.pop %v1320
    %v1331 = vrcp.pop %v1323
    %v1332 = vrcp.pop %v1326
    %v1333 = vrcp.pop %v1329
    %v1334 = vpack.c.bf16 %v1311, %v1311
    %v1335 = vpack.c.bf16 %v1313, %v1313
    %v1336 = vpack.c.bf16 %v1315, %v1315
    %v1337 = vpack.c.bf16 %v1317, %v1317
    %1338 = vrot.lane.b32.xlu0 %v1084, 48
    %v1339 = vpop.permute.xlu0 %1338
    %v1341 = vsel %vm173, %v1334, 0
    %v1344 = vsel %vm422, %v1339, 0
    %1346 = vmatprep.subr.bf16.mxu0 0
    %1347 = vmatpush1.bf16.msra.mxu0 %v1344
    %1348 = vmatprep.subr.bf16.mxu0 0
    %1349 = vmatpush1.bf16.msra.mxu0 0
    %1350 = vmatprep.subr.bf16.mxu0 0
    %1351 = vmatpush1.bf16.msra.mxu0 0
    %1352 = vmatprep.subr.bf16.mxu0 0
    %1353 = vmatpush1.bf16.msra.mxu0 0
    %1354 = vmatprep.subr.bf16.mxu0 0
    %1355 = vmatpush1.bf16.msra.mxu0 0
    %1356 = vmatprep.subr.bf16.mxu0 0
    %1357 = vmatpush1.bf16.msra.mxu0 0
    %1358 = vmatprep.subr.bf16.mxu0 0
    %1359 = vmatpush1.bf16.msra.mxu0 0
    %1360 = vmatprep.subr.bf16.mxu0 0
    %1361 = vmatpush1.bf16.msra.mxu0 0
    %1362 = vmatprep.subr.bf16.mxu0 0
    %1363 = vmatpush1.bf16.msra.mxu0 0
    %1364 = vmatprep.subr.bf16.mxu0 0
    %1365 = vmatpush1.bf16.msra.mxu0 0
    %1366 = vmatprep.subr.bf16.mxu0 0
    %1367 = vmatpush1.bf16.msra.mxu0 0
    %1368 = vmatprep.subr.bf16.mxu0 0
    %1369 = vmatpush1.bf16.msra.mxu0 0
    %1370 = vmatprep.subr.bf16.mxu0 0
    %1371 = vmatpush1.bf16.msra.mxu0 0
    %1372 = vmatprep.subr.bf16.mxu0 0
    %1373 = vmatpush1.bf16.msra.mxu0 0
    %1374 = vmatprep.subr.bf16.mxu0 0
    %1375 = vmatpush1.bf16.msra.mxu0 0
    %1376 = vmatprep.subr.bf16.mxu0 0
    %1377 = vmatpush1.bf16.msra.mxu0 0
    %1378 = vmatprep.mubr.bf16.mxu0 0
    %1379 = vmatmul.mubr.bf16.gmra.mrb[0].mxu0 %v1341
    %v1380 = vpop.f32.mrb[0].mxu0
    %v1381 = vadd.f32 0.0, %v1380
    %v1382 = vpop.f32.mrb[0].mxu0
    %v1383 = vpop.f32.mrb[0].mxu0
    %v1384 = vpop.f32.mrb[0].mxu0
    %1385 = vdwg.mxu0
    %1386 = vrot.lane.b32.xlu0 %v1137, 48
    %v1387 = vpop.permute.xlu0 %1386
    %v1389 = vsel %vm173, %v1335, 0
    %v1392 = vsel %vm422, %v1387, 0
    %1394 = vmatprep.subr.bf16.mxu0 0
    %1395 = vmatpush1.bf16.msra.mxu0 %v1392
    %1396 = vmatprep.subr.bf16.mxu0 0
    %1397 = vmatpush1.bf16.msra.mxu0 0
    %1398 = vmatprep.subr.bf16.mxu0 0
    %1399 = vmatpush1.bf16.msra.mxu0 0
    %1400 = vmatprep.subr.bf16.mxu0 0
    %1401 = vmatpush1.bf16.msra.mxu0 0
    %1402 = vmatprep.subr.bf16.mxu0 0
    %1403 = vmatpush1.bf16.msra.mxu0 0
    %1404 = vmatprep.subr.bf16.mxu0 0
    %1405 = vmatpush1.bf16.msra.mxu0 0
    %1406 = vmatprep.subr.bf16.mxu0 0
    %1407 = vmatpush1.bf16.msra.mxu0 0
    %1408 = vmatprep.subr.bf16.mxu0 0
    %1409 = vmatpush1.bf16.msra.mxu0 0
    %1410 = vmatprep.subr.bf16.mxu0 0
    %1411 = vmatpush1.bf16.msra.mxu0 0
    %1412 = vmatprep.subr.bf16.mxu0 0
    %1413 = vmatpush1.bf16.msra.mxu0 0
    %1414 = vmatprep.subr.bf16.mxu0 0
    %1415 = vmatpush1.bf16.msra.mxu0 0
    %1416 = vmatprep.subr.bf16.mxu0 0
    %1417 = vmatpush1.bf16.msra.mxu0 0
    %1418 = vmatprep.subr.bf16.mxu0 0
    %1419 = vmatpush1.bf16.msra.mxu0 0
    %1420 = vmatprep.subr.bf16.mxu0 0
    %1421 = vmatpush1.bf16.msra.mxu0 0
    %1422 = vmatprep.subr.bf16.mxu0 0
    %1423 = vmatpush1.bf16.msra.mxu0 0
    %1424 = vmatprep.subr.bf16.mxu0 0
    %1425 = vmatpush1.bf16.msra.mxu0 0
    %1426 = vmatprep.mubr.bf16.mxu0 0
    %1427 = vmatmul.mubr.bf16.gmra.mrb[0].mxu0 %v1389
    %v1428 = vpop.f32.mrb[0].mxu0
    %v1429 = vadd.f32 0.0, %v1428
    %v1430 = vpop.f32.mrb[0].mxu0
    %v1431 = vpop.f32.mrb[0].mxu0
    %v1432 = vpop.f32.mrb[0].mxu0
    %1433 = vdwg.mxu0
    %1434 = vrot.lane.b32.xlu0 %v1190, 48
    %v1435 = vpop.permute.xlu0 %1434
    %v1437 = vsel %vm173, %v1336, 0
    %v1440 = vsel %vm422, %v1435, 0
    %1442 = vmatprep.subr.bf16.mxu0 0
    %1443 = vmatpush1.bf16.msra.mxu0 %v1440
    %1444 = vmatprep.subr.bf16.mxu0 0
    %1445 = vmatpush1.bf16.msra.mxu0 0
    %1446 = vmatprep.subr.bf16.mxu0 0
    %1447 = vmatpush1.bf16.msra.mxu0 0
    %1448 = vmatprep.subr.bf16.mxu0 0
    %1449 = vmatpush1.bf16.msra.mxu0 0
    %1450 = vmatprep.subr.bf16.mxu0 0
    %1451 = vmatpush1.bf16.msra.mxu0 0
    %1452 = vmatprep.subr.bf16.mxu0 0
    %1453 = vmatpush1.bf16.msra.mxu0 0
    %1454 = vmatprep.subr.bf16.mxu0 0
    %1455 = vmatpush1.bf16.msra.mxu0 0
    %1456 = vmatprep.subr.bf16.mxu0 0
    %1457 = vmatpush1.bf16.msra.mxu0 0
    %1458 = vmatprep.subr.bf16.mxu0 0
    %1459 = vmatpush1.bf16.msra.mxu0 0
    %1460 = vmatprep.subr.bf16.mxu0 0
    %1461 = vmatpush1.bf16.msra.mxu0 0
    %1462 = vmatprep.subr.bf16.mxu0 0
    %1463 = vmatpush1.bf16.msra.mxu0 0
    %1464 = vmatprep.subr.bf16.mxu0 0
    %1465 = vmatpush1.bf16.msra.mxu0 0
    %1466 = vmatprep.subr.bf16.mxu0 0
    %1467 = vmatpush1.bf16.msra.mxu0 0
    %1468 = vmatprep.subr.bf16.mxu0 0
    %1469 = vmatpush1.bf16.msra.mxu0 0
    %1470 = vmatprep.subr.bf16.mxu0 0
    %1471 = vmatpush1.bf16.msra.mxu0 0
    %1472 = vmatprep.subr.bf16.mxu0 0
    %1473 = vmatpush1.bf16.msra.mxu0 0
    %1474 = vmatprep.mubr.bf16.mxu0 0
    %1475 = vmatmul.mubr.bf16.gmra.mrb[0].mxu0 %v1437
    %v1476 = vpop.f32.mrb[0].mxu0
    %v1477 = vadd.f32 0.0, %v1476
    %v1478 = vpop.f32.mrb[0].mxu0
    %v1479 = vpop.f32.mrb[0].mxu0
    %v1480 = vpop.f32.mrb[0].mxu0
    %1481 = vdwg.mxu0
    %1482 = vrot.lane.b32.xlu0 %v1243, 48
    %v1483 = vpop.permute.xlu0 %1482
    %v1485 = vsel %vm173, %v1337, 0
    %v1488 = vsel %vm422, %v1483, 0
    %1490 = vmatprep.subr.bf16.mxu0 0
    %1491 = vmatpush1.bf16.msra.mxu0 %v1488
    %1492 = vmatprep.subr.bf16.mxu0 0
    %1493 = vmatpush1.bf16.msra.mxu0 0
    %1494 = vmatprep.subr.bf16.mxu0 0
    %1495 = vmatpush1.bf16.msra.mxu0 0
    %1496 = vmatprep.subr.bf16.mxu0 0
    %1497 = vmatpush1.bf16.msra.mxu0 0
    %1498 = vmatprep.subr.bf16.mxu0 0
    %1499 = vmatpush1.bf16.msra.mxu0 0
    %1500 = vmatprep.subr.bf16.mxu0 0
    %1501 = vmatpush1.bf16.msra.mxu0 0
    %1502 = vmatprep.subr.bf16.mxu0 0
    %1503 = vmatpush1.bf16.msra.mxu0 0
    %1504 = vmatprep.subr.bf16.mxu0 0
    %1505 = vmatpush1.bf16.msra.mxu0 0
    %1506 = vmatprep.subr.bf16.mxu0 0
    %1507 = vmatpush1.bf16.msra.mxu0 0
    %1508 = vmatprep.subr.bf16.mxu0 0
    %1509 = vmatpush1.bf16.msra.mxu0 0
    %1510 = vmatprep.subr.bf16.mxu0 0
    %1511 = vmatpush1.bf16.msra.mxu0 0
    %1512 = vmatprep.subr.bf16.mxu0 0
    %1513 = vmatpush1.bf16.msra.mxu0 0
    %1514 = vmatprep.subr.bf16.mxu0 0
    %1515 = vmatpush1.bf16.msra.mxu0 0
    %1516 = vmatprep.subr.bf16.mxu0 0
    %1517 = vmatpush1.bf16.msra.mxu0 0
    %1518 = vmatprep.subr.bf16.mxu0 0
    %1519 = vmatpush1.bf16.msra.mxu0 0
    %1520 = vmatprep.subr.bf16.mxu0 0
    %1521 = vmatpush1.bf16.msra.mxu0 0
    %1522 = vmatprep.mubr.bf16.mxu0 0
    %1523 = vmatmul.mubr.bf16.gmra.mrb[0].mxu0 %v1485
    %v1524 = vpop.f32.mrb[0].mxu0
    %v1525 = vadd.f32 0.0, %v1524
    %v1526 = vpop.f32.mrb[0].mxu0
    %v1527 = vpop.f32.mrb[0].mxu0
    %v1528 = vpop.f32.mrb[0].mxu0
    %1529 = vdwg.mxu0
    %v1530 = vmul.f32 %v1381, %v1330
    %v1531 = vmul.f32 %v1429, %v1331
    %v1532 = vmul.f32 %v1477, %v1332
    %v1533 = vmul.f32 %v1525, %v1333
    %v1534 = vpack.c.bf16 %v1530, %v1530
    %v1535 = vpack.c.bf16 %v1531, %v1531
    %v1536 = vpack.c.bf16 %v1532, %v1532
    %v1537 = vpack.c.bf16 %v1533, %v1533
    %v1538 = vld [vmem:[#allocation2] sm:$0xf]
    %v1539 = vld [vmem:[#allocation2 + $0x4] sm:$0xf]
    %v1540 = vld [vmem:[#allocation2 + $0x8] sm:$0xf]
    %v1541 = vld [vmem:[#allocation2 + $0xc] sm:$0xf]
    %v1543 = vunpack.c.l.b16 %v1538
    %v1544 = vpack.c.b16 %v1543, %v1543
    %1545 = vrot.lane.b32.xlu0 %v1544, 104
    %v1546 = vpop.permute.xlu0 %1545
    %1547 = vrot.lane.b32.xlu0 %v1544, 72
    %v1548 = vpop.permute.xlu0 %1547
    %v1550 = vsel %vm173, %v1546, 0
    %v1553 = vsel %vm173, %v1548, 0
    %1555 = vmatprep.subr.bf16.mxu0 0
    %1556 = vmatpush1.bf16.xpose.msra.mxu0 %v1553
    %1557 = vmatprep.subr.bf16.mxu0 0
    %1558 = vmatpush1.bf16.xpose.msra.mxu0 0
    %1559 = vmatprep.subr.bf16.mxu0 0
    %1560 = vmatpush1.bf16.xpose.msra.mxu0 0
    %1561 = vmatprep.subr.bf16.mxu0 0
    %1562 = vmatpush1.bf16.xpose.msra.mxu0 0
    %1563 = vmatprep.subr.bf16.mxu0 0
    %1564 = vmatpush1.bf16.xpose.msra.mxu0 0
    %1565 = vmatprep.subr.bf16.mxu0 0
    %1566 = vmatpush1.bf16.xpose.msra.mxu0 0
    %1567 = vmatprep.subr.bf16.mxu0 0
    %1568 = vmatpush1.bf16.xpose.msra.mxu0 0
    %1569 = vmatprep.subr.bf16.mxu0 0
    %1570 = vmatpush1.bf16.xpose.msra.mxu0 0
    %1571 = vmatprep.subr.bf16.mxu0 0
    %1572 = vmatpush1.bf16.xpose.msra.mxu0 0
    %1573 = vmatprep.subr.bf16.mxu0 0
    %1574 = vmatpush1.bf16.xpose.msra.mxu0 0
    %1575 = vmatprep.subr.bf16.mxu0 0
    %1576 = vmatpush1.bf16.xpose.msra.mxu0 0
    %1577 = vmatprep.subr.bf16.mxu0 0
    %1578 = vmatpush1.bf16.xpose.msra.mxu0 0
    %1579 = vmatprep.subr.bf16.mxu0 0
    %1580 = vmatpush1.bf16.xpose.msra.mxu0 0
    %1581 = vmatprep.subr.bf16.mxu0 0
    %1582 = vmatpush1.bf16.xpose.msra.mxu0 0
    %1583 = vmatprep.subr.bf16.mxu0 0
    %1584 = vmatpush1.bf16.xpose.msra.mxu0 0
    %1585 = vmatprep.subr.bf16.mxu0 0
    %1586 = vmatpush1.bf16.xpose.msra.mxu0 0
    %1587 = vmatprep.mubr.bf16.mxu0 0
    %1588 = vmatmul.mubr.bf16.gmra.mrb[0].mxu0 %v1550
    %v1589 = vpop.f32.mrb[0].mxu0
    %v1590 = vadd.f32 0.0, %v1589
    %v1591 = vpop.f32.mrb[0].mxu0
    %v1592 = vpop.f32.mrb[0].mxu0
    %v1593 = vpop.f32.mrb[0].mxu0
    %1594 = vdwg.mxu0
    %v1596 = vunpack.c.l.b16 %v1539
    %v1597 = vpack.c.b16 %v1596, %v1596
    %1598 = vrot.lane.b32.xlu0 %v1597, 104
    %v1599 = vpop.permute.xlu0 %1598
    %1600 = vrot.lane.b32.xlu0 %v1597, 72
    %v1601 = vpop.permute.xlu0 %1600
    %v1603 = vsel %vm173, %v1599, 0
    %v1606 = vsel %vm173, %v1601, 0
    %1608 = vmatprep.subr.bf16.mxu0 0
    %1609 = vmatpush1.bf16.xpose.msra.mxu0 %v1606
    %1610 = vmatprep.subr.bf16.mxu0 0
    %1611 = vmatpush1.bf16.xpose.msra.mxu0 0
    %1612 = vmatprep.subr.bf16.mxu0 0
    %1613 = vmatpush1.bf16.xpose.msra.mxu0 0
    %1614 = vmatprep.subr.bf16.mxu0 0
    %1615 = vmatpush1.bf16.xpose.msra.mxu0 0
    %1616 = vmatprep.subr.bf16.mxu0 0
    %1617 = vmatpush1.bf16.xpose.msra.mxu0 0
    %1618 = vmatprep.subr.bf16.mxu0 0
    %1619 = vmatpush1.bf16.xpose.msra.mxu0 0
    %1620 = vmatprep.subr.bf16.mxu0 0
    %1621 = vmatpush1.bf16.xpose.msra.mxu0 0
    %1622 = vmatprep.subr.bf16.mxu0 0
    %1623 = vmatpush1.bf16.xpose.msra.mxu0 0
    %1624 = vmatprep.subr.bf16.mxu0 0
    %1625 = vmatpush1.bf16.xpose.msra.mxu0 0
    %1626 = vmatprep.subr.bf16.mxu0 0
    %1627 = vmatpush1.bf16.xpose.msra.mxu0 0
    %1628 = vmatprep.subr.bf16.mxu0 0
    %1629 = vmatpush1.bf16.xpose.msra.mxu0 0
    %1630 = vmatprep.subr.bf16.mxu0 0
    %1631 = vmatpush1.bf16.xpose.msra.mxu0 0
    %1632 = vmatprep.subr.bf16.mxu0 0
    %1633 = vmatpush1.bf16.xpose.msra.mxu0 0
    %1634 = vmatprep.subr.bf16.mxu0 0
    %1635 = vmatpush1.bf16.xpose.msra.mxu0 0
    %1636 = vmatprep.subr.bf16.mxu0 0
    %1637 = vmatpush1.bf16.xpose.msra.mxu0 0
    %1638 = vmatprep.subr.bf16.mxu0 0
    %1639 = vmatpush1.bf16.xpose.msra.mxu0 0
    %1640 = vmatprep.mubr.bf16.mxu0 0
    %1641 = vmatmul.mubr.bf16.gmra.mrb[0].mxu0 %v1603
    %v1642 = vpop.f32.mrb[0].mxu0
    %v1643 = vadd.f32 0.0, %v1642
    %v1644 = vpop.f32.mrb[0].mxu0
    %v1645 = vpop.f32.mrb[0].mxu0
    %v1646 = vpop.f32.mrb[0].mxu0
    %1647 = vdwg.mxu0
    %v1649 = vunpack.c.l.b16 %v1540
    %v1650 = vpack.c.b16 %v1649, %v1649
    %1651 = vrot.lane.b32.xlu0 %v1650, 104
    %v1652 = vpop.permute.xlu0 %1651
    %1653 = vrot.lane.b32.xlu0 %v1650, 72
    %v1654 = vpop.permute.xlu0 %1653
    %v1656 = vsel %vm173, %v1652, 0
    %v1659 = vsel %vm173, %v1654, 0
    %1661 = vmatprep.subr.bf16.mxu0 0
    %1662 = vmatpush1.bf16.xpose.msra.mxu0 %v1659
    %1663 = vmatprep.subr.bf16.mxu0 0
    %1664 = vmatpush1.bf16.xpose.msra.mxu0 0
    %1665 = vmatprep.subr.bf16.mxu0 0
    %1666 = vmatpush1.bf16.xpose.msra.mxu0 0
    %1667 = vmatprep.subr.bf16.mxu0 0
    %1668 = vmatpush1.bf16.xpose.msra.mxu0 0
    %1669 = vmatprep.subr.bf16.mxu0 0
    %1670 = vmatpush1.bf16.xpose.msra.mxu0 0
    %1671 = vmatprep.subr.bf16.mxu0 0
    %1672 = vmatpush1.bf16.xpose.msra.mxu0 0
    %1673 = vmatprep.subr.bf16.mxu0 0
    %1674 = vmatpush1.bf16.xpose.msra.mxu0 0
    %1675 = vmatprep.subr.bf16.mxu0 0
    %1676 = vmatpush1.bf16.xpose.msra.mxu0 0
    %1677 = vmatprep.subr.bf16.mxu0 0
    %1678 = vmatpush1.bf16.xpose.msra.mxu0 0
    %1679 = vmatprep.subr.bf16.mxu0 0
    %1680 = vmatpush1.bf16.xpose.msra.mxu0 0
    %1681 = vmatprep.subr.bf16.mxu0 0
    %1682 = vmatpush1.bf16.xpose.msra.mxu0 0
    %1683 = vmatprep.subr.bf16.mxu0 0
    %1684 = vmatpush1.bf16.xpose.msra.mxu0 0
    %1685 = vmatprep.subr.bf16.mxu0 0
    %1686 = vmatpush1.bf16.xpose.msra.mxu0 0
    %1687 = vmatprep.subr.bf16.mxu0 0
    %1688 = vmatpush1.bf16.xpose.msra.mxu0 0
    %1689 = vmatprep.subr.bf16.mxu0 0
    %1690 = vmatpush1.bf16.xpose.msra.mxu0 0
    %1691 = vmatprep.subr.bf16.mxu0 0
    %1692 = vmatpush1.bf16.xpose.msra.mxu0 0
    %1693 = vmatprep.mubr.bf16.mxu0 0
    %1694 = vmatmul.mubr.bf16.gmra.mrb[0].mxu0 %v1656
    %v1695 = vpop.f32.mrb[0].mxu0
    %v1696 = vadd.f32 0.0, %v1695
    %v1697 = vpop.f32.mrb[0].mxu0
    %v1698 = vpop.f32.mrb[0].mxu0
    %v1699 = vpop.f32.mrb[0].mxu0
    %1700 = vdwg.mxu0
    %v1702 = vunpack.c.l.b16 %v1541
    %v1703 = vpack.c.b16 %v1702, %v1702
    %1704 = vrot.lane.b32.xlu0 %v1703, 104
    %v1705 = vpop.permute.xlu0 %1704
    %1706 = vrot.lane.b32.xlu0 %v1703, 72
    %v1707 = vpop.permute.xlu0 %1706
    %v1709 = vsel %vm173, %v1705, 0
    %v1712 = vsel %vm173, %v1707, 0
    %1714 = vmatprep.subr.bf16.mxu0 0
    %1715 = vmatpush1.bf16.xpose.msra.mxu0 %v1712
    %1716 = vmatprep.subr.bf16.mxu0 0
    %1717 = vmatpush1.bf16.xpose.msra.mxu0 0
    %1718 = vmatprep.subr.bf16.mxu0 0
    %1719 = vmatpush1.bf16.xpose.msra.mxu0 0
    %1720 = vmatprep.subr.bf16.mxu0 0
    %1721 = vmatpush1.bf16.xpose.msra.mxu0 0
    %1722 = vmatprep.subr.bf16.mxu0 0
    %1723 = vmatpush1.bf16.xpose.msra.mxu0 0
    %1724 = vmatprep.subr.bf16.mxu0 0
    %1725 = vmatpush1.bf16.xpose.msra.mxu0 0
    %1726 = vmatprep.subr.bf16.mxu0 0
    %1727 = vmatpush1.bf16.xpose.msra.mxu0 0
    %1728 = vmatprep.subr.bf16.mxu0 0
    %1729 = vmatpush1.bf16.xpose.msra.mxu0 0
    %1730 = vmatprep.subr.bf16.mxu0 0
    %1731 = vmatpush1.bf16.xpose.msra.mxu0 0
    %1732 = vmatprep.subr.bf16.mxu0 0
    %1733 = vmatpush1.bf16.xpose.msra.mxu0 0
    %1734 = vmatprep.subr.bf16.mxu0 0
    %1735 = vmatpush1.bf16.xpose.msra.mxu0 0
    %1736 = vmatprep.subr.bf16.mxu0 0
    %1737 = vmatpush1.bf16.xpose.msra.mxu0 0
    %1738 = vmatprep.subr.bf16.mxu0 0
    %1739 = vmatpush1.bf16.xpose.msra.mxu0 0
    %1740 = vmatprep.subr.bf16.mxu0 0
    %1741 = vmatpush1.bf16.xpose.msra.mxu0 0
    %1742 = vmatprep.subr.bf16.mxu0 0
    %1743 = vmatpush1.bf16.xpose.msra.mxu0 0
    %1744 = vmatprep.subr.bf16.mxu0 0
    %1745 = vmatpush1.bf16.xpose.msra.mxu0 0
    %1746 = vmatprep.mubr.bf16.mxu0 0
    %1747 = vmatmul.mubr.bf16.gmra.mrb[0].mxu0 %v1709
    %v1748 = vpop.f32.mrb[0].mxu0
    %v1749 = vadd.f32 0.0, %v1748
    %v1750 = vpop.f32.mrb[0].mxu0
    %v1751 = vpop.f32.mrb[0].mxu0
    %v1752 = vpop.f32.mrb[0].mxu0
    %1753 = vdwg.mxu0
    %v1754 = vsel %vm173, %v1590, -inf
    %1755 = vmax.xlane.f32.xlu0 %v1754
    %v1756 = vpop.xlane.xlu0 %1755
    %v1757 = vsel %vm173, %v1643, -inf
    %1758 = vmax.xlane.f32.xlu0 %v1757
    %v1759 = vpop.xlane.xlu0 %1758
    %v1760 = vsel %vm173, %v1696, -inf
    %1761 = vmax.xlane.f32.xlu0 %v1760
    %v1762 = vpop.xlane.xlu0 %1761
    %v1763 = vsel %vm173, %v1749, -inf
    %1764 = vmax.xlane.f32.xlu0 %v1763
    %v1765 = vpop.xlane.xlu0 %1764
    %v1766 = vsub.f32 %v1590, %v1756
    %v1767 = vsub.f32 %v1643, %v1759
    %v1768 = vsub.f32 %v1696, %v1762
    %v1769 = vsub.f32 %v1749, %v1765
    %v1770 = vmul.f32 %v1766, 1.442695
    %v1771 = vpow.pop %v1770
    %v1772 = vmul.f32 %v1767, 1.442695
    %v1773 = vpow.pop %v1772
    %v1774 = vmul.f32 %v1768, 1.442695
    %v1775 = vpow.pop %v1774
    %v1776 = vmul.f32 %v1769, 1.442695
    %v1777 = vpow.pop %v1776
    %v1778 = vsel %vm173, %v1771, 0.0
    %1779 = vadd.xlane.f32.xlu0 %v1778
    %v1780 = vpop.xlane.xlu0 %1779
    %v1781 = vsel %vm173, %v1773, 0.0
    %1782 = vadd.xlane.f32.xlu0 %v1781
    %v1783 = vpop.xlane.xlu0 %1782
    %v1784 = vsel %vm173, %v1775, 0.0
    %1785 = vadd.xlane.f32.xlu0 %v1784
    %v1786 = vpop.xlane.xlu0 %1785
    %v1787 = vsel %vm173, %v1777, 0.0
    %1788 = vadd.xlane.f32.xlu0 %v1787
    %v1789 = vpop.xlane.xlu0 %1788
    %v1790 = vrcp.pop %v1780
    %v1791 = vrcp.pop %v1783
    %v1792 = vrcp.pop %v1786
    %v1793 = vrcp.pop %v1789
    %v1794 = vpack.c.bf16 %v1771, %v1771
    %v1795 = vpack.c.bf16 %v1773, %v1773
    %v1796 = vpack.c.bf16 %v1775, %v1775
    %v1797 = vpack.c.bf16 %v1777, %v1777
    %1798 = vrot.lane.b32.xlu0 %v1544, 40
    %v1799 = vpop.permute.xlu0 %1798
    %v1801 = vsel %vm173, %v1794, 0
    %v1804 = vsel %vm422, %v1799, 0
    %1806 = vmatprep.subr.bf16.mxu0 0
    %1807 = vmatpush1.bf16.msra.mxu0 %v1804
    %1808 = vmatprep.subr.bf16.mxu0 0
    %1809 = vmatpush1.bf16.msra.mxu0 0
    %1810 = vmatprep.subr.bf16.mxu0 0
    %1811 = vmatpush1.bf16.msra.mxu0 0
    %1812 = vmatprep.subr.bf16.mxu0 0
    %1813 = vmatpush1.bf16.msra.mxu0 0
    %1814 = vmatprep.subr.bf16.mxu0 0
    %1815 = vmatpush1.bf16.msra.mxu0 0
    %1816 = vmatprep.subr.bf16.mxu0 0
    %1817 = vmatpush1.bf16.msra.mxu0 0
    %1818 = vmatprep.subr.bf16.mxu0 0
    %1819 = vmatpush1.bf16.msra.mxu0 0
    %1820 = vmatprep.subr.bf16.mxu0 0
    %1821 = vmatpush1.bf16.msra.mxu0 0
    %1822 = vmatprep.subr.bf16.mxu0 0
    %1823 = vmatpush1.bf16.msra.mxu0 0
    %1824 = vmatprep.subr.bf16.mxu0 0
    %1825 = vmatpush1.bf16.msra.mxu0 0
    %1826 = vmatprep.subr.bf16.mxu0 0
    %1827 = vmatpush1.bf16.msra.mxu0 0
    %1828 = vmatprep.subr.bf16.mxu0 0
    %1829 = vmatpush1.bf16.msra.mxu0 0
    %1830 = vmatprep.subr.bf16.mxu0 0
    %1831 = vmatpush1.bf16.msra.mxu0 0
    %1832 = vmatprep.subr.bf16.mxu0 0
    %1833 = vmatpush1.bf16.msra.mxu0 0
    %1834 = vmatprep.subr.bf16.mxu0 0
    %1835 = vmatpush1.bf16.msra.mxu0 0
    %1836 = vmatprep.subr.bf16.mxu0 0
    %1837 = vmatpush1.bf16.msra.mxu0 0
    %1838 = vmatprep.mubr.bf16.mxu0 0
    %1839 = vmatmul.mubr.bf16.gmra.mrb[0].mxu0 %v1801
    %v1840 = vpop.f32.mrb[0].mxu0
    %v1841 = vadd.f32 0.0, %v1840
    %v1842 = vpop.f32.mrb[0].mxu0
    %v1843 = vpop.f32.mrb[0].mxu0
    %v1844 = vpop.f32.mrb[0].mxu0
    %1845 = vdwg.mxu0
    %1846 = vrot.lane.b32.xlu0 %v1597, 40
    %v1847 = vpop.permute.xlu0 %1846
    %v1849 = vsel %vm173, %v1795, 0
    %v1852 = vsel %vm422, %v1847, 0
    %1854 = vmatprep.subr.bf16.mxu0 0
    %1855 = vmatpush1.bf16.msra.mxu0 %v1852
    %1856 = vmatprep.subr.bf16.mxu0 0
    %1857 = vmatpush1.bf16.msra.mxu0 0
    %1858 = vmatprep.subr.bf16.mxu0 0
    %1859 = vmatpush1.bf16.msra.mxu0 0
    %1860 = vmatprep.subr.bf16.mxu0 0
    %1861 = vmatpush1.bf16.msra.mxu0 0
    %1862 = vmatprep.subr.bf16.mxu0 0
    %1863 = vmatpush1.bf16.msra.mxu0 0
    %1864 = vmatprep.subr.bf16.mxu0 0
    %1865 = vmatpush1.bf16.msra.mxu0 0
    %1866 = vmatprep.subr.bf16.mxu0 0
    %1867 = vmatpush1.bf16.msra.mxu0 0
    %1868 = vmatprep.subr.bf16.mxu0 0
    %1869 = vmatpush1.bf16.msra.mxu0 0
    %1870 = vmatprep.subr.bf16.mxu0 0
    %1871 = vmatpush1.bf16.msra.mxu0 0
    %1872 = vmatprep.subr.bf16.mxu0 0
    %1873 = vmatpush1.bf16.msra.mxu0 0
    %1874 = vmatprep.subr.bf16.mxu0 0
    %1875 = vmatpush1.bf16.msra.mxu0 0
    %1876 = vmatprep.subr.bf16.mxu0 0
    %1877 = vmatpush1.bf16.msra.mxu0 0
    %1878 = vmatprep.subr.bf16.mxu0 0
    %1879 = vmatpush1.bf16.msra.mxu0 0
    %1880 = vmatprep.subr.bf16.mxu0 0
    %1881 = vmatpush1.bf16.msra.mxu0 0
    %1882 = vmatprep.subr.bf16.mxu0 0
    %1883 = vmatpush1.bf16.msra.mxu0 0
    %1884 = vmatprep.subr.bf16.mxu0 0
    %1885 = vmatpush1.bf16.msra.mxu0 0
    %1886 = vmatprep.mubr.bf16.mxu0 0
    %1887 = vmatmul.mubr.bf16.gmra.mrb[0].mxu0 %v1849
    %v1888 = vpop.f32.mrb[0].mxu0
    %v1889 = vadd.f32 0.0, %v1888
    %v1890 = vpop.f32.mrb[0].mxu0
    %v1891 = vpop.f32.mrb[0].mxu0
    %v1892 = vpop.f32.mrb[0].mxu0
    %1893 = vdwg.mxu0
    %1894 = vrot.lane.b32.xlu0 %v1650, 40
    %v1895 = vpop.permute.xlu0 %1894
    %v1897 = vsel %vm173, %v1796, 0
    %v1900 = vsel %vm422, %v1895, 0
    %1902 = vmatprep.subr.bf16.mxu0 0
    %1903 = vmatpush1.bf16.msra.mxu0 %v1900
    %1904 = vmatprep.subr.bf16.mxu0 0
    %1905 = vmatpush1.bf16.msra.mxu0 0
    %1906 = vmatprep.subr.bf16.mxu0 0
    %1907 = vmatpush1.bf16.msra.mxu0 0
    %1908 = vmatprep.subr.bf16.mxu0 0
    %1909 = vmatpush1.bf16.msra.mxu0 0
    %1910 = vmatprep.subr.bf16.mxu0 0
    %1911 = vmatpush1.bf16.msra.mxu0 0
    %1912 = vmatprep.subr.bf16.mxu0 0
    %1913 = vmatpush1.bf16.msra.mxu0 0
    %1914 = vmatprep.subr.bf16.mxu0 0
    %1915 = vmatpush1.bf16.msra.mxu0 0
    %1916 = vmatprep.subr.bf16.mxu0 0
    %1917 = vmatpush1.bf16.msra.mxu0 0
    %1918 = vmatprep.subr.bf16.mxu0 0
    %1919 = vmatpush1.bf16.msra.mxu0 0
    %1920 = vmatprep.subr.bf16.mxu0 0
    %1921 = vmatpush1.bf16.msra.mxu0 0
    %1922 = vmatprep.subr.bf16.mxu0 0
    %1923 = vmatpush1.bf16.msra.mxu0 0
    %1924 = vmatprep.subr.bf16.mxu0 0
    %1925 = vmatpush1.bf16.msra.mxu0 0
    %1926 = vmatprep.subr.bf16.mxu0 0
    %1927 = vmatpush1.bf16.msra.mxu0 0
    %1928 = vmatprep.subr.bf16.mxu0 0
    %1929 = vmatpush1.bf16.msra.mxu0 0
    %1930 = vmatprep.subr.bf16.mxu0 0
    %1931 = vmatpush1.bf16.msra.mxu0 0
    %1932 = vmatprep.subr.bf16.mxu0 0
    %1933 = vmatpush1.bf16.msra.mxu0 0
    %1934 = vmatprep.mubr.bf16.mxu0 0
    %1935 = vmatmul.mubr.bf16.gmra.mrb[0].mxu0 %v1897
    %v1936 = vpop.f32.mrb[0].mxu0
    %v1937 = vadd.f32 0.0, %v1936
    %v1938 = vpop.f32.mrb[0].mxu0
    %v1939 = vpop.f32.mrb[0].mxu0
    %v1940 = vpop.f32.mrb[0].mxu0
    %1941 = vdwg.mxu0
    %1942 = vrot.lane.b32.xlu0 %v1703, 40
    %v1943 = vpop.permute.xlu0 %1942
    %v1945 = vsel %vm173, %v1797, 0
    %v1948 = vsel %vm422, %v1943, 0
    %1950 = vmatprep.subr.bf16.mxu0 0
    %1951 = vmatpush1.bf16.msra.mxu0 %v1948
    %1952 = vmatprep.subr.bf16.mxu0 0
    %1953 = vmatpush1.bf16.msra.mxu0 0
    %1954 = vmatprep.subr.bf16.mxu0 0
    %1955 = vmatpush1.bf16.msra.mxu0 0
    %1956 = vmatprep.subr.bf16.mxu0 0
    %1957 = vmatpush1.bf16.msra.mxu0 0
    %1958 = vmatprep.subr.bf16.mxu0 0
    %1959 = vmatpush1.bf16.msra.mxu0 0
    %1960 = vmatprep.subr.bf16.mxu0 0
    %1961 = vmatpush1.bf16.msra.mxu0 0
    %1962 = vmatprep.subr.bf16.mxu0 0
    %1963 = vmatpush1.bf16.msra.mxu0 0
    %1964 = vmatprep.subr.bf16.mxu0 0
    %1965 = vmatpush1.bf16.msra.mxu0 0
    %1966 = vmatprep.subr.bf16.mxu0 0
    %1967 = vmatpush1.bf16.msra.mxu0 0
    %1968 = vmatprep.subr.bf16.mxu0 0
    %1969 = vmatpush1.bf16.msra.mxu0 0
    %1970 = vmatprep.subr.bf16.mxu0 0
    %1971 = vmatpush1.bf16.msra.mxu0 0
    %1972 = vmatprep.subr.bf16.mxu0 0
    %1973 = vmatpush1.bf16.msra.mxu0 0
    %1974 = vmatprep.subr.bf16.mxu0 0
    %1975 = vmatpush1.bf16.msra.mxu0 0
    %1976 = vmatprep.subr.bf16.mxu0 0
    %1977 = vmatpush1.bf16.msra.mxu0 0
    %1978 = vmatprep.subr.bf16.mxu0 0
    %1979 = vmatpush1.bf16.msra.mxu0 0
    %1980 = vmatprep.subr.bf16.mxu0 0
    %1981 = vmatpush1.bf16.msra.mxu0 0
    %1982 = vmatprep.mubr.bf16.mxu0 0
    %1983 = vmatmul.mubr.bf16.gmra.mrb[0].mxu0 %v1945
    %v1984 = vpop.f32.mrb[0].mxu0
    %v1985 = vadd.f32 0.0, %v1984
    %v1986 = vpop.f32.mrb[0].mxu0
    %v1987 = vpop.f32.mrb[0].mxu0
    %v1988 = vpop.f32.mrb[0].mxu0
    %1989 = vdwg.mxu0
    %v1990 = vmul.f32 %v1841, %v1790
    %v1991 = vmul.f32 %v1889, %v1791
    %v1992 = vmul.f32 %v1937, %v1792
    %v1993 = vmul.f32 %v1985, %v1793
    %v1994 = vpack.c.bf16 %v1990, %v1990
    %v1995 = vpack.c.bf16 %v1991, %v1991
    %v1996 = vpack.c.bf16 %v1992, %v1992
    %v1997 = vpack.c.bf16 %v1993, %v1993
    %2002 = vrot.lane.b32.xlu0 %v1074, 8
    %v2003 = vpop.permute.xlu0 %2002
    %2004 = vrot.lane.b32.xlu0 %v1075, 8
    %v2005 = vpop.permute.xlu0 %2004
    %2006 = vrot.lane.b32.xlu0 %v1076, 8
    %v2007 = vpop.permute.xlu0 %2006
    %2008 = vrot.lane.b32.xlu0 %v1077, 8
    %v2009 = vpop.permute.xlu0 %2008
    %2014 = vrot.lane.b32.xlu0 %v1534, 16
    %v2015 = vpop.permute.xlu0 %2014
    %2016 = vrot.lane.b32.xlu0 %v1535, 16
    %v2017 = vpop.permute.xlu0 %2016
    %2018 = vrot.lane.b32.xlu0 %v1536, 16
    %v2019 = vpop.permute.xlu0 %2018
    %2020 = vrot.lane.b32.xlu0 %v1537, 16
    %v2021 = vpop.permute.xlu0 %2020
    %2026 = vrot.lane.b32.xlu0 %v1994, 24
    %v2027 = vpop.permute.xlu0 %2026
    %2028 = vrot.lane.b32.xlu0 %v1995, 24
    %v2029 = vpop.permute.xlu0 %2028
    %2030 = vrot.lane.b32.xlu0 %v1996, 24
    %v2031 = vpop.permute.xlu0 %2030
    %2032 = vrot.lane.b32.xlu0 %v1997, 24
    %v2033 = vpop.permute.xlu0 %2032
    %v2036 = vsel %vm173, %v614, %v2003
    %v2039 = vsel %vm173, %v615, %v2005
    %v2042 = vsel %vm173, %v616, %v2007
    %v2045 = vsel %vm173, %v617, %v2009
    %vm2046 = vcmask 130048
    %v2048 = vsel %vm2046, %v2036, %v2015
    %v2050 = vsel %vm2046, %v2039, %v2017
    %v2052 = vsel %vm2046, %v2042, %v2019
    %v2054 = vsel %vm2046, %v2045, %v2021
    %vm2055 = vcmask 195584
    %v2057 = vsel %vm2055, %v2048, %v2027
    %v2060 = vsel %vm2055, %v2050, %v2029
    %v2063 = vsel %vm2055, %v2052, %v2031
    %v2066 = vsel %vm2055, %v2054, %v2033
    %vm2068 = vcmask 257024
    %2069 = vst.msk [vmem:[#allocation3] sm:$0xf] %vm2068, %v2057
    %2070 = vst.msk [vmem:[#allocation3 + $0x4] sm:$0xf] %vm2068, %v2060
    %2071 = vst.msk [vmem:[#allocation3 + $0x8] sm:$0xf] %vm2068, %v2063
    %2072 = vst.msk [vmem:[#allocation3 + $0xc] sm:$0xf] %vm2068, %v2066
    %v2073 = vld [vmem:[#allocation3] sm:$0xf]
    %v2074 = vld [vmem:[#allocation3 + $0x4] sm:$0xf]
    %v2075 = vld [vmem:[#allocation3 + $0x8] sm:$0xf]
    %v2076 = vld [vmem:[#allocation3 + $0xc] sm:$0xf]
    %v2077 = vld [vmem:[#allocation9] sm:$0xf]
    %v2078 = vld [vmem:[#allocation9 + $0x4] sm:$0xf]
    %v2079 = vld [vmem:[#allocation9 + $0x8] sm:$0xf]
    %v2080 = vld [vmem:[#allocation9 + $0xc] sm:$0xf]
    %v2081 = vld [vmem:[%s4] sm:$0x1]
    %v2082 = vunpack.c.l.bf16 %v2081
    %v2083 = vlaneseq
    %v2084 = vshrl.u32 %v2083, 7
    %v2085 = vsub.s32 0, %v2084
    %v2086 = vrot.slane %v2082, %v2085
    %v2091 = vunpack.c.l.b16 %v2073
    %v2092 = vunpack.c.l.b16 %v2074
    %v2093 = vunpack.c.l.b16 %v2075
    %v2094 = vunpack.c.l.b16 %v2076
    %v2095 = vpack.c.b16 %v2092, %v2091
    %v2096 = vpack.c.b16 %v2094, %v2093
    %v2101 = vunpack.c.l.b16 %v2077
    %v2102 = vunpack.c.l.b16 %v2078
    %v2103 = vunpack.c.l.b16 %v2079
    %v2104 = vunpack.c.l.b16 %v2080
    %v2105 = vpack.c.b16 %v2102, %v2101
    %v2106 = vpack.c.b16 %v2104, %v2103
    %v2110 = vsel %vm99, %v2095, 0
    %v2113 = vsel %vm99, %v2096, 0
    %2115 = vmatprep.subr.bf16.mxu0 0
    %2116 = vmatpush1.bf16.msra.mxu0 %v2105
    %2117 = vmatprep.subr.bf16.mxu0 0
    %2118 = vmatpush1.bf16.msra.mxu0 %v2106
    %2119 = vmatprep.subr.bf16.mxu0 0
    %2120 = vmatpush1.bf16.msra.mxu0 0
    %2121 = vmatprep.subr.bf16.mxu0 0
    %2122 = vmatpush1.bf16.msra.mxu0 0
    %2123 = vmatprep.subr.bf16.mxu0 0
    %2124 = vmatpush1.bf16.msra.mxu0 0
    %2125 = vmatprep.subr.bf16.mxu0 0
    %2126 = vmatpush1.bf16.msra.mxu0 0
    %2127 = vmatprep.subr.bf16.mxu0 0
    %2128 = vmatpush1.bf16.msra.mxu0 0
    %2129 = vmatprep.subr.bf16.mxu0 0
    %2130 = vmatpush1.bf16.msra.mxu0 0
    %2131 = vmatprep.subr.bf16.mxu0 0
    %2132 = vmatpush1.bf16.msra.mxu0 0
    %2133 = vmatprep.subr.bf16.mxu0 0
    %2134 = vmatpush1.bf16.msra.mxu0 0
    %2135 = vmatprep.subr.bf16.mxu0 0
    %2136 = vmatpush1.bf16.msra.mxu0 0
    %2137 = vmatprep.subr.bf16.mxu0 0
    %2138 = vmatpush1.bf16.msra.mxu0 0
    %2139 = vmatprep.subr.bf16.mxu0 0
    %2140 = vmatpush1.bf16.msra.mxu0 0
    %2141 = vmatprep.subr.bf16.mxu0 0
    %2142 = vmatpush1.bf16.msra.mxu0 0
    %2143 = vmatprep.subr.bf16.mxu0 0
    %2144 = vmatpush1.bf16.msra.mxu0 0
    %2145 = vmatprep.subr.bf16.mxu0 0
    %2146 = vmatpush1.bf16.msra.mxu0 0
    %2147 = vmatprep.mubr.bf16.mxu0 0
    %2148 = vmatmul.mubr.bf16.gmra.mrb[0].mxu0 %v2110
    %v2149 = vpop.f32.mrb[0].mxu0
    %v2150 = vadd.f32 %v2086, %v2149
    %v2151 = vpop.f32.mrb[0].mxu0
    %v2152 = vpop.f32.mrb[0].mxu0
    %v2153 = vadd.f32 %v2086, %v2152
    %v2154 = vpop.f32.mrb[0].mxu0
    %2155 = vmatprep.mubr.bf16.mxu0 0
    %2156 = vmatmul.mubr.bf16.gmra.mrb[0].mxu0 %v2113
    %v2157 = vpop.f32.mrb[0].mxu0
    %v2158 = vadd.f32 %v2086, %v2157
    %v2159 = vpop.f32.mrb[0].mxu0
    %v2160 = vpop.f32.mrb[0].mxu0
    %v2161 = vadd.f32 %v2086, %v2160
    %v2162 = vpop.f32.mrb[0].mxu0
    %2163 = vdwg.mxu0
    %2164 = vst.msk [vmem:[#allocation10] sm:$0xff] %vm99, %v2150
    %2165 = vst.msk [vmem:[#allocation10 + $0x8] sm:$0xff] %vm99, %v2153
    %2166 = vst.msk [vmem:[#allocation10 + $0x10] sm:$0xff] %vm99, %v2158
    %2167 = vst.msk [vmem:[#allocation10 + $0x18] sm:$0xff] %vm99, %v2161
    // Predicated region
    $region34: #{tpu_custom_call.1} parent=1 // pred_check
      _
    $region35: #{tpu_custom_call.1} parent=1 // pred_check_branch
      %2169 = sbr.rel (0) target = $region37
    $region36: #{tpu_custom_call.1} parent=1 // pred_region
      %s2171 = ssub.s32 512, 512
      %2172 = vsyncadd [#allocation6], %s2171
      %s2173 = sshll.u32 [#allocation10], 4
      %s2174 = int_to_ptr.vmem [resolvable:$true] %s2173
      %2179 = dma.vmem_to_hbm [thread:$0]  %s2174, 512, %s5, [#allocation6], 128, 128, 8
    $region37: #{tpu_custom_call.1} parent=1 // pred_fallthru
      _
    // Predicated region
    $region38: #{tpu_custom_call.1} parent=1 // pred_check
      _
    $region39: #{tpu_custom_call.1} parent=1 // pred_check_branch
      %2181 = sbr.rel (0) target = $region41
    $region40: #{tpu_custom_call.1} parent=1 // pred_region
      %2182 = dma.done [#allocation6], 512
    $region41: #{tpu_custom_call.1} parent=1 // pred_fallthru
      _
    %2183 = vsyncpa [#allocation5], 1
    %2184 = vsyncpa [#allocation8], 1
    %2185 = vsyncpa [#allocation6], 1

</llo_original>
